<compile_context>
chip_gen: v6e
topology: v6e:2x2x1
jax: 0.10.0
libtpu: 0.0.40
codegen_flags: <defaults>
</compile_context>

<pallas_src>
import math
import numpy as np

import jax
import jax.numpy as jnp
from jax import lax
from jax.experimental import pallas as pl
from jax.experimental.pallas import tpu as pltpu

# ----------------------------- config (small, consistent with the module) -----------------------
B = 2            # batch
S_SRC = 8        # source sequence length
S_TGT = 8        # target sequence length
D_MODEL = 32
D_K = 64
D_V = 64
D_FF = 64
VOCAB = 50
NUM_LAYERS = 2
EPS = 1e-6
SQRT_D = math.sqrt(D_MODEL)
NEG_INF = -1e9

assert S_SRC == S_TGT and B == 2  # block-diagonal mask construction below assumes this

# ---- slab layouts ----
# w_in  (11, D_MODEL, 64): [enc q,k,v | dec-self q,k,v | dec-cross q,k,v | enc ff.w1 | dec ff.w1]
# w_out ( 5, 64, D_MODEL): [enc wo | dec-self wo | dec-cross wo | enc ff.w2 | dec ff.w2]
# b64   (11, 1, 64)      : biases matching w_in rows
# b32   ( 7, 1, D_MODEL) : [enc bo | dec-self bo | dec-cross bo | enc b2 | dec b2 | gamma | beta]
W_ENC, W_DSELF, W_DCROSS, W_ENC_FF1, W_DEC_FF1 = 0, 3, 6, 9, 10
O_ENC, O_DSELF, O_DCROSS, O_ENC_FF2, O_DEC_FF2 = 0, 1, 2, 3, 4
B32_GAMMA, B32_BETA = 5, 6


# ----------------------------- fused whole-forward kernel ---------------------------------------
def transformer_kernel(src_ids_ref, tgt_ids_ref, tgt_mask_ref, emb_ref, pe_ref,
                       w_in_ref, b64_ref, w_out_ref, b32_ref, o_ref):
    f32 = jnp.float32
    gamma = b32_ref[B32_GAMMA]                       # (1, D_MODEL)
    beta = b32_ref[B32_BETA]                         # (1, D_MODEL)
    pe = pe_ref[...]                                 # (B*S, D_MODEL), positions tiled over batch

    # ---------------- helpers ----------------
    def layer_norm(y, exact=False):
        # torch-style: unbiased std (n-1), eps added to std. Single pass: sum & sum-of-squares.
        s = jnp.sum(y, axis=-1, keepdims=True)
        sq = jnp.sum(y * y, axis=-1, keepdims=True)
        mean = s * (1.0 / D_MODEL)
        var = jnp.maximum((sq - s * mean) * (1.0 / (D_MODEL - 1)), 0.0)
        denom = jnp.sqrt(var) + EPS
        if exact:
            return gamma * (y - mean) / denom + beta
        return gamma * (y - mean) * pl.reciprocal(denom, approx=True) + beta

    def softmax_rows(s):
        s = s - jnp.max(s, axis=-1, keepdims=True)
        e = jnp.exp(s)
        return e * pl.reciprocal(jnp.sum(e, axis=-1, keepdims=True), approx=True)

    def attention(xq, xkv, widx, oidx, add_mask):
        # vreg-aligned separate q/k/v matmuls (no lane slicing of a fused projection output)
        q = jnp.dot(xq, w_in_ref[widx + 0], preferred_element_type=f32) + b64_ref[widx + 0]
        k = jnp.dot(xkv, w_in_ref[widx + 1], preferred_element_type=f32) + b64_ref[widx + 1]
        v = jnp.dot(xkv, w_in_ref[widx + 2], preferred_element_type=f32) + b64_ref[widx + 2]
        # one score matmul over all batch-folded rows; additive mask enforces per-batch blocks
        s = lax.dot_general(q, k, (((1,), (1,)), ((), ())),
                            preferred_element_type=f32)            # (B*sq, B*sk)
        p = softmax_rows(s + add_mask)
        ctx = jnp.dot(p, v, preferred_element_type=f32)             # (B*sq, d_v)
        return jnp.dot(ctx, w_out_ref[oidx], preferred_element_type=f32) + b32_ref[oidx]

    def ffn(x, widx, oidx):
        h = jnp.maximum(
            jnp.dot(x, w_in_ref[widx], preferred_element_type=f32) + b64_ref[widx], 0.0)
        return jnp.dot(h, w_out_ref[oidx], preferred_element_type=f32) + b32_ref[oidx]

    def embed(ids_ref, tbl_idx):
        # exact embedding gather via a one-hot MXU matmul (ids * 1.0 rows, everything else * 0.0)
        ids = ids_ref[...]                                                   # (B*S, 1) int32
        iota = lax.broadcasted_iota(jnp.int32, (ids.shape[0], VOCAB), 1)
        onehot = (ids == iota).astype(f32)                                   # (B*S, VOCAB)
        return jnp.dot(onehot, emb_ref[tbl_idx], preferred_element_type=f32) * SQRT_D + pe

    # ---------------- additive masks (built once, reused) ----------------
    ri = lax.broadcasted_iota(jnp.int32, (B * S_TGT, B * S_SRC), 0)
    ci = lax.broadcasted_iota(jnp.int32, (B * S_TGT, B * S_SRC), 1)
    # different batch block <=> exactly one of (row in batch 1), (col in batch 1)   [B == 2]
    diff_batch = jnp.logical_xor(ri >= S_TGT, ci >= S_SRC)
    block_add = jnp.where(diff_batch, NEG_INF, 0.0).astype(f32)              # (16, 16)
    # decoder self-attention: combine block-diag with the user-provided tgt_mask (0 => masked)
    tgt_add_half = jnp.where(tgt_mask_ref[...] == 0, NEG_INF, 0.0).astype(f32)   # (B*S_TGT, S_TGT)
    dec_self_add = block_add + jnp.concatenate([tgt_add_half] * B, axis=-1)      # (16, 16)

    # ---------------- embeddings + positional encoding (fused glue) ----------------
    x = embed(src_ids_ref, 0)                        # (B*S_SRC, D_MODEL)
    y = embed(tgt_ids_ref, 1)                        # (B*S_TGT, D_MODEL)

    # ---------------- encoder (parameters shared across layers, as in the reference) -------------
    for _ in range(NUM_LAYERS):
        x = layer_norm(x + attention(x, x, W_ENC, O_ENC, block_add))
        x = layer_norm(x + ffn(x, W_ENC_FF1, O_ENC_FF2))
    enc = x                                          # Encoder has no final norm

    # ---------------- decoder ----------------
    for _ in range(NUM_LAYERS):
        y = layer_norm(y + attention(y, y, W_DSELF, O_DSELF, dec_self_add))
        y = layer_norm(y + attention(y, enc, W_DCROSS, O_DCROSS, block_add))
        y = layer_norm(y + ffn(y, W_DEC_FF1, O_DEC_FF2))

    # decoder final LayerNorm (exact divide for tight output accuracy)
    o_ref[...] = layer_norm(y, exact=True)


def _full_spec(x):
    nd = x.ndim
    return pl.BlockSpec(x.shape, lambda i, _nd=nd: (0,) * _nd)


def transformer_pallas(src_ids, tgt_ids, tgt_mask2, params):
    args = (src_ids, tgt_ids, tgt_mask2,
            params["emb"], params["pe"],
            params["w_in"], params["b64"], params["w_out"], params["b32"])
    out = pl.pallas_call(
        transformer_kernel,
        out_shape=jax.ShapeDtypeStruct((B * S_TGT, D_MODEL), jnp.float32),
        grid=(1,),
        in_specs=[_full_spec(a) for a in args],
        out_specs=pl.BlockSpec((B * S_TGT, D_MODEL), lambda i: (0, 0)),
        compiler_params=pltpu.CompilerParams(dimension_semantics=("arbitrary",)),
    )(*args)
    return out.reshape(B, S_TGT, D_MODEL)


@jax.jit
def transformer_forward(src, tgt, tgt_mask, params):
    # Only trivial reshapes remain outside the kernel; gather/scale/PE-add/mask-where are fused.
    # NOTE: matches PyTorch Transformer.forward — the generator (ProjectionLayer) is NOT applied.
    src_ids = src.reshape(B * S_SRC, 1).astype(jnp.int32)
    tgt_ids = tgt.reshape(B * S_TGT, 1).astype(jnp.int32)
    tmask2 = tgt_mask.reshape(B * S_TGT, S_TGT).astype(jnp.int32)
    return transformer_pallas(src_ids, tgt_ids, tmask2, params)


# ----------------------------- parameter init (deterministic, synthetic) ------------------------
def _linear_init(key, din, dout):
    kw, kb = jax.random.split(key)
    bound = 1.0 / math.sqrt(din)
    w = jax.random.uniform(kw, (din, dout), jnp.float32, -bound, bound)
    b = jax.random.uniform(kb, (dout,), jnp.float32, -bound, bound)
    return w, b


def _attn_init(key):
    ks = jax.random.split(key, 4)
    wq, bq = _linear_init(ks[0], D_MODEL, D_K)
    wk, bk = _linear_init(ks[1], D_MODEL, D_K)
    wv, bv = _linear_init(ks[2], D_MODEL, D_V)
    wo, bo = _linear_init(ks[3], D_V, D_MODEL)
    return dict(wq=wq, bq=bq, wk=wk, bk=bk, wv=wv, bv=bv, wo=wo, bo=bo)


def _ff_init(key):
    k1, k2 = jax.random.split(key)
    w1, b1 = _linear_init(k1, D_MODEL, D_FF)
    w2, b2 = _linear_init(k2, D_FF, D_MODEL)
    return dict(w1=w1, b1=b1, w2=w2, b2=b2)


def make_positional_encoding(seq_len, d_model):
    pos = np.arange(seq_len, dtype=np.float32)[:, None]
    div = np.exp(np.arange(0, d_model, 2, dtype=np.float32) * -(np.log(10000.0) / d_model))
    pe = np.zeros((seq_len, d_model), dtype=np.float32)
    pe[:, 0::2] = np.sin(pos * div)
    pe[:, 1::2] = np.cos(pos * div)
    return jnp.asarray(pe)


def make_params(key):
    ks = jax.random.split(key, 7)
    # NOTE: the reference Encoder/Decoder reuse the SAME AttentionBlock/FeedForward instances in
    # every layer, so parameters are shared across layers.
    raw = dict(
        src_emb=jax.random.normal(ks[0], (VOCAB, D_MODEL), jnp.float32),
        tgt_emb=jax.random.normal(ks[1], (VOCAB, D_MODEL), jnp.float32),
        enc_attn=_attn_init(ks[2]),
        enc_ff=_ff_init(ks[3]),
        dec_self_attn=_attn_init(ks[4]),
        dec_src_attn=_attn_init(ks[5]),
        dec_ff=_ff_init(ks[6]),
    )
    ea, ef = raw["enc_attn"], raw["enc_ff"]
    da, ca, df = raw["dec_self_attn"], raw["dec_src_attn"], raw["dec_ff"]
    gamma = jnp.ones((D_MODEL,), jnp.float32)     # all LayerNorms init to ones/zeros
    beta = jnp.zeros((D_MODEL,), jnp.float32)

    # contiguous parameter slabs (few DMAs instead of ~26)
    w_in = jnp.stack([ea["wq"], ea["wk"], ea["wv"],
                      da["wq"], da["wk"], da["wv"],
                      ca["wq"], ca["wk"], ca["wv"],
                      ef["w1"], df["w1"]])                               # (11, 32, 64)
    b64 = jnp.stack([ea["bq"], ea["bk"], ea["bv"],
                     da["bq"], da["bk"], da["bv"],
                     ca["bq"], ca["bk"], ca["bv"],
                     ef["b1"], df["b1"]])[:, None, :]                    # (11, 1, 64)
    w_out = jnp.stack([ea["wo"], da["wo"], ca["wo"], ef["w2"], df["w2"]])  # (5, 64, 32)
    b32 = jnp.stack([ea["bo"], da["bo"], ca["bo"], ef["b2"], df["b2"],
                     gamma, beta])[:, None, :]                           # (7, 1, 32)
    emb = jnp.stack([raw["src_emb"], raw["tgt_emb"]])                    # (2, VOCAB, 32)

    pe_rows = make_positional_encoding(max(S_SRC, S_TGT), D_MODEL)       # (S, 32)
    pe_tiled = jnp.tile(pe_rows, (B, 1))                                 # (B*S, 32)

    return dict(raw=raw, w_in=w_in, b64=b64, w_out=w_out, b32=b32, emb=emb,
                pe=pe_tiled, pe_rows=pe_rows)


# ----------------------------- pure-JAX reference (for a loose sanity check) ---------------------
def _ref_layer_norm(x):
    m = jnp.mean(x, axis=-1, keepdims=True)
    std = jnp.sqrt(jnp.sum((x - m) ** 2, axis=-1, keepdims=True) / (D_MODEL - 1))
    return (x - m) / (std + EPS)                     # gamma=1, beta=0 at init


def _ref_attention(qx, kx, vx, p, mask=None):
    q = qx @ p["wq"] + p["bq"]
    k = kx @ p["wk"] + p["bk"]
    v = vx @ p["wv"] + p["bv"]
    s = jnp.einsum("bdi,bei->bde", q, k)
    if mask is not None:
        s = jnp.where(mask == 0, NEG_INF, s)
    a = jax.nn.softmax(s, axis=-1)
    return jnp.einsum("bde,beo->bdo", a, v) @ p["wo"] + p["bo"]


def _ref_ffn(x, p):
    return jnp.maximum(x @ p["w1"] + p["b1"], 0.0) @ p["w2"] + p["b2"]


def reference_forward(src, tgt, tgt_mask, params):
    raw = params["raw"]
    pe = params["pe_rows"]
    scale = jnp.sqrt(jnp.float32(D_MODEL))
    x = jnp.take(raw["src_emb"], src, axis=0) * scale + pe[None, :S_SRC]
    y = jnp.take(raw["tgt_emb"], tgt, axis=0) * scale + pe[None, :S_TGT]
    for _ in range(NUM_LAYERS):
        x = _ref_layer_norm(x + _ref_attention(x, x, x, raw["enc_attn"]))
        x = _ref_layer_norm(x + _ref_ffn(x, raw["enc_ff"]))
    enc = x
    for _ in range(NUM_LAYERS):
        y = _ref_layer_norm(y + _ref_attention(y, y, y, raw["dec_self_attn"], tgt_mask))
        y = _ref_layer_norm(y + _ref_attention(y, enc, enc, raw["dec_src_attn"]))
        y = _ref_layer_norm(y + _ref_ffn(y, raw["dec_ff"]))
    return _ref_layer_norm(y)


# ----------------------------- main ---------------------------------------------------------------
if __name__ == "__main__":
    key = jax.random.PRNGKey(0)
    kp, ksrc, ktgt = jax.random.split(key, 3)
    params = make_params(kp)

    src = jax.random.randint(ksrc, (B, S_SRC), 0, VOCAB, dtype=jnp.int32)
    tgt = jax.random.randint(ktgt, (B, S_TGT), 0, VOCAB, dtype=jnp.int32)
    tgt_mask = jnp.broadcast_to(
        jnp.tril(jnp.ones((S_TGT, S_TGT), jnp.int32))[None], (B, S_TGT, S_TGT))

    out = jax.block_until_ready(transformer_forward(src, tgt, tgt_mask, params))
    assert out.shape == (B, S_TGT, D_MODEL)
    assert bool(jnp.all(jnp.isfinite(out)))

    # Loose sanity check against a pure-JAX reference (approx EUP reciprocals + matmul precision
    # differences are well inside this tolerance; gross mask/index bugs are not).
    with jax.default_matmul_precision("float32"):
        ref = jax.block_until_ready(reference_forward(src, tgt, tgt_mask, params))
    assert jnp.allclose(out, ref, atol=1e-1, rtol=1e-1), float(jnp.max(jnp.abs(out - ref)))

    print("KERNEL_OK")
</pallas_src>

<mosaic_0001>
module attributes {stable_mosaic.version = 11 : i64} {
  func.func @transformer_kernel(%arg0: i32, %arg1: memref<16x1xi32, #tpu.memory_space<vmem>>, %arg2: memref<16x1xi32, #tpu.memory_space<vmem>>, %arg3: memref<16x8xi32, #tpu.memory_space<vmem>>, %arg4: memref<2x50x32xf32, #tpu.memory_space<vmem>>, %arg5: memref<16x32xf32, #tpu.memory_space<vmem>>, %arg6: memref<11x32x64xf32, #tpu.memory_space<vmem>>, %arg7: memref<11x1x64xf32, #tpu.memory_space<vmem>>, %arg8: memref<5x64x32xf32, #tpu.memory_space<vmem>>, %arg9: memref<7x1x32xf32, #tpu.memory_space<vmem>>, %arg10: memref<16x32xf32, #tpu.memory_space<vmem>>) attributes {dimension_semantics = [#tpu.dimension_semantics<arbitrary>], iteration_bounds = array<i64: 1>, scalar_prefetch = 0 : i64, scratch_operands = 0 : i64, tpu.core_type = #tpu.core_type<tc>, window_params = [{pipeline_mode = #tpu.pipeline_mode<synchronous>, transform_indices = @transform_0, window_bounds = array<i64: 16, 1>}, {pipeline_mode = #tpu.pipeline_mode<synchronous>, transform_indices = @transform_1, window_bounds = array<i64: 16, 1>}, {pipeline_mode = #tpu.pipeline_mode<synchronous>, transform_indices = @transform_2, window_bounds = array<i64: 16, 8>}, {pipeline_mode = #tpu.pipeline_mode<synchronous>, transform_indices = @transform_3, window_bounds = array<i64: 2, 50, 32>}, {pipeline_mode = #tpu.pipeline_mode<synchronous>, transform_indices = @transform_4, window_bounds = array<i64: 16, 32>}, {pipeline_mode = #tpu.pipeline_mode<synchronous>, transform_indices = @transform_5, window_bounds = array<i64: 11, 32, 64>}, {pipeline_mode = #tpu.pipeline_mode<synchronous>, transform_indices = @transform_6, window_bounds = array<i64: 11, 1, 64>}, {pipeline_mode = #tpu.pipeline_mode<synchronous>, transform_indices = @transform_7, window_bounds = array<i64: 5, 64, 32>}, {pipeline_mode = #tpu.pipeline_mode<synchronous>, transform_indices = @transform_8, window_bounds = array<i64: 7, 1, 32>}, {pipeline_mode = #tpu.pipeline_mode<synchronous>, transform_indices = @transform_9, window_bounds = array<i64: 16, 32>}]} {
    %c5 = arith.constant 5 : index
    %c0 = arith.constant 0 : index
    %c0_0 = arith.constant 0 : index
    %0 = vector.load %arg9[%c5, %c0, %c0_0] : memref<7x1x32xf32, #tpu.memory_space<vmem>>, vector<1x1x32xf32>
    %1 = vector.shape_cast %0 : vector<1x1x32xf32> to vector<1x32xf32>
    %c6 = arith.constant 6 : index
    %c0_1 = arith.constant 0 : index
    %c0_2 = arith.constant 0 : index
    %2 = vector.load %arg9[%c6, %c0_1, %c0_2] : memref<7x1x32xf32, #tpu.memory_space<vmem>>, vector<1x1x32xf32>
    %3 = vector.shape_cast %2 : vector<1x1x32xf32> to vector<1x32xf32>
    %c0_3 = arith.constant 0 : index
    %c0_4 = arith.constant 0 : index
    %4 = vector.load %arg5[%c0_3, %c0_4] : memref<16x32xf32, #tpu.memory_space<vmem>>, vector<16x32xf32>
    %5 = tpu.iota {dimensions = array<i32: 0>} : vector<16x16xi32>
    %6 = tpu.iota {dimensions = array<i32: 1>} : vector<16x16xi32>
    %c8_i32 = arith.constant 8 : i32
    %7 = vector.broadcast %c8_i32 : i32 to vector<16x16xi32>
    %8 = arith.cmpi sge, %5, %7 : vector<16x16xi32>
    %c8_i32_5 = arith.constant 8 : i32
    %9 = vector.broadcast %c8_i32_5 : i32 to vector<16x16xi32>
    %10 = arith.cmpi sge, %6, %9 : vector<16x16xi32>
    %11 = arith.xori %8, %10 : vector<16x16xi1>
    %cst = arith.constant -1.000000e+09 : f32
    %cst_6 = arith.constant 0.000000e+00 : f32
    %12 = vector.broadcast %cst : f32 to vector<16x16xf32>
    %13 = vector.broadcast %cst_6 : f32 to vector<16x16xf32>
    %14 = arith.select %11, %12, %13 : vector<16x16xi1>, vector<16x16xf32>
    %c0_7 = arith.constant 0 : index
    %c0_8 = arith.constant 0 : index
    %15 = vector.load %arg3[%c0_7, %c0_8] : memref<16x8xi32, #tpu.memory_space<vmem>>, vector<16x8xi32>
    %c0_i32 = arith.constant 0 : i32
    %16 = vector.broadcast %c0_i32 : i32 to vector<16x8xi32>
    %17 = arith.cmpi eq, %15, %16 : vector<16x8xi32>
    %cst_9 = arith.constant -1.000000e+09 : f32
    %cst_10 = arith.constant 0.000000e+00 : f32
    %18 = vector.broadcast %cst_9 : f32 to vector<16x8xf32>
    %19 = vector.broadcast %cst_10 : f32 to vector<16x8xf32>
    %20 = arith.select %17, %18, %19 : vector<16x8xi1>, vector<16x8xf32>
    %21 = tpu.concatenate %20, %20 in 1 : vector<16x8xf32>, vector<16x8xf32> -> vector<16x16xf32>
    %22 = arith.addf %14, %21 : vector<16x16xf32>
    %c0_11 = arith.constant 0 : index
    %c0_12 = arith.constant 0 : index
    %23 = vector.load %arg1[%c0_11, %c0_12] : memref<16x1xi32, #tpu.memory_space<vmem>>, vector<16x1xi32>
    %24 = tpu.iota {dimensions = array<i32: 1>} : vector<16x50xi32>
    %25 = vector.broadcast %23 : vector<16x1xi32> to vector<16x50xi32>
    %26 = arith.cmpi eq, %25, %24 : vector<16x50xi32>
    %27 = arith.extui %26 : vector<16x50xi1> to vector<16x50xi32>
    %28 = arith.sitofp %27 : vector<16x50xi32> to vector<16x50xf32>
    %c0_13 = arith.constant 0 : index
    %c0_14 = arith.constant 0 : index
    %c0_15 = arith.constant 0 : index
    %29 = vector.load %arg4[%c0_13, %c0_14, %c0_15] : memref<2x50x32xf32, #tpu.memory_space<vmem>>, vector<1x50x32xf32>
    %30 = vector.shape_cast %29 : vector<1x50x32xf32> to vector<50x32xf32>
    %cst_16 = arith.constant dense<0.000000e+00> : vector<16x32xf32>
    %31 = tpu.matmul %28, %30, %cst_16 {dimension_numbers = #tpu.dot_dimension_numbers<[1], [0], [0], [1], [0, 0, 1, 1], [], []>} : vector<16x50xf32>, vector<50x32xf32>, vector<16x32xf32> -> vector<16x32xf32>
    %cst_17 = arith.constant 5.65685415 : f32
    %32 = vector.broadcast %cst_17 : f32 to vector<16x32xf32>
    %33 = arith.mulf %31, %32 : vector<16x32xf32>
    %34 = arith.addf %33, %4 : vector<16x32xf32>
    %c0_18 = arith.constant 0 : index
    %c0_19 = arith.constant 0 : index
    %35 = vector.load %arg2[%c0_18, %c0_19] : memref<16x1xi32, #tpu.memory_space<vmem>>, vector<16x1xi32>
    %36 = tpu.iota {dimensions = array<i32: 1>} : vector<16x50xi32>
    %37 = vector.broadcast %35 : vector<16x1xi32> to vector<16x50xi32>
    %38 = arith.cmpi eq, %37, %36 : vector<16x50xi32>
    %39 = arith.extui %38 : vector<16x50xi1> to vector<16x50xi32>
    %40 = arith.sitofp %39 : vector<16x50xi32> to vector<16x50xf32>
    %c1 = arith.constant 1 : index
    %c0_20 = arith.constant 0 : index
    %c0_21 = arith.constant 0 : index
    %41 = vector.load %arg4[%c1, %c0_20, %c0_21] : memref<2x50x32xf32, #tpu.memory_space<vmem>>, vector<1x50x32xf32>
    %42 = vector.shape_cast %41 : vector<1x50x32xf32> to vector<50x32xf32>
    %cst_22 = arith.constant dense<0.000000e+00> : vector<16x32xf32>
    %43 = tpu.matmul %40, %42, %cst_22 {dimension_numbers = #tpu.dot_dimension_numbers<[1], [0], [0], [1], [0, 0, 1, 1], [], []>} : vector<16x50xf32>, vector<50x32xf32>, vector<16x32xf32> -> vector<16x32xf32>
    %cst_23 = arith.constant 5.65685415 : f32
    %44 = vector.broadcast %cst_23 : f32 to vector<16x32xf32>
    %45 = arith.mulf %43, %44 : vector<16x32xf32>
    %46 = arith.addf %45, %4 : vector<16x32xf32>
    %c0_24 = arith.constant 0 : index
    %c0_25 = arith.constant 0 : index
    %c0_26 = arith.constant 0 : index
    %47 = vector.load %arg6[%c0_24, %c0_25, %c0_26] : memref<11x32x64xf32, #tpu.memory_space<vmem>>, vector<1x32x64xf32>
    %48 = vector.shape_cast %47 : vector<1x32x64xf32> to vector<32x64xf32>
    %cst_27 = arith.constant dense<0.000000e+00> : vector<16x64xf32>
    %49 = tpu.matmul %34, %48, %cst_27 {dimension_numbers = #tpu.dot_dimension_numbers<[1], [0], [0], [1], [0, 0, 1, 1], [], []>} : vector<16x32xf32>, vector<32x64xf32>, vector<16x64xf32> -> vector<16x64xf32>
    %c0_28 = arith.constant 0 : index
    %c0_29 = arith.constant 0 : index
    %c0_30 = arith.constant 0 : index
    %50 = vector.load %arg7[%c0_28, %c0_29, %c0_30] : memref<11x1x64xf32, #tpu.memory_space<vmem>>, vector<1x1x64xf32>
    %51 = vector.shape_cast %50 : vector<1x1x64xf32> to vector<1x64xf32>
    %52 = vector.broadcast %51 : vector<1x64xf32> to vector<16x64xf32>
    %53 = arith.addf %49, %52 : vector<16x64xf32>
    %c1_31 = arith.constant 1 : index
    %c0_32 = arith.constant 0 : index
    %c0_33 = arith.constant 0 : index
    %54 = vector.load %arg6[%c1_31, %c0_32, %c0_33] : memref<11x32x64xf32, #tpu.memory_space<vmem>>, vector<1x32x64xf32>
    %55 = vector.shape_cast %54 : vector<1x32x64xf32> to vector<32x64xf32>
    %cst_34 = arith.constant dense<0.000000e+00> : vector<16x64xf32>
    %56 = tpu.matmul %34, %55, %cst_34 {dimension_numbers = #tpu.dot_dimension_numbers<[1], [0], [0], [1], [0, 0, 1, 1], [], []>} : vector<16x32xf32>, vector<32x64xf32>, vector<16x64xf32> -> vector<16x64xf32>
    %c1_35 = arith.constant 1 : index
    %c0_36 = arith.constant 0 : index
    %c0_37 = arith.constant 0 : index
    %57 = vector.load %arg7[%c1_35, %c0_36, %c0_37] : memref<11x1x64xf32, #tpu.memory_space<vmem>>, vector<1x1x64xf32>
    %58 = vector.shape_cast %57 : vector<1x1x64xf32> to vector<1x64xf32>
    %59 = vector.broadcast %58 : vector<1x64xf32> to vector<16x64xf32>
    %60 = arith.addf %56, %59 : vector<16x64xf32>
    %c2 = arith.constant 2 : index
    %c0_38 = arith.constant 0 : index
    %c0_39 = arith.constant 0 : index
    %61 = vector.load %arg6[%c2, %c0_38, %c0_39] : memref<11x32x64xf32, #tpu.memory_space<vmem>>, vector<1x32x64xf32>
    %62 = vector.shape_cast %61 : vector<1x32x64xf32> to vector<32x64xf32>
    %cst_40 = arith.constant dense<0.000000e+00> : vector<16x64xf32>
    %63 = tpu.matmul %34, %62, %cst_40 {dimension_numbers = #tpu.dot_dimension_numbers<[1], [0], [0], [1], [0, 0, 1, 1], [], []>} : vector<16x32xf32>, vector<32x64xf32>, vector<16x64xf32> -> vector<16x64xf32>
    %c2_41 = arith.constant 2 : index
    %c0_42 = arith.constant 0 : index
    %c0_43 = arith.constant 0 : index
    %64 = vector.load %arg7[%c2_41, %c0_42, %c0_43] : memref<11x1x64xf32, #tpu.memory_space<vmem>>, vector<1x1x64xf32>
    %65 = vector.shape_cast %64 : vector<1x1x64xf32> to vector<1x64xf32>
    %66 = vector.broadcast %65 : vector<1x64xf32> to vector<16x64xf32>
    %67 = arith.addf %63, %66 : vector<16x64xf32>
    %cst_44 = arith.constant dense<0.000000e+00> : vector<16x16xf32>
    %68 = tpu.matmul %53, %60, %cst_44 {dimension_numbers = #tpu.dot_dimension_numbers<[1], [1], [0], [0], [0, 0, 1, 0], [], []>} : vector<16x64xf32>, vector<16x64xf32>, vector<16x16xf32> -> vector<16x16xf32>
    %69 = arith.addf %68, %14 : vector<16x16xf32>
    %cst_45 = arith.constant dense<0xFF800000> : vector<16xf32>
    %70 = vector.multi_reduction <maximumf>, %69, %cst_45 [1] : vector<16x16xf32> to vector<16xf32>
    %71 = vector.shape_cast %70 : vector<16xf32> to vector<16x1xf32>
    %72 = vector.broadcast %71 : vector<16x1xf32> to vector<16x16xf32>
    %73 = arith.subf %69, %72 : vector<16x16xf32>
    %74 = math.exp %73 : vector<16x16xf32>
    %cst_46 = arith.constant dense<0.000000e+00> : vector<16xf32>
    %75 = vector.multi_reduction <add>, %74, %cst_46 [1] : vector<16x16xf32> to vector<16xf32>
    %76 = vector.shape_cast %75 : vector<16xf32> to vector<16x1xf32>
    %77 = tpu.reciprocal %76 {approx = true} : vector<16x1xf32> -> vector<16x1xf32>
    %78 = vector.broadcast %77 : vector<16x1xf32> to vector<16x16xf32>
    %79 = arith.mulf %74, %78 : vector<16x16xf32>
    %cst_47 = arith.constant dense<0.000000e+00> : vector<16x64xf32>
    %80 = tpu.matmul %79, %67, %cst_47 {dimension_numbers = #tpu.dot_dimension_numbers<[1], [0], [0], [1], [0, 0, 1, 1], [], []>} : vector<16x16xf32>, vector<16x64xf32>, vector<16x64xf32> -> vector<16x64xf32>
    %c0_48 = arith.constant 0 : index
    %c0_49 = arith.constant 0 : index
    %c0_50 = arith.constant 0 : index
    %81 = vector.load %arg8[%c0_48, %c0_49, %c0_50] : memref<5x64x32xf32, #tpu.memory_space<vmem>>, vector<1x64x32xf32>
    %82 = vector.shape_cast %81 : vector<1x64x32xf32> to vector<64x32xf32>
    %cst_51 = arith.constant dense<0.000000e+00> : vector<16x32xf32>
    %83 = tpu.matmul %80, %82, %cst_51 {dimension_numbers = #tpu.dot_dimension_numbers<[1], [0], [0], [1], [0, 0, 1, 1], [], []>} : vector<16x64xf32>, vector<64x32xf32>, vector<16x32xf32> -> vector<16x32xf32>
    %c0_52 = arith.constant 0 : index
    %c0_53 = arith.constant 0 : index
    %c0_54 = arith.constant 0 : index
    %84 = vector.load %arg9[%c0_52, %c0_53, %c0_54] : memref<7x1x32xf32, #tpu.memory_space<vmem>>, vector<1x1x32xf32>
    %85 = vector.shape_cast %84 : vector<1x1x32xf32> to vector<1x32xf32>
    %86 = vector.broadcast %85 : vector<1x32xf32> to vector<16x32xf32>
    %87 = arith.addf %83, %86 : vector<16x32xf32>
    %88 = arith.addf %34, %87 : vector<16x32xf32>
    %cst_55 = arith.constant dense<0.000000e+00> : vector<16xf32>
    %89 = vector.multi_reduction <add>, %88, %cst_55 [1] : vector<16x32xf32> to vector<16xf32>
    %90 = vector.shape_cast %89 : vector<16xf32> to vector<16x1xf32>
    %91 = arith.mulf %88, %88 : vector<16x32xf32>
    %cst_56 = arith.constant dense<0.000000e+00> : vector<16xf32>
    %92 = vector.multi_reduction <add>, %91, %cst_56 [1] : vector<16x32xf32> to vector<16xf32>
    %93 = vector.shape_cast %92 : vector<16xf32> to vector<16x1xf32>
    %cst_57 = arith.constant 3.125000e-02 : f32
    %94 = vector.broadcast %cst_57 : f32 to vector<16x1xf32>
    %95 = arith.mulf %90, %94 : vector<16x1xf32>
    %96 = arith.mulf %90, %95 : vector<16x1xf32>
    %97 = arith.subf %93, %96 : vector<16x1xf32>
    %cst_58 = arith.constant 0.0322580636 : f32
    %98 = vector.broadcast %cst_58 : f32 to vector<16x1xf32>
    %99 = arith.mulf %97, %98 : vector<16x1xf32>
    %cst_59 = arith.constant 0.000000e+00 : f32
    %100 = vector.broadcast %cst_59 : f32 to vector<16x1xf32>
    %101 = arith.maximumf %99, %100 : vector<16x1xf32>
    %102 = math.sqrt %101 : vector<16x1xf32>
    %cst_60 = arith.constant 9.99999997E-7 : f32
    %103 = vector.broadcast %cst_60 : f32 to vector<16x1xf32>
    %104 = arith.addf %102, %103 : vector<16x1xf32>
    %105 = vector.broadcast %95 : vector<16x1xf32> to vector<16x32xf32>
    %106 = arith.subf %88, %105 : vector<16x32xf32>
    %107 = vector.broadcast %1 : vector<1x32xf32> to vector<16x32xf32>
    %108 = arith.mulf %107, %106 : vector<16x32xf32>
    %109 = tpu.reciprocal %104 {approx = true} : vector<16x1xf32> -> vector<16x1xf32>
    %110 = vector.broadcast %109 : vector<16x1xf32> to vector<16x32xf32>
    %111 = arith.mulf %108, %110 : vector<16x32xf32>
    %112 = vector.broadcast %3 : vector<1x32xf32> to vector<16x32xf32>
    %113 = arith.addf %111, %112 : vector<16x32xf32>
    %c9 = arith.constant 9 : index
    %c0_61 = arith.constant 0 : index
    %c0_62 = arith.constant 0 : index
    %114 = vector.load %arg6[%c9, %c0_61, %c0_62] : memref<11x32x64xf32, #tpu.memory_space<vmem>>, vector<1x32x64xf32>
    %115 = vector.shape_cast %114 : vector<1x32x64xf32> to vector<32x64xf32>
    %cst_63 = arith.constant dense<0.000000e+00> : vector<16x64xf32>
    %116 = tpu.matmul %113, %115, %cst_63 {dimension_numbers = #tpu.dot_dimension_numbers<[1], [0], [0], [1], [0, 0, 1, 1], [], []>} : vector<16x32xf32>, vector<32x64xf32>, vector<16x64xf32> -> vector<16x64xf32>
    %c9_64 = arith.constant 9 : index
    %c0_65 = arith.constant 0 : index
    %c0_66 = arith.constant 0 : index
    %117 = vector.load %arg7[%c9_64, %c0_65, %c0_66] : memref<11x1x64xf32, #tpu.memory_space<vmem>>, vector<1x1x64xf32>
    %118 = vector.shape_cast %117 : vector<1x1x64xf32> to vector<1x64xf32>
    %119 = vector.broadcast %118 : vector<1x64xf32> to vector<16x64xf32>
    %120 = arith.addf %116, %119 : vector<16x64xf32>
    %cst_67 = arith.constant 0.000000e+00 : f32
    %121 = vector.broadcast %cst_67 : f32 to vector<16x64xf32>
    %122 = arith.maximumf %120, %121 : vector<16x64xf32>
    %c3 = arith.constant 3 : index
    %c0_68 = arith.constant 0 : index
    %c0_69 = arith.constant 0 : index
    %123 = vector.load %arg8[%c3, %c0_68, %c0_69] : memref<5x64x32xf32, #tpu.memory_space<vmem>>, vector<1x64x32xf32>
    %124 = vector.shape_cast %123 : vector<1x64x32xf32> to vector<64x32xf32>
    %cst_70 = arith.constant dense<0.000000e+00> : vector<16x32xf32>
    %125 = tpu.matmul %122, %124, %cst_70 {dimension_numbers = #tpu.dot_dimension_numbers<[1], [0], [0], [1], [0, 0, 1, 1], [], []>} : vector<16x64xf32>, vector<64x32xf32>, vector<16x32xf32> -> vector<16x32xf32>
    %c3_71 = arith.constant 3 : index
    %c0_72 = arith.constant 0 : index
    %c0_73 = arith.constant 0 : index
    %126 = vector.load %arg9[%c3_71, %c0_72, %c0_73] : memref<7x1x32xf32, #tpu.memory_space<vmem>>, vector<1x1x32xf32>
    %127 = vector.shape_cast %126 : vector<1x1x32xf32> to vector<1x32xf32>
    %128 = vector.broadcast %127 : vector<1x32xf32> to vector<16x32xf32>
    %129 = arith.addf %125, %128 : vector<16x32xf32>
    %130 = arith.addf %113, %129 : vector<16x32xf32>
    %cst_74 = arith.constant dense<0.000000e+00> : vector<16xf32>
    %131 = vector.multi_reduction <add>, %130, %cst_74 [1] : vector<16x32xf32> to vector<16xf32>
    %132 = vector.shape_cast %131 : vector<16xf32> to vector<16x1xf32>
    %133 = arith.mulf %130, %130 : vector<16x32xf32>
    %cst_75 = arith.constant dense<0.000000e+00> : vector<16xf32>
    %134 = vector.multi_reduction <add>, %133, %cst_75 [1] : vector<16x32xf32> to vector<16xf32>
    %135 = vector.shape_cast %134 : vector<16xf32> to vector<16x1xf32>
    %cst_76 = arith.constant 3.125000e-02 : f32
    %136 = vector.broadcast %cst_76 : f32 to vector<16x1xf32>
    %137 = arith.mulf %132, %136 : vector<16x1xf32>
    %138 = arith.mulf %132, %137 : vector<16x1xf32>
    %139 = arith.subf %135, %138 : vector<16x1xf32>
    %cst_77 = arith.constant 0.0322580636 : f32
    %140 = vector.broadcast %cst_77 : f32 to vector<16x1xf32>
    %141 = arith.mulf %139, %140 : vector<16x1xf32>
    %cst_78 = arith.constant 0.000000e+00 : f32
    %142 = vector.broadcast %cst_78 : f32 to vector<16x1xf32>
    %143 = arith.maximumf %141, %142 : vector<16x1xf32>
    %144 = math.sqrt %143 : vector<16x1xf32>
    %cst_79 = arith.constant 9.99999997E-7 : f32
    %145 = vector.broadcast %cst_79 : f32 to vector<16x1xf32>
    %146 = arith.addf %144, %145 : vector<16x1xf32>
    %147 = vector.broadcast %137 : vector<16x1xf32> to vector<16x32xf32>
    %148 = arith.subf %130, %147 : vector<16x32xf32>
    %149 = vector.broadcast %1 : vector<1x32xf32> to vector<16x32xf32>
    %150 = arith.mulf %149, %148 : vector<16x32xf32>
    %151 = tpu.reciprocal %146 {approx = true} : vector<16x1xf32> -> vector<16x1xf32>
    %152 = vector.broadcast %151 : vector<16x1xf32> to vector<16x32xf32>
    %153 = arith.mulf %150, %152 : vector<16x32xf32>
    %154 = vector.broadcast %3 : vector<1x32xf32> to vector<16x32xf32>
    %155 = arith.addf %153, %154 : vector<16x32xf32>
    %c0_80 = arith.constant 0 : index
    %c0_81 = arith.constant 0 : index
    %c0_82 = arith.constant 0 : index
    %156 = vector.load %arg6[%c0_80, %c0_81, %c0_82] : memref<11x32x64xf32, #tpu.memory_space<vmem>>, vector<1x32x64xf32>
    %157 = vector.shape_cast %156 : vector<1x32x64xf32> to vector<32x64xf32>
    %cst_83 = arith.constant dense<0.000000e+00> : vector<16x64xf32>
    %158 = tpu.matmul %155, %157, %cst_83 {dimension_numbers = #tpu.dot_dimension_numbers<[1], [0], [0], [1], [0, 0, 1, 1], [], []>} : vector<16x32xf32>, vector<32x64xf32>, vector<16x64xf32> -> vector<16x64xf32>
    %c0_84 = arith.constant 0 : index
    %c0_85 = arith.constant 0 : index
    %c0_86 = arith.constant 0 : index
    %159 = vector.load %arg7[%c0_84, %c0_85, %c0_86] : memref<11x1x64xf32, #tpu.memory_space<vmem>>, vector<1x1x64xf32>
    %160 = vector.shape_cast %159 : vector<1x1x64xf32> to vector<1x64xf32>
    %161 = vector.broadcast %160 : vector<1x64xf32> to vector<16x64xf32>
    %162 = arith.addf %158, %161 : vector<16x64xf32>
    %c1_87 = arith.constant 1 : index
    %c0_88 = arith.constant 0 : index
    %c0_89 = arith.constant 0 : index
    %163 = vector.load %arg6[%c1_87, %c0_88, %c0_89] : memref<11x32x64xf32, #tpu.memory_space<vmem>>, vector<1x32x64xf32>
    %164 = vector.shape_cast %163 : vector<1x32x64xf32> to vector<32x64xf32>
    %cst_90 = arith.constant dense<0.000000e+00> : vector<16x64xf32>
    %165 = tpu.matmul %155, %164, %cst_90 {dimension_numbers = #tpu.dot_dimension_numbers<[1], [0], [0], [1], [0, 0, 1, 1], [], []>} : vector<16x32xf32>, vector<32x64xf32>, vector<16x64xf32> -> vector<16x64xf32>
    %c1_91 = arith.constant 1 : index
    %c0_92 = arith.constant 0 : index
    %c0_93 = arith.constant 0 : index
    %166 = vector.load %arg7[%c1_91, %c0_92, %c0_93] : memref<11x1x64xf32, #tpu.memory_space<vmem>>, vector<1x1x64xf32>
    %167 = vector.shape_cast %166 : vector<1x1x64xf32> to vector<1x64xf32>
    %168 = vector.broadcast %167 : vector<1x64xf32> to vector<16x64xf32>
    %169 = arith.addf %165, %168 : vector<16x64xf32>
    %c2_94 = arith.constant 2 : index
    %c0_95 = arith.constant 0 : index
    %c0_96 = arith.constant 0 : index
    %170 = vector.load %arg6[%c2_94, %c0_95, %c0_96] : memref<11x32x64xf32, #tpu.memory_space<vmem>>, vector<1x32x64xf32>
    %171 = vector.shape_cast %170 : vector<1x32x64xf32> to vector<32x64xf32>
    %cst_97 = arith.constant dense<0.000000e+00> : vector<16x64xf32>
    %172 = tpu.matmul %155, %171, %cst_97 {dimension_numbers = #tpu.dot_dimension_numbers<[1], [0], [0], [1], [0, 0, 1, 1], [], []>} : vector<16x32xf32>, vector<32x64xf32>, vector<16x64xf32> -> vector<16x64xf32>
    %c2_98 = arith.constant 2 : index
    %c0_99 = arith.constant 0 : index
    %c0_100 = arith.constant 0 : index
    %173 = vector.load %arg7[%c2_98, %c0_99, %c0_100] : memref<11x1x64xf32, #tpu.memory_space<vmem>>, vector<1x1x64xf32>
    %174 = vector.shape_cast %173 : vector<1x1x64xf32> to vector<1x64xf32>
    %175 = vector.broadcast %174 : vector<1x64xf32> to vector<16x64xf32>
    %176 = arith.addf %172, %175 : vector<16x64xf32>
    %cst_101 = arith.constant dense<0.000000e+00> : vector<16x16xf32>
    %177 = tpu.matmul %162, %169, %cst_101 {dimension_numbers = #tpu.dot_dimension_numbers<[1], [1], [0], [0], [0, 0, 1, 0], [], []>} : vector<16x64xf32>, vector<16x64xf32>, vector<16x16xf32> -> vector<16x16xf32>
    %178 = arith.addf %177, %14 : vector<16x16xf32>
    %cst_102 = arith.constant dense<0xFF800000> : vector<16xf32>
    %179 = vector.multi_reduction <maximumf>, %178, %cst_102 [1] : vector<16x16xf32> to vector<16xf32>
    %180 = vector.shape_cast %179 : vector<16xf32> to vector<16x1xf32>
    %181 = vector.broadcast %180 : vector<16x1xf32> to vector<16x16xf32>
    %182 = arith.subf %178, %181 : vector<16x16xf32>
    %183 = math.exp %182 : vector<16x16xf32>
    %cst_103 = arith.constant dense<0.000000e+00> : vector<16xf32>
    %184 = vector.multi_reduction <add>, %183, %cst_103 [1] : vector<16x16xf32> to vector<16xf32>
    %185 = vector.shape_cast %184 : vector<16xf32> to vector<16x1xf32>
    %186 = tpu.reciprocal %185 {approx = true} : vector<16x1xf32> -> vector<16x1xf32>
    %187 = vector.broadcast %186 : vector<16x1xf32> to vector<16x16xf32>
    %188 = arith.mulf %183, %187 : vector<16x16xf32>
    %cst_104 = arith.constant dense<0.000000e+00> : vector<16x64xf32>
    %189 = tpu.matmul %188, %176, %cst_104 {dimension_numbers = #tpu.dot_dimension_numbers<[1], [0], [0], [1], [0, 0, 1, 1], [], []>} : vector<16x16xf32>, vector<16x64xf32>, vector<16x64xf32> -> vector<16x64xf32>
    %c0_105 = arith.constant 0 : index
    %c0_106 = arith.constant 0 : index
    %c0_107 = arith.constant 0 : index
    %190 = vector.load %arg8[%c0_105, %c0_106, %c0_107] : memref<5x64x32xf32, #tpu.memory_space<vmem>>, vector<1x64x32xf32>
    %191 = vector.shape_cast %190 : vector<1x64x32xf32> to vector<64x32xf32>
    %cst_108 = arith.constant dense<0.000000e+00> : vector<16x32xf32>
    %192 = tpu.matmul %189, %191, %cst_108 {dimension_numbers = #tpu.dot_dimension_numbers<[1], [0], [0], [1], [0, 0, 1, 1], [], []>} : vector<16x64xf32>, vector<64x32xf32>, vector<16x32xf32> -> vector<16x32xf32>
    %c0_109 = arith.constant 0 : index
    %c0_110 = arith.constant 0 : index
    %c0_111 = arith.constant 0 : index
    %193 = vector.load %arg9[%c0_109, %c0_110, %c0_111] : memref<7x1x32xf32, #tpu.memory_space<vmem>>, vector<1x1x32xf32>
    %194 = vector.shape_cast %193 : vector<1x1x32xf32> to vector<1x32xf32>
    %195 = vector.broadcast %194 : vector<1x32xf32> to vector<16x32xf32>
    %196 = arith.addf %192, %195 : vector<16x32xf32>
    %197 = arith.addf %155, %196 : vector<16x32xf32>
    %cst_112 = arith.constant dense<0.000000e+00> : vector<16xf32>
    %198 = vector.multi_reduction <add>, %197, %cst_112 [1] : vector<16x32xf32> to vector<16xf32>
    %199 = vector.shape_cast %198 : vector<16xf32> to vector<16x1xf32>
    %200 = arith.mulf %197, %197 : vector<16x32xf32>
    %cst_113 = arith.constant dense<0.000000e+00> : vector<16xf32>
    %201 = vector.multi_reduction <add>, %200, %cst_113 [1] : vector<16x32xf32> to vector<16xf32>
    %202 = vector.shape_cast %201 : vector<16xf32> to vector<16x1xf32>
    %cst_114 = arith.constant 3.125000e-02 : f32
    %203 = vector.broadcast %cst_114 : f32 to vector<16x1xf32>
    %204 = arith.mulf %199, %203 : vector<16x1xf32>
    %205 = arith.mulf %199, %204 : vector<16x1xf32>
    %206 = arith.subf %202, %205 : vector<16x1xf32>
    %cst_115 = arith.constant 0.0322580636 : f32
    %207 = vector.broadcast %cst_115 : f32 to vector<16x1xf32>
    %208 = arith.mulf %206, %207 : vector<16x1xf32>
    %cst_116 = arith.constant 0.000000e+00 : f32
    %209 = vector.broadcast %cst_116 : f32 to vector<16x1xf32>
    %210 = arith.maximumf %208, %209 : vector<16x1xf32>
    %211 = math.sqrt %210 : vector<16x1xf32>
    %cst_117 = arith.constant 9.99999997E-7 : f32
    %212 = vector.broadcast %cst_117 : f32 to vector<16x1xf32>
    %213 = arith.addf %211, %212 : vector<16x1xf32>
    %214 = vector.broadcast %204 : vector<16x1xf32> to vector<16x32xf32>
    %215 = arith.subf %197, %214 : vector<16x32xf32>
    %216 = vector.broadcast %1 : vector<1x32xf32> to vector<16x32xf32>
    %217 = arith.mulf %216, %215 : vector<16x32xf32>
    %218 = tpu.reciprocal %213 {approx = true} : vector<16x1xf32> -> vector<16x1xf32>
    %219 = vector.broadcast %218 : vector<16x1xf32> to vector<16x32xf32>
    %220 = arith.mulf %217, %219 : vector<16x32xf32>
    %221 = vector.broadcast %3 : vector<1x32xf32> to vector<16x32xf32>
    %222 = arith.addf %220, %221 : vector<16x32xf32>
    %c9_118 = arith.constant 9 : index
    %c0_119 = arith.constant 0 : index
    %c0_120 = arith.constant 0 : index
    %223 = vector.load %arg6[%c9_118, %c0_119, %c0_120] : memref<11x32x64xf32, #tpu.memory_space<vmem>>, vector<1x32x64xf32>
    %224 = vector.shape_cast %223 : vector<1x32x64xf32> to vector<32x64xf32>
    %cst_121 = arith.constant dense<0.000000e+00> : vector<16x64xf32>
    %225 = tpu.matmul %222, %224, %cst_121 {dimension_numbers = #tpu.dot_dimension_numbers<[1], [0], [0], [1], [0, 0, 1, 1], [], []>} : vector<16x32xf32>, vector<32x64xf32>, vector<16x64xf32> -> vector<16x64xf32>
    %c9_122 = arith.constant 9 : index
    %c0_123 = arith.constant 0 : index
    %c0_124 = arith.constant 0 : index
    %226 = vector.load %arg7[%c9_122, %c0_123, %c0_124] : memref<11x1x64xf32, #tpu.memory_space<vmem>>, vector<1x1x64xf32>
    %227 = vector.shape_cast %226 : vector<1x1x64xf32> to vector<1x64xf32>
    %228 = vector.broadcast %227 : vector<1x64xf32> to vector<16x64xf32>
    %229 = arith.addf %225, %228 : vector<16x64xf32>
    %cst_125 = arith.constant 0.000000e+00 : f32
    %230 = vector.broadcast %cst_125 : f32 to vector<16x64xf32>
    %231 = arith.maximumf %229, %230 : vector<16x64xf32>
    %c3_126 = arith.constant 3 : index
    %c0_127 = arith.constant 0 : index
    %c0_128 = arith.constant 0 : index
    %232 = vector.load %arg8[%c3_126, %c0_127, %c0_128] : memref<5x64x32xf32, #tpu.memory_space<vmem>>, vector<1x64x32xf32>
    %233 = vector.shape_cast %232 : vector<1x64x32xf32> to vector<64x32xf32>
    %cst_129 = arith.constant dense<0.000000e+00> : vector<16x32xf32>
    %234 = tpu.matmul %231, %233, %cst_129 {dimension_numbers = #tpu.dot_dimension_numbers<[1], [0], [0], [1], [0, 0, 1, 1], [], []>} : vector<16x64xf32>, vector<64x32xf32>, vector<16x32xf32> -> vector<16x32xf32>
    %c3_130 = arith.constant 3 : index
    %c0_131 = arith.constant 0 : index
    %c0_132 = arith.constant 0 : index
    %235 = vector.load %arg9[%c3_130, %c0_131, %c0_132] : memref<7x1x32xf32, #tpu.memory_space<vmem>>, vector<1x1x32xf32>
    %236 = vector.shape_cast %235 : vector<1x1x32xf32> to vector<1x32xf32>
    %237 = vector.broadcast %236 : vector<1x32xf32> to vector<16x32xf32>
    %238 = arith.addf %234, %237 : vector<16x32xf32>
    %239 = arith.addf %222, %238 : vector<16x32xf32>
    %cst_133 = arith.constant dense<0.000000e+00> : vector<16xf32>
    %240 = vector.multi_reduction <add>, %239, %cst_133 [1] : vector<16x32xf32> to vector<16xf32>
    %241 = vector.shape_cast %240 : vector<16xf32> to vector<16x1xf32>
    %242 = arith.mulf %239, %239 : vector<16x32xf32>
    %cst_134 = arith.constant dense<0.000000e+00> : vector<16xf32>
    %243 = vector.multi_reduction <add>, %242, %cst_134 [1] : vector<16x32xf32> to vector<16xf32>
    %244 = vector.shape_cast %243 : vector<16xf32> to vector<16x1xf32>
    %cst_135 = arith.constant 3.125000e-02 : f32
    %245 = vector.broadcast %cst_135 : f32 to vector<16x1xf32>
    %246 = arith.mulf %241, %245 : vector<16x1xf32>
    %247 = arith.mulf %241, %246 : vector<16x1xf32>
    %248 = arith.subf %244, %247 : vector<16x1xf32>
    %cst_136 = arith.constant 0.0322580636 : f32
    %249 = vector.broadcast %cst_136 : f32 to vector<16x1xf32>
    %250 = arith.mulf %248, %249 : vector<16x1xf32>
    %cst_137 = arith.constant 0.000000e+00 : f32
    %251 = vector.broadcast %cst_137 : f32 to vector<16x1xf32>
    %252 = arith.maximumf %250, %251 : vector<16x1xf32>
    %253 = math.sqrt %252 : vector<16x1xf32>
    %cst_138 = arith.constant 9.99999997E-7 : f32
    %254 = vector.broadcast %cst_138 : f32 to vector<16x1xf32>
    %255 = arith.addf %253, %254 : vector<16x1xf32>
    %256 = vector.broadcast %246 : vector<16x1xf32> to vector<16x32xf32>
    %257 = arith.subf %239, %256 : vector<16x32xf32>
    %258 = vector.broadcast %1 : vector<1x32xf32> to vector<16x32xf32>
    %259 = arith.mulf %258, %257 : vector<16x32xf32>
    %260 = tpu.reciprocal %255 {approx = true} : vector<16x1xf32> -> vector<16x1xf32>
    %261 = vector.broadcast %260 : vector<16x1xf32> to vector<16x32xf32>
    %262 = arith.mulf %259, %261 : vector<16x32xf32>
    %263 = vector.broadcast %3 : vector<1x32xf32> to vector<16x32xf32>
    %264 = arith.addf %262, %263 : vector<16x32xf32>
    %c3_139 = arith.constant 3 : index
    %c0_140 = arith.constant 0 : index
    %c0_141 = arith.constant 0 : index
    %265 = vector.load %arg6[%c3_139, %c0_140, %c0_141] : memref<11x32x64xf32, #tpu.memory_space<vmem>>, vector<1x32x64xf32>
    %266 = vector.shape_cast %265 : vector<1x32x64xf32> to vector<32x64xf32>
    %cst_142 = arith.constant dense<0.000000e+00> : vector<16x64xf32>
    %267 = tpu.matmul %46, %266, %cst_142 {dimension_numbers = #tpu.dot_dimension_numbers<[1], [0], [0], [1], [0, 0, 1, 1], [], []>} : vector<16x32xf32>, vector<32x64xf32>, vector<16x64xf32> -> vector<16x64xf32>
    %c3_143 = arith.constant 3 : index
    %c0_144 = arith.constant 0 : index
    %c0_145 = arith.constant 0 : index
    %268 = vector.load %arg7[%c3_143, %c0_144, %c0_145] : memref<11x1x64xf32, #tpu.memory_space<vmem>>, vector<1x1x64xf32>
    %269 = vector.shape_cast %268 : vector<1x1x64xf32> to vector<1x64xf32>
    %270 = vector.broadcast %269 : vector<1x64xf32> to vector<16x64xf32>
    %271 = arith.addf %267, %270 : vector<16x64xf32>
    %c4 = arith.constant 4 : index
    %c0_146 = arith.constant 0 : index
    %c0_147 = arith.constant 0 : index
    %272 = vector.load %arg6[%c4, %c0_146, %c0_147] : memref<11x32x64xf32, #tpu.memory_space<vmem>>, vector<1x32x64xf32>
    %273 = vector.shape_cast %272 : vector<1x32x64xf32> to vector<32x64xf32>
    %cst_148 = arith.constant dense<0.000000e+00> : vector<16x64xf32>
    %274 = tpu.matmul %46, %273, %cst_148 {dimension_numbers = #tpu.dot_dimension_numbers<[1], [0], [0], [1], [0, 0, 1, 1], [], []>} : vector<16x32xf32>, vector<32x64xf32>, vector<16x64xf32> -> vector<16x64xf32>
    %c4_149 = arith.constant 4 : index
    %c0_150 = arith.constant 0 : index
    %c0_151 = arith.constant 0 : index
    %275 = vector.load %arg7[%c4_149, %c0_150, %c0_151] : memref<11x1x64xf32, #tpu.memory_space<vmem>>, vector<1x1x64xf32>
    %276 = vector.shape_cast %275 : vector<1x1x64xf32> to vector<1x64xf32>
    %277 = vector.broadcast %276 : vector<1x64xf32> to vector<16x64xf32>
    %278 = arith.addf %274, %277 : vector<16x64xf32>
    %c5_152 = arith.constant 5 : index
    %c0_153 = arith.constant 0 : index
    %c0_154 = arith.constant 0 : index
    %279 = vector.load %arg6[%c5_152, %c0_153, %c0_154] : memref<11x32x64xf32, #tpu.memory_space<vmem>>, vector<1x32x64xf32>
    %280 = vector.shape_cast %279 : vector<1x32x64xf32> to vector<32x64xf32>
    %cst_155 = arith.constant dense<0.000000e+00> : vector<16x64xf32>
    %281 = tpu.matmul %46, %280, %cst_155 {dimension_numbers = #tpu.dot_dimension_numbers<[1], [0], [0], [1], [0, 0, 1, 1], [], []>} : vector<16x32xf32>, vector<32x64xf32>, vector<16x64xf32> -> vector<16x64xf32>
    %c5_156 = arith.constant 5 : index
    %c0_157 = arith.constant 0 : index
    %c0_158 = arith.constant 0 : index
    %282 = vector.load %arg7[%c5_156, %c0_157, %c0_158] : memref<11x1x64xf32, #tpu.memory_space<vmem>>, vector<1x1x64xf32>
    %283 = vector.shape_cast %282 : vector<1x1x64xf32> to vector<1x64xf32>
    %284 = vector.broadcast %283 : vector<1x64xf32> to vector<16x64xf32>
    %285 = arith.addf %281, %284 : vector<16x64xf32>
    %cst_159 = arith.constant dense<0.000000e+00> : vector<16x16xf32>
    %286 = tpu.matmul %271, %278, %cst_159 {dimension_numbers = #tpu.dot_dimension_numbers<[1], [1], [0], [0], [0, 0, 1, 0], [], []>} : vector<16x64xf32>, vector<16x64xf32>, vector<16x16xf32> -> vector<16x16xf32>
    %287 = arith.addf %286, %22 : vector<16x16xf32>
    %cst_160 = arith.constant dense<0xFF800000> : vector<16xf32>
    %288 = vector.multi_reduction <maximumf>, %287, %cst_160 [1] : vector<16x16xf32> to vector<16xf32>
    %289 = vector.shape_cast %288 : vector<16xf32> to vector<16x1xf32>
    %290 = vector.broadcast %289 : vector<16x1xf32> to vector<16x16xf32>
    %291 = arith.subf %287, %290 : vector<16x16xf32>
    %292 = math.exp %291 : vector<16x16xf32>
    %cst_161 = arith.constant dense<0.000000e+00> : vector<16xf32>
    %293 = vector.multi_reduction <add>, %292, %cst_161 [1] : vector<16x16xf32> to vector<16xf32>
    %294 = vector.shape_cast %293 : vector<16xf32> to vector<16x1xf32>
    %295 = tpu.reciprocal %294 {approx = true} : vector<16x1xf32> -> vector<16x1xf32>
    %296 = vector.broadcast %295 : vector<16x1xf32> to vector<16x16xf32>
    %297 = arith.mulf %292, %296 : vector<16x16xf32>
    %cst_162 = arith.constant dense<0.000000e+00> : vector<16x64xf32>
    %298 = tpu.matmul %297, %285, %cst_162 {dimension_numbers = #tpu.dot_dimension_numbers<[1], [0], [0], [1], [0, 0, 1, 1], [], []>} : vector<16x16xf32>, vector<16x64xf32>, vector<16x64xf32> -> vector<16x64xf32>
    %c1_163 = arith.constant 1 : index
    %c0_164 = arith.constant 0 : index
    %c0_165 = arith.constant 0 : index
    %299 = vector.load %arg8[%c1_163, %c0_164, %c0_165] : memref<5x64x32xf32, #tpu.memory_space<vmem>>, vector<1x64x32xf32>
    %300 = vector.shape_cast %299 : vector<1x64x32xf32> to vector<64x32xf32>
    %cst_166 = arith.constant dense<0.000000e+00> : vector<16x32xf32>
    %301 = tpu.matmul %298, %300, %cst_166 {dimension_numbers = #tpu.dot_dimension_numbers<[1], [0], [0], [1], [0, 0, 1, 1], [], []>} : vector<16x64xf32>, vector<64x32xf32>, vector<16x32xf32> -> vector<16x32xf32>
    %c1_167 = arith.constant 1 : index
    %c0_168 = arith.constant 0 : index
    %c0_169 = arith.constant 0 : index
    %302 = vector.load %arg9[%c1_167, %c0_168, %c0_169] : memref<7x1x32xf32, #tpu.memory_space<vmem>>, vector<1x1x32xf32>
    %303 = vector.shape_cast %302 : vector<1x1x32xf32> to vector<1x32xf32>
    %304 = vector.broadcast %303 : vector<1x32xf32> to vector<16x32xf32>
    %305 = arith.addf %301, %304 : vector<16x32xf32>
    %306 = arith.addf %46, %305 : vector<16x32xf32>
    %cst_170 = arith.constant dense<0.000000e+00> : vector<16xf32>
    %307 = vector.multi_reduction <add>, %306, %cst_170 [1] : vector<16x32xf32> to vector<16xf32>
    %308 = vector.shape_cast %307 : vector<16xf32> to vector<16x1xf32>
    %309 = arith.mulf %306, %306 : vector<16x32xf32>
    %cst_171 = arith.constant dense<0.000000e+00> : vector<16xf32>
    %310 = vector.multi_reduction <add>, %309, %cst_171 [1] : vector<16x32xf32> to vector<16xf32>
    %311 = vector.shape_cast %310 : vector<16xf32> to vector<16x1xf32>
    %cst_172 = arith.constant 3.125000e-02 : f32
    %312 = vector.broadcast %cst_172 : f32 to vector<16x1xf32>
    %313 = arith.mulf %308, %312 : vector<16x1xf32>
    %314 = arith.mulf %308, %313 : vector<16x1xf32>
    %315 = arith.subf %311, %314 : vector<16x1xf32>
    %cst_173 = arith.constant 0.0322580636 : f32
    %316 = vector.broadcast %cst_173 : f32 to vector<16x1xf32>
    %317 = arith.mulf %315, %316 : vector<16x1xf32>
    %cst_174 = arith.constant 0.000000e+00 : f32
    %318 = vector.broadcast %cst_174 : f32 to vector<16x1xf32>
    %319 = arith.maximumf %317, %318 : vector<16x1xf32>
    %320 = math.sqrt %319 : vector<16x1xf32>
    %cst_175 = arith.constant 9.99999997E-7 : f32
    %321 = vector.broadcast %cst_175 : f32 to vector<16x1xf32>
    %322 = arith.addf %320, %321 : vector<16x1xf32>
    %323 = vector.broadcast %313 : vector<16x1xf32> to vector<16x32xf32>
    %324 = arith.subf %306, %323 : vector<16x32xf32>
    %325 = vector.broadcast %1 : vector<1x32xf32> to vector<16x32xf32>
    %326 = arith.mulf %325, %324 : vector<16x32xf32>
    %327 = tpu.reciprocal %322 {approx = true} : vector<16x1xf32> -> vector<16x1xf32>
    %328 = vector.broadcast %327 : vector<16x1xf32> to vector<16x32xf32>
    %329 = arith.mulf %326, %328 : vector<16x32xf32>
    %330 = vector.broadcast %3 : vector<1x32xf32> to vector<16x32xf32>
    %331 = arith.addf %329, %330 : vector<16x32xf32>
    %c6_176 = arith.constant 6 : index
    %c0_177 = arith.constant 0 : index
    %c0_178 = arith.constant 0 : index
    %332 = vector.load %arg6[%c6_176, %c0_177, %c0_178] : memref<11x32x64xf32, #tpu.memory_space<vmem>>, vector<1x32x64xf32>
    %333 = vector.shape_cast %332 : vector<1x32x64xf32> to vector<32x64xf32>
    %cst_179 = arith.constant dense<0.000000e+00> : vector<16x64xf32>
    %334 = tpu.matmul %331, %333, %cst_179 {dimension_numbers = #tpu.dot_dimension_numbers<[1], [0], [0], [1], [0, 0, 1, 1], [], []>} : vector<16x32xf32>, vector<32x64xf32>, vector<16x64xf32> -> vector<16x64xf32>
    %c6_180 = arith.constant 6 : index
    %c0_181 = arith.constant 0 : index
    %c0_182 = arith.constant 0 : index
    %335 = vector.load %arg7[%c6_180, %c0_181, %c0_182] : memref<11x1x64xf32, #tpu.memory_space<vmem>>, vector<1x1x64xf32>
    %336 = vector.shape_cast %335 : vector<1x1x64xf32> to vector<1x64xf32>
    %337 = vector.broadcast %336 : vector<1x64xf32> to vector<16x64xf32>
    %338 = arith.addf %334, %337 : vector<16x64xf32>
    %c7 = arith.constant 7 : index
    %c0_183 = arith.constant 0 : index
    %c0_184 = arith.constant 0 : index
    %339 = vector.load %arg6[%c7, %c0_183, %c0_184] : memref<11x32x64xf32, #tpu.memory_space<vmem>>, vector<1x32x64xf32>
    %340 = vector.shape_cast %339 : vector<1x32x64xf32> to vector<32x64xf32>
    %cst_185 = arith.constant dense<0.000000e+00> : vector<16x64xf32>
    %341 = tpu.matmul %264, %340, %cst_185 {dimension_numbers = #tpu.dot_dimension_numbers<[1], [0], [0], [1], [0, 0, 1, 1], [], []>} : vector<16x32xf32>, vector<32x64xf32>, vector<16x64xf32> -> vector<16x64xf32>
    %c7_186 = arith.constant 7 : index
    %c0_187 = arith.constant 0 : index
    %c0_188 = arith.constant 0 : index
    %342 = vector.load %arg7[%c7_186, %c0_187, %c0_188] : memref<11x1x64xf32, #tpu.memory_space<vmem>>, vector<1x1x64xf32>
    %343 = vector.shape_cast %342 : vector<1x1x64xf32> to vector<1x64xf32>
    %344 = vector.broadcast %343 : vector<1x64xf32> to vector<16x64xf32>
    %345 = arith.addf %341, %344 : vector<16x64xf32>
    %c8 = arith.constant 8 : index
    %c0_189 = arith.constant 0 : index
    %c0_190 = arith.constant 0 : index
    %346 = vector.load %arg6[%c8, %c0_189, %c0_190] : memref<11x32x64xf32, #tpu.memory_space<vmem>>, vector<1x32x64xf32>
    %347 = vector.shape_cast %346 : vector<1x32x64xf32> to vector<32x64xf32>
    %cst_191 = arith.constant dense<0.000000e+00> : vector<16x64xf32>
    %348 = tpu.matmul %264, %347, %cst_191 {dimension_numbers = #tpu.dot_dimension_numbers<[1], [0], [0], [1], [0, 0, 1, 1], [], []>} : vector<16x32xf32>, vector<32x64xf32>, vector<16x64xf32> -> vector<16x64xf32>
    %c8_192 = arith.constant 8 : index
    %c0_193 = arith.constant 0 : index
    %c0_194 = arith.constant 0 : index
    %349 = vector.load %arg7[%c8_192, %c0_193, %c0_194] : memref<11x1x64xf32, #tpu.memory_space<vmem>>, vector<1x1x64xf32>
    %350 = vector.shape_cast %349 : vector<1x1x64xf32> to vector<1x64xf32>
    %351 = vector.broadcast %350 : vector<1x64xf32> to vector<16x64xf32>
    %352 = arith.addf %348, %351 : vector<16x64xf32>
    %cst_195 = arith.constant dense<0.000000e+00> : vector<16x16xf32>
    %353 = tpu.matmul %338, %345, %cst_195 {dimension_numbers = #tpu.dot_dimension_numbers<[1], [1], [0], [0], [0, 0, 1, 0], [], []>} : vector<16x64xf32>, vector<16x64xf32>, vector<16x16xf32> -> vector<16x16xf32>
    %354 = arith.addf %353, %14 : vector<16x16xf32>
    %cst_196 = arith.constant dense<0xFF800000> : vector<16xf32>
    %355 = vector.multi_reduction <maximumf>, %354, %cst_196 [1] : vector<16x16xf32> to vector<16xf32>
    %356 = vector.shape_cast %355 : vector<16xf32> to vector<16x1xf32>
    %357 = vector.broadcast %356 : vector<16x1xf32> to vector<16x16xf32>
    %358 = arith.subf %354, %357 : vector<16x16xf32>
    %359 = math.exp %358 : vector<16x16xf32>
    %cst_197 = arith.constant dense<0.000000e+00> : vector<16xf32>
    %360 = vector.multi_reduction <add>, %359, %cst_197 [1] : vector<16x16xf32> to vector<16xf32>
    %361 = vector.shape_cast %360 : vector<16xf32> to vector<16x1xf32>
    %362 = tpu.reciprocal %361 {approx = true} : vector<16x1xf32> -> vector<16x1xf32>
    %363 = vector.broadcast %362 : vector<16x1xf32> to vector<16x16xf32>
    %364 = arith.mulf %359, %363 : vector<16x16xf32>
    %cst_198 = arith.constant dense<0.000000e+00> : vector<16x64xf32>
    %365 = tpu.matmul %364, %352, %cst_198 {dimension_numbers = #tpu.dot_dimension_numbers<[1], [0], [0], [1], [0, 0, 1, 1], [], []>} : vector<16x16xf32>, vector<16x64xf32>, vector<16x64xf32> -> vector<16x64xf32>
    %c2_199 = arith.constant 2 : index
    %c0_200 = arith.constant 0 : index
    %c0_201 = arith.constant 0 : index
    %366 = vector.load %arg8[%c2_199, %c0_200, %c0_201] : memref<5x64x32xf32, #tpu.memory_space<vmem>>, vector<1x64x32xf32>
    %367 = vector.shape_cast %366 : vector<1x64x32xf32> to vector<64x32xf32>
    %cst_202 = arith.constant dense<0.000000e+00> : vector<16x32xf32>
    %368 = tpu.matmul %365, %367, %cst_202 {dimension_numbers = #tpu.dot_dimension_numbers<[1], [0], [0], [1], [0, 0, 1, 1], [], []>} : vector<16x64xf32>, vector<64x32xf32>, vector<16x32xf32> -> vector<16x32xf32>
    %c2_203 = arith.constant 2 : index
    %c0_204 = arith.constant 0 : index
    %c0_205 = arith.constant 0 : index
    %369 = vector.load %arg9[%c2_203, %c0_204, %c0_205] : memref<7x1x32xf32, #tpu.memory_space<vmem>>, vector<1x1x32xf32>
    %370 = vector.shape_cast %369 : vector<1x1x32xf32> to vector<1x32xf32>
    %371 = vector.broadcast %370 : vector<1x32xf32> to vector<16x32xf32>
    %372 = arith.addf %368, %371 : vector<16x32xf32>
    %373 = arith.addf %331, %372 : vector<16x32xf32>
    %cst_206 = arith.constant dense<0.000000e+00> : vector<16xf32>
    %374 = vector.multi_reduction <add>, %373, %cst_206 [1] : vector<16x32xf32> to vector<16xf32>
    %375 = vector.shape_cast %374 : vector<16xf32> to vector<16x1xf32>
    %376 = arith.mulf %373, %373 : vector<16x32xf32>
    %cst_207 = arith.constant dense<0.000000e+00> : vector<16xf32>
    %377 = vector.multi_reduction <add>, %376, %cst_207 [1] : vector<16x32xf32> to vector<16xf32>
    %378 = vector.shape_cast %377 : vector<16xf32> to vector<16x1xf32>
    %cst_208 = arith.constant 3.125000e-02 : f32
    %379 = vector.broadcast %cst_208 : f32 to vector<16x1xf32>
    %380 = arith.mulf %375, %379 : vector<16x1xf32>
    %381 = arith.mulf %375, %380 : vector<16x1xf32>
    %382 = arith.subf %378, %381 : vector<16x1xf32>
    %cst_209 = arith.constant 0.0322580636 : f32
    %383 = vector.broadcast %cst_209 : f32 to vector<16x1xf32>
    %384 = arith.mulf %382, %383 : vector<16x1xf32>
    %cst_210 = arith.constant 0.000000e+00 : f32
    %385 = vector.broadcast %cst_210 : f32 to vector<16x1xf32>
    %386 = arith.maximumf %384, %385 : vector<16x1xf32>
    %387 = math.sqrt %386 : vector<16x1xf32>
    %cst_211 = arith.constant 9.99999997E-7 : f32
    %388 = vector.broadcast %cst_211 : f32 to vector<16x1xf32>
    %389 = arith.addf %387, %388 : vector<16x1xf32>
    %390 = vector.broadcast %380 : vector<16x1xf32> to vector<16x32xf32>
    %391 = arith.subf %373, %390 : vector<16x32xf32>
    %392 = vector.broadcast %1 : vector<1x32xf32> to vector<16x32xf32>
    %393 = arith.mulf %392, %391 : vector<16x32xf32>
    %394 = tpu.reciprocal %389 {approx = true} : vector<16x1xf32> -> vector<16x1xf32>
    %395 = vector.broadcast %394 : vector<16x1xf32> to vector<16x32xf32>
    %396 = arith.mulf %393, %395 : vector<16x32xf32>
    %397 = vector.broadcast %3 : vector<1x32xf32> to vector<16x32xf32>
    %398 = arith.addf %396, %397 : vector<16x32xf32>
    %c10 = arith.constant 10 : index
    %c0_212 = arith.constant 0 : index
    %c0_213 = arith.constant 0 : index
    %399 = vector.load %arg6[%c10, %c0_212, %c0_213] : memref<11x32x64xf32, #tpu.memory_space<vmem>>, vector<1x32x64xf32>
    %400 = vector.shape_cast %399 : vector<1x32x64xf32> to vector<32x64xf32>
    %cst_214 = arith.constant dense<0.000000e+00> : vector<16x64xf32>
    %401 = tpu.matmul %398, %400, %cst_214 {dimension_numbers = #tpu.dot_dimension_numbers<[1], [0], [0], [1], [0, 0, 1, 1], [], []>} : vector<16x32xf32>, vector<32x64xf32>, vector<16x64xf32> -> vector<16x64xf32>
    %c10_215 = arith.constant 10 : index
    %c0_216 = arith.constant 0 : index
    %c0_217 = arith.constant 0 : index
    %402 = vector.load %arg7[%c10_215, %c0_216, %c0_217] : memref<11x1x64xf32, #tpu.memory_space<vmem>>, vector<1x1x64xf32>
    %403 = vector.shape_cast %402 : vector<1x1x64xf32> to vector<1x64xf32>
    %404 = vector.broadcast %403 : vector<1x64xf32> to vector<16x64xf32>
    %405 = arith.addf %401, %404 : vector<16x64xf32>
    %cst_218 = arith.constant 0.000000e+00 : f32
    %406 = vector.broadcast %cst_218 : f32 to vector<16x64xf32>
    %407 = arith.maximumf %405, %406 : vector<16x64xf32>
    %c4_219 = arith.constant 4 : index
    %c0_220 = arith.constant 0 : index
    %c0_221 = arith.constant 0 : index
    %408 = vector.load %arg8[%c4_219, %c0_220, %c0_221] : memref<5x64x32xf32, #tpu.memory_space<vmem>>, vector<1x64x32xf32>
    %409 = vector.shape_cast %408 : vector<1x64x32xf32> to vector<64x32xf32>
    %cst_222 = arith.constant dense<0.000000e+00> : vector<16x32xf32>
    %410 = tpu.matmul %407, %409, %cst_222 {dimension_numbers = #tpu.dot_dimension_numbers<[1], [0], [0], [1], [0, 0, 1, 1], [], []>} : vector<16x64xf32>, vector<64x32xf32>, vector<16x32xf32> -> vector<16x32xf32>
    %c4_223 = arith.constant 4 : index
    %c0_224 = arith.constant 0 : index
    %c0_225 = arith.constant 0 : index
    %411 = vector.load %arg9[%c4_223, %c0_224, %c0_225] : memref<7x1x32xf32, #tpu.memory_space<vmem>>, vector<1x1x32xf32>
    %412 = vector.shape_cast %411 : vector<1x1x32xf32> to vector<1x32xf32>
    %413 = vector.broadcast %412 : vector<1x32xf32> to vector<16x32xf32>
    %414 = arith.addf %410, %413 : vector<16x32xf32>
    %415 = arith.addf %398, %414 : vector<16x32xf32>
    %cst_226 = arith.constant dense<0.000000e+00> : vector<16xf32>
    %416 = vector.multi_reduction <add>, %415, %cst_226 [1] : vector<16x32xf32> to vector<16xf32>
    %417 = vector.shape_cast %416 : vector<16xf32> to vector<16x1xf32>
    %418 = arith.mulf %415, %415 : vector<16x32xf32>
    %cst_227 = arith.constant dense<0.000000e+00> : vector<16xf32>
    %419 = vector.multi_reduction <add>, %418, %cst_227 [1] : vector<16x32xf32> to vector<16xf32>
    %420 = vector.shape_cast %419 : vector<16xf32> to vector<16x1xf32>
    %cst_228 = arith.constant 3.125000e-02 : f32
    %421 = vector.broadcast %cst_228 : f32 to vector<16x1xf32>
    %422 = arith.mulf %417, %421 : vector<16x1xf32>
    %423 = arith.mulf %417, %422 : vector<16x1xf32>
    %424 = arith.subf %420, %423 : vector<16x1xf32>
    %cst_229 = arith.constant 0.0322580636 : f32
    %425 = vector.broadcast %cst_229 : f32 to vector<16x1xf32>
    %426 = arith.mulf %424, %425 : vector<16x1xf32>
    %cst_230 = arith.constant 0.000000e+00 : f32
    %427 = vector.broadcast %cst_230 : f32 to vector<16x1xf32>
    %428 = arith.maximumf %426, %427 : vector<16x1xf32>
    %429 = math.sqrt %428 : vector<16x1xf32>
    %cst_231 = arith.constant 9.99999997E-7 : f32
    %430 = vector.broadcast %cst_231 : f32 to vector<16x1xf32>
    %431 = arith.addf %429, %430 : vector<16x1xf32>
    %432 = vector.broadcast %422 : vector<16x1xf32> to vector<16x32xf32>
    %433 = arith.subf %415, %432 : vector<16x32xf32>
    %434 = vector.broadcast %1 : vector<1x32xf32> to vector<16x32xf32>
    %435 = arith.mulf %434, %433 : vector<16x32xf32>
    %436 = tpu.reciprocal %431 {approx = true} : vector<16x1xf32> -> vector<16x1xf32>
    %437 = vector.broadcast %436 : vector<16x1xf32> to vector<16x32xf32>
    %438 = arith.mulf %435, %437 : vector<16x32xf32>
    %439 = vector.broadcast %3 : vector<1x32xf32> to vector<16x32xf32>
    %440 = arith.addf %438, %439 : vector<16x32xf32>
    %c3_232 = arith.constant 3 : index
    %c0_233 = arith.constant 0 : index
    %c0_234 = arith.constant 0 : index
    %441 = vector.load %arg6[%c3_232, %c0_233, %c0_234] : memref<11x32x64xf32, #tpu.memory_space<vmem>>, vector<1x32x64xf32>
    %442 = vector.shape_cast %441 : vector<1x32x64xf32> to vector<32x64xf32>
    %cst_235 = arith.constant dense<0.000000e+00> : vector<16x64xf32>
    %443 = tpu.matmul %440, %442, %cst_235 {dimension_numbers = #tpu.dot_dimension_numbers<[1], [0], [0], [1], [0, 0, 1, 1], [], []>} : vector<16x32xf32>, vector<32x64xf32>, vector<16x64xf32> -> vector<16x64xf32>
    %c3_236 = arith.constant 3 : index
    %c0_237 = arith.constant 0 : index
    %c0_238 = arith.constant 0 : index
    %444 = vector.load %arg7[%c3_236, %c0_237, %c0_238] : memref<11x1x64xf32, #tpu.memory_space<vmem>>, vector<1x1x64xf32>
    %445 = vector.shape_cast %444 : vector<1x1x64xf32> to vector<1x64xf32>
    %446 = vector.broadcast %445 : vector<1x64xf32> to vector<16x64xf32>
    %447 = arith.addf %443, %446 : vector<16x64xf32>
    %c4_239 = arith.constant 4 : index
    %c0_240 = arith.constant 0 : index
    %c0_241 = arith.constant 0 : index
    %448 = vector.load %arg6[%c4_239, %c0_240, %c0_241] : memref<11x32x64xf32, #tpu.memory_space<vmem>>, vector<1x32x64xf32>
    %449 = vector.shape_cast %448 : vector<1x32x64xf32> to vector<32x64xf32>
    %cst_242 = arith.constant dense<0.000000e+00> : vector<16x64xf32>
    %450 = tpu.matmul %440, %449, %cst_242 {dimension_numbers = #tpu.dot_dimension_numbers<[1], [0], [0], [1], [0, 0, 1, 1], [], []>} : vector<16x32xf32>, vector<32x64xf32>, vector<16x64xf32> -> vector<16x64xf32>
    %c4_243 = arith.constant 4 : index
    %c0_244 = arith.constant 0 : index
    %c0_245 = arith.constant 0 : index
    %451 = vector.load %arg7[%c4_243, %c0_244, %c0_245] : memref<11x1x64xf32, #tpu.memory_space<vmem>>, vector<1x1x64xf32>
    %452 = vector.shape_cast %451 : vector<1x1x64xf32> to vector<1x64xf32>
    %453 = vector.broadcast %452 : vector<1x64xf32> to vector<16x64xf32>
    %454 = arith.addf %450, %453 : vector<16x64xf32>
    %c5_246 = arith.constant 5 : index
    %c0_247 = arith.constant 0 : index
    %c0_248 = arith.constant 0 : index
    %455 = vector.load %arg6[%c5_246, %c0_247, %c0_248] : memref<11x32x64xf32, #tpu.memory_space<vmem>>, vector<1x32x64xf32>
    %456 = vector.shape_cast %455 : vector<1x32x64xf32> to vector<32x64xf32>
    %cst_249 = arith.constant dense<0.000000e+00> : vector<16x64xf32>
    %457 = tpu.matmul %440, %456, %cst_249 {dimension_numbers = #tpu.dot_dimension_numbers<[1], [0], [0], [1], [0, 0, 1, 1], [], []>} : vector<16x32xf32>, vector<32x64xf32>, vector<16x64xf32> -> vector<16x64xf32>
    %c5_250 = arith.constant 5 : index
    %c0_251 = arith.constant 0 : index
    %c0_252 = arith.constant 0 : index
    %458 = vector.load %arg7[%c5_250, %c0_251, %c0_252] : memref<11x1x64xf32, #tpu.memory_space<vmem>>, vector<1x1x64xf32>
    %459 = vector.shape_cast %458 : vector<1x1x64xf32> to vector<1x64xf32>
    %460 = vector.broadcast %459 : vector<1x64xf32> to vector<16x64xf32>
    %461 = arith.addf %457, %460 : vector<16x64xf32>
    %cst_253 = arith.constant dense<0.000000e+00> : vector<16x16xf32>
    %462 = tpu.matmul %447, %454, %cst_253 {dimension_numbers = #tpu.dot_dimension_numbers<[1], [1], [0], [0], [0, 0, 1, 0], [], []>} : vector<16x64xf32>, vector<16x64xf32>, vector<16x16xf32> -> vector<16x16xf32>
    %463 = arith.addf %462, %22 : vector<16x16xf32>
    %cst_254 = arith.constant dense<0xFF800000> : vector<16xf32>
    %464 = vector.multi_reduction <maximumf>, %463, %cst_254 [1] : vector<16x16xf32> to vector<16xf32>
    %465 = vector.shape_cast %464 : vector<16xf32> to vector<16x1xf32>
    %466 = vector.broadcast %465 : vector<16x1xf32> to vector<16x16xf32>
    %467 = arith.subf %463, %466 : vector<16x16xf32>
    %468 = math.exp %467 : vector<16x16xf32>
    %cst_255 = arith.constant dense<0.000000e+00> : vector<16xf32>
    %469 = vector.multi_reduction <add>, %468, %cst_255 [1] : vector<16x16xf32> to vector<16xf32>
    %470 = vector.shape_cast %469 : vector<16xf32> to vector<16x1xf32>
    %471 = tpu.reciprocal %470 {approx = true} : vector<16x1xf32> -> vector<16x1xf32>
    %472 = vector.broadcast %471 : vector<16x1xf32> to vector<16x16xf32>
    %473 = arith.mulf %468, %472 : vector<16x16xf32>
    %cst_256 = arith.constant dense<0.000000e+00> : vector<16x64xf32>
    %474 = tpu.matmul %473, %461, %cst_256 {dimension_numbers = #tpu.dot_dimension_numbers<[1], [0], [0], [1], [0, 0, 1, 1], [], []>} : vector<16x16xf32>, vector<16x64xf32>, vector<16x64xf32> -> vector<16x64xf32>
    %c1_257 = arith.constant 1 : index
    %c0_258 = arith.constant 0 : index
    %c0_259 = arith.constant 0 : index
    %475 = vector.load %arg8[%c1_257, %c0_258, %c0_259] : memref<5x64x32xf32, #tpu.memory_space<vmem>>, vector<1x64x32xf32>
    %476 = vector.shape_cast %475 : vector<1x64x32xf32> to vector<64x32xf32>
    %cst_260 = arith.constant dense<0.000000e+00> : vector<16x32xf32>
    %477 = tpu.matmul %474, %476, %cst_260 {dimension_numbers = #tpu.dot_dimension_numbers<[1], [0], [0], [1], [0, 0, 1, 1], [], []>} : vector<16x64xf32>, vector<64x32xf32>, vector<16x32xf32> -> vector<16x32xf32>
    %c1_261 = arith.constant 1 : index
    %c0_262 = arith.constant 0 : index
    %c0_263 = arith.constant 0 : index
    %478 = vector.load %arg9[%c1_261, %c0_262, %c0_263] : memref<7x1x32xf32, #tpu.memory_space<vmem>>, vector<1x1x32xf32>
    %479 = vector.shape_cast %478 : vector<1x1x32xf32> to vector<1x32xf32>
    %480 = vector.broadcast %479 : vector<1x32xf32> to vector<16x32xf32>
    %481 = arith.addf %477, %480 : vector<16x32xf32>
    %482 = arith.addf %440, %481 : vector<16x32xf32>
    %cst_264 = arith.constant dense<0.000000e+00> : vector<16xf32>
    %483 = vector.multi_reduction <add>, %482, %cst_264 [1] : vector<16x32xf32> to vector<16xf32>
    %484 = vector.shape_cast %483 : vector<16xf32> to vector<16x1xf32>
    %485 = arith.mulf %482, %482 : vector<16x32xf32>
    %cst_265 = arith.constant dense<0.000000e+00> : vector<16xf32>
    %486 = vector.multi_reduction <add>, %485, %cst_265 [1] : vector<16x32xf32> to vector<16xf32>
    %487 = vector.shape_cast %486 : vector<16xf32> to vector<16x1xf32>
    %cst_266 = arith.constant 3.125000e-02 : f32
    %488 = vector.broadcast %cst_266 : f32 to vector<16x1xf32>
    %489 = arith.mulf %484, %488 : vector<16x1xf32>
    %490 = arith.mulf %484, %489 : vector<16x1xf32>
    %491 = arith.subf %487, %490 : vector<16x1xf32>
    %cst_267 = arith.constant 0.0322580636 : f32
    %492 = vector.broadcast %cst_267 : f32 to vector<16x1xf32>
    %493 = arith.mulf %491, %492 : vector<16x1xf32>
    %cst_268 = arith.constant 0.000000e+00 : f32
    %494 = vector.broadcast %cst_268 : f32 to vector<16x1xf32>
    %495 = arith.maximumf %493, %494 : vector<16x1xf32>
    %496 = math.sqrt %495 : vector<16x1xf32>
    %cst_269 = arith.constant 9.99999997E-7 : f32
    %497 = vector.broadcast %cst_269 : f32 to vector<16x1xf32>
    %498 = arith.addf %496, %497 : vector<16x1xf32>
    %499 = vector.broadcast %489 : vector<16x1xf32> to vector<16x32xf32>
    %500 = arith.subf %482, %499 : vector<16x32xf32>
    %501 = vector.broadcast %1 : vector<1x32xf32> to vector<16x32xf32>
    %502 = arith.mulf %501, %500 : vector<16x32xf32>
    %503 = tpu.reciprocal %498 {approx = true} : vector<16x1xf32> -> vector<16x1xf32>
    %504 = vector.broadcast %503 : vector<16x1xf32> to vector<16x32xf32>
    %505 = arith.mulf %502, %504 : vector<16x32xf32>
    %506 = vector.broadcast %3 : vector<1x32xf32> to vector<16x32xf32>
    %507 = arith.addf %505, %506 : vector<16x32xf32>
    %c6_270 = arith.constant 6 : index
    %c0_271 = arith.constant 0 : index
    %c0_272 = arith.constant 0 : index
    %508 = vector.load %arg6[%c6_270, %c0_271, %c0_272] : memref<11x32x64xf32, #tpu.memory_space<vmem>>, vector<1x32x64xf32>
    %509 = vector.shape_cast %508 : vector<1x32x64xf32> to vector<32x64xf32>
    %cst_273 = arith.constant dense<0.000000e+00> : vector<16x64xf32>
    %510 = tpu.matmul %507, %509, %cst_273 {dimension_numbers = #tpu.dot_dimension_numbers<[1], [0], [0], [1], [0, 0, 1, 1], [], []>} : vector<16x32xf32>, vector<32x64xf32>, vector<16x64xf32> -> vector<16x64xf32>
    %c6_274 = arith.constant 6 : index
    %c0_275 = arith.constant 0 : index
    %c0_276 = arith.constant 0 : index
    %511 = vector.load %arg7[%c6_274, %c0_275, %c0_276] : memref<11x1x64xf32, #tpu.memory_space<vmem>>, vector<1x1x64xf32>
    %512 = vector.shape_cast %511 : vector<1x1x64xf32> to vector<1x64xf32>
    %513 = vector.broadcast %512 : vector<1x64xf32> to vector<16x64xf32>
    %514 = arith.addf %510, %513 : vector<16x64xf32>
    %c7_277 = arith.constant 7 : index
    %c0_278 = arith.constant 0 : index
    %c0_279 = arith.constant 0 : index
    %515 = vector.load %arg6[%c7_277, %c0_278, %c0_279] : memref<11x32x64xf32, #tpu.memory_space<vmem>>, vector<1x32x64xf32>
    %516 = vector.shape_cast %515 : vector<1x32x64xf32> to vector<32x64xf32>
    %cst_280 = arith.constant dense<0.000000e+00> : vector<16x64xf32>
    %517 = tpu.matmul %264, %516, %cst_280 {dimension_numbers = #tpu.dot_dimension_numbers<[1], [0], [0], [1], [0, 0, 1, 1], [], []>} : vector<16x32xf32>, vector<32x64xf32>, vector<16x64xf32> -> vector<16x64xf32>
    %c7_281 = arith.constant 7 : index
    %c0_282 = arith.constant 0 : index
    %c0_283 = arith.constant 0 : index
    %518 = vector.load %arg7[%c7_281, %c0_282, %c0_283] : memref<11x1x64xf32, #tpu.memory_space<vmem>>, vector<1x1x64xf32>
    %519 = vector.shape_cast %518 : vector<1x1x64xf32> to vector<1x64xf32>
    %520 = vector.broadcast %519 : vector<1x64xf32> to vector<16x64xf32>
    %521 = arith.addf %517, %520 : vector<16x64xf32>
    %c8_284 = arith.constant 8 : index
    %c0_285 = arith.constant 0 : index
    %c0_286 = arith.constant 0 : index
    %522 = vector.load %arg6[%c8_284, %c0_285, %c0_286] : memref<11x32x64xf32, #tpu.memory_space<vmem>>, vector<1x32x64xf32>
    %523 = vector.shape_cast %522 : vector<1x32x64xf32> to vector<32x64xf32>
    %cst_287 = arith.constant dense<0.000000e+00> : vector<16x64xf32>
    %524 = tpu.matmul %264, %523, %cst_287 {dimension_numbers = #tpu.dot_dimension_numbers<[1], [0], [0], [1], [0, 0, 1, 1], [], []>} : vector<16x32xf32>, vector<32x64xf32>, vector<16x64xf32> -> vector<16x64xf32>
    %c8_288 = arith.constant 8 : index
    %c0_289 = arith.constant 0 : index
    %c0_290 = arith.constant 0 : index
    %525 = vector.load %arg7[%c8_288, %c0_289, %c0_290] : memref<11x1x64xf32, #tpu.memory_space<vmem>>, vector<1x1x64xf32>
    %526 = vector.shape_cast %525 : vector<1x1x64xf32> to vector<1x64xf32>
    %527 = vector.broadcast %526 : vector<1x64xf32> to vector<16x64xf32>
    %528 = arith.addf %524, %527 : vector<16x64xf32>
    %cst_291 = arith.constant dense<0.000000e+00> : vector<16x16xf32>
    %529 = tpu.matmul %514, %521, %cst_291 {dimension_numbers = #tpu.dot_dimension_numbers<[1], [1], [0], [0], [0, 0, 1, 0], [], []>} : vector<16x64xf32>, vector<16x64xf32>, vector<16x16xf32> -> vector<16x16xf32>
    %530 = arith.addf %529, %14 : vector<16x16xf32>
    %cst_292 = arith.constant dense<0xFF800000> : vector<16xf32>
    %531 = vector.multi_reduction <maximumf>, %530, %cst_292 [1] : vector<16x16xf32> to vector<16xf32>
    %532 = vector.shape_cast %531 : vector<16xf32> to vector<16x1xf32>
    %533 = vector.broadcast %532 : vector<16x1xf32> to vector<16x16xf32>
    %534 = arith.subf %530, %533 : vector<16x16xf32>
    %535 = math.exp %534 : vector<16x16xf32>
    %cst_293 = arith.constant dense<0.000000e+00> : vector<16xf32>
    %536 = vector.multi_reduction <add>, %535, %cst_293 [1] : vector<16x16xf32> to vector<16xf32>
    %537 = vector.shape_cast %536 : vector<16xf32> to vector<16x1xf32>
    %538 = tpu.reciprocal %537 {approx = true} : vector<16x1xf32> -> vector<16x1xf32>
    %539 = vector.broadcast %538 : vector<16x1xf32> to vector<16x16xf32>
    %540 = arith.mulf %535, %539 : vector<16x16xf32>
    %cst_294 = arith.constant dense<0.000000e+00> : vector<16x64xf32>
    %541 = tpu.matmul %540, %528, %cst_294 {dimension_numbers = #tpu.dot_dimension_numbers<[1], [0], [0], [1], [0, 0, 1, 1], [], []>} : vector<16x16xf32>, vector<16x64xf32>, vector<16x64xf32> -> vector<16x64xf32>
    %c2_295 = arith.constant 2 : index
    %c0_296 = arith.constant 0 : index
    %c0_297 = arith.constant 0 : index
    %542 = vector.load %arg8[%c2_295, %c0_296, %c0_297] : memref<5x64x32xf32, #tpu.memory_space<vmem>>, vector<1x64x32xf32>
    %543 = vector.shape_cast %542 : vector<1x64x32xf32> to vector<64x32xf32>
    %cst_298 = arith.constant dense<0.000000e+00> : vector<16x32xf32>
    %544 = tpu.matmul %541, %543, %cst_298 {dimension_numbers = #tpu.dot_dimension_numbers<[1], [0], [0], [1], [0, 0, 1, 1], [], []>} : vector<16x64xf32>, vector<64x32xf32>, vector<16x32xf32> -> vector<16x32xf32>
    %c2_299 = arith.constant 2 : index
    %c0_300 = arith.constant 0 : index
    %c0_301 = arith.constant 0 : index
    %545 = vector.load %arg9[%c2_299, %c0_300, %c0_301] : memref<7x1x32xf32, #tpu.memory_space<vmem>>, vector<1x1x32xf32>
    %546 = vector.shape_cast %545 : vector<1x1x32xf32> to vector<1x32xf32>
    %547 = vector.broadcast %546 : vector<1x32xf32> to vector<16x32xf32>
    %548 = arith.addf %544, %547 : vector<16x32xf32>
    %549 = arith.addf %507, %548 : vector<16x32xf32>
    %cst_302 = arith.constant dense<0.000000e+00> : vector<16xf32>
    %550 = vector.multi_reduction <add>, %549, %cst_302 [1] : vector<16x32xf32> to vector<16xf32>
    %551 = vector.shape_cast %550 : vector<16xf32> to vector<16x1xf32>
    %552 = arith.mulf %549, %549 : vector<16x32xf32>
    %cst_303 = arith.constant dense<0.000000e+00> : vector<16xf32>
    %553 = vector.multi_reduction <add>, %552, %cst_303 [1] : vector<16x32xf32> to vector<16xf32>
    %554 = vector.shape_cast %553 : vector<16xf32> to vector<16x1xf32>
    %cst_304 = arith.constant 3.125000e-02 : f32
    %555 = vector.broadcast %cst_304 : f32 to vector<16x1xf32>
    %556 = arith.mulf %551, %555 : vector<16x1xf32>
    %557 = arith.mulf %551, %556 : vector<16x1xf32>
    %558 = arith.subf %554, %557 : vector<16x1xf32>
    %cst_305 = arith.constant 0.0322580636 : f32
    %559 = vector.broadcast %cst_305 : f32 to vector<16x1xf32>
    %560 = arith.mulf %558, %559 : vector<16x1xf32>
    %cst_306 = arith.constant 0.000000e+00 : f32
    %561 = vector.broadcast %cst_306 : f32 to vector<16x1xf32>
    %562 = arith.maximumf %560, %561 : vector<16x1xf32>
    %563 = math.sqrt %562 : vector<16x1xf32>
    %cst_307 = arith.constant 9.99999997E-7 : f32
    %564 = vector.broadcast %cst_307 : f32 to vector<16x1xf32>
    %565 = arith.addf %563, %564 : vector<16x1xf32>
    %566 = vector.broadcast %556 : vector<16x1xf32> to vector<16x32xf32>
    %567 = arith.subf %549, %566 : vector<16x32xf32>
    %568 = vector.broadcast %1 : vector<1x32xf32> to vector<16x32xf32>
    %569 = arith.mulf %568, %567 : vector<16x32xf32>
    %570 = tpu.reciprocal %565 {approx = true} : vector<16x1xf32> -> vector<16x1xf32>
    %571 = vector.broadcast %570 : vector<16x1xf32> to vector<16x32xf32>
    %572 = arith.mulf %569, %571 : vector<16x32xf32>
    %573 = vector.broadcast %3 : vector<1x32xf32> to vector<16x32xf32>
    %574 = arith.addf %572, %573 : vector<16x32xf32>
    %c10_308 = arith.constant 10 : index
    %c0_309 = arith.constant 0 : index
    %c0_310 = arith.constant 0 : index
    %575 = vector.load %arg6[%c10_308, %c0_309, %c0_310] : memref<11x32x64xf32, #tpu.memory_space<vmem>>, vector<1x32x64xf32>
    %576 = vector.shape_cast %575 : vector<1x32x64xf32> to vector<32x64xf32>
    %cst_311 = arith.constant dense<0.000000e+00> : vector<16x64xf32>
    %577 = tpu.matmul %574, %576, %cst_311 {dimension_numbers = #tpu.dot_dimension_numbers<[1], [0], [0], [1], [0, 0, 1, 1], [], []>} : vector<16x32xf32>, vector<32x64xf32>, vector<16x64xf32> -> vector<16x64xf32>
    %c10_312 = arith.constant 10 : index
    %c0_313 = arith.constant 0 : index
    %c0_314 = arith.constant 0 : index
    %578 = vector.load %arg7[%c10_312, %c0_313, %c0_314] : memref<11x1x64xf32, #tpu.memory_space<vmem>>, vector<1x1x64xf32>
    %579 = vector.shape_cast %578 : vector<1x1x64xf32> to vector<1x64xf32>
    %580 = vector.broadcast %579 : vector<1x64xf32> to vector<16x64xf32>
    %581 = arith.addf %577, %580 : vector<16x64xf32>
    %cst_315 = arith.constant 0.000000e+00 : f32
    %582 = vector.broadcast %cst_315 : f32 to vector<16x64xf32>
    %583 = arith.maximumf %581, %582 : vector<16x64xf32>
    %c4_316 = arith.constant 4 : index
    %c0_317 = arith.constant 0 : index
    %c0_318 = arith.constant 0 : index
    %584 = vector.load %arg8[%c4_316, %c0_317, %c0_318] : memref<5x64x32xf32, #tpu.memory_space<vmem>>, vector<1x64x32xf32>
    %585 = vector.shape_cast %584 : vector<1x64x32xf32> to vector<64x32xf32>
    %cst_319 = arith.constant dense<0.000000e+00> : vector<16x32xf32>
    %586 = tpu.matmul %583, %585, %cst_319 {dimension_numbers = #tpu.dot_dimension_numbers<[1], [0], [0], [1], [0, 0, 1, 1], [], []>} : vector<16x64xf32>, vector<64x32xf32>, vector<16x32xf32> -> vector<16x32xf32>
    %c4_320 = arith.constant 4 : index
    %c0_321 = arith.constant 0 : index
    %c0_322 = arith.constant 0 : index
    %587 = vector.load %arg9[%c4_320, %c0_321, %c0_322] : memref<7x1x32xf32, #tpu.memory_space<vmem>>, vector<1x1x32xf32>
    %588 = vector.shape_cast %587 : vector<1x1x32xf32> to vector<1x32xf32>
    %589 = vector.broadcast %588 : vector<1x32xf32> to vector<16x32xf32>
    %590 = arith.addf %586, %589 : vector<16x32xf32>
    %591 = arith.addf %574, %590 : vector<16x32xf32>
    %cst_323 = arith.constant dense<0.000000e+00> : vector<16xf32>
    %592 = vector.multi_reduction <add>, %591, %cst_323 [1] : vector<16x32xf32> to vector<16xf32>
    %593 = vector.shape_cast %592 : vector<16xf32> to vector<16x1xf32>
    %594 = arith.mulf %591, %591 : vector<16x32xf32>
    %cst_324 = arith.constant dense<0.000000e+00> : vector<16xf32>
    %595 = vector.multi_reduction <add>, %594, %cst_324 [1] : vector<16x32xf32> to vector<16xf32>
    %596 = vector.shape_cast %595 : vector<16xf32> to vector<16x1xf32>
    %cst_325 = arith.constant 3.125000e-02 : f32
    %597 = vector.broadcast %cst_325 : f32 to vector<16x1xf32>
    %598 = arith.mulf %593, %597 : vector<16x1xf32>
    %599 = arith.mulf %593, %598 : vector<16x1xf32>
    %600 = arith.subf %596, %599 : vector<16x1xf32>
    %cst_326 = arith.constant 0.0322580636 : f32
    %601 = vector.broadcast %cst_326 : f32 to vector<16x1xf32>
    %602 = arith.mulf %600, %601 : vector<16x1xf32>
    %cst_327 = arith.constant 0.000000e+00 : f32
    %603 = vector.broadcast %cst_327 : f32 to vector<16x1xf32>
    %604 = arith.maximumf %602, %603 : vector<16x1xf32>
    %605 = math.sqrt %604 : vector<16x1xf32>
    %cst_328 = arith.constant 9.99999997E-7 : f32
    %606 = vector.broadcast %cst_328 : f32 to vector<16x1xf32>
    %607 = arith.addf %605, %606 : vector<16x1xf32>
    %608 = vector.broadcast %598 : vector<16x1xf32> to vector<16x32xf32>
    %609 = arith.subf %591, %608 : vector<16x32xf32>
    %610 = vector.broadcast %1 : vector<1x32xf32> to vector<16x32xf32>
    %611 = arith.mulf %610, %609 : vector<16x32xf32>
    %612 = tpu.reciprocal %607 {approx = true} : vector<16x1xf32> -> vector<16x1xf32>
    %613 = vector.broadcast %612 : vector<16x1xf32> to vector<16x32xf32>
    %614 = arith.mulf %611, %613 : vector<16x32xf32>
    %615 = vector.broadcast %3 : vector<1x32xf32> to vector<16x32xf32>
    %616 = arith.addf %614, %615 : vector<16x32xf32>
    %cst_329 = arith.constant dense<0.000000e+00> : vector<16xf32>
    %617 = vector.multi_reduction <add>, %616, %cst_329 [1] : vector<16x32xf32> to vector<16xf32>
    %618 = vector.shape_cast %617 : vector<16xf32> to vector<16x1xf32>
    %619 = arith.mulf %616, %616 : vector<16x32xf32>
    %cst_330 = arith.constant dense<0.000000e+00> : vector<16xf32>
    %620 = vector.multi_reduction <add>, %619, %cst_330 [1] : vector<16x32xf32> to vector<16xf32>
    %621 = vector.shape_cast %620 : vector<16xf32> to vector<16x1xf32>
    %cst_331 = arith.constant 3.125000e-02 : f32
    %622 = vector.broadcast %cst_331 : f32 to vector<16x1xf32>
    %623 = arith.mulf %618, %622 : vector<16x1xf32>
    %624 = arith.mulf %618, %623 : vector<16x1xf32>
    %625 = arith.subf %621, %624 : vector<16x1xf32>
    %cst_332 = arith.constant 0.0322580636 : f32
    %626 = vector.broadcast %cst_332 : f32 to vector<16x1xf32>
    %627 = arith.mulf %625, %626 : vector<16x1xf32>
    %cst_333 = arith.constant 0.000000e+00 : f32
    %628 = vector.broadcast %cst_333 : f32 to vector<16x1xf32>
    %629 = arith.maximumf %627, %628 : vector<16x1xf32>
    %630 = math.sqrt %629 : vector<16x1xf32>
    %cst_334 = arith.constant 9.99999997E-7 : f32
    %631 = vector.broadcast %cst_334 : f32 to vector<16x1xf32>
    %632 = arith.addf %630, %631 : vector<16x1xf32>
    %633 = vector.broadcast %623 : vector<16x1xf32> to vector<16x32xf32>
    %634 = arith.subf %616, %633 : vector<16x32xf32>
    %635 = vector.broadcast %1 : vector<1x32xf32> to vector<16x32xf32>
    %636 = arith.mulf %635, %634 : vector<16x32xf32>
    %637 = vector.broadcast %632 : vector<16x1xf32> to vector<16x32xf32>
    %638 = arith.divf %636, %637 : vector<16x32xf32>
    %639 = vector.broadcast %3 : vector<1x32xf32> to vector<16x32xf32>
    %640 = arith.addf %638, %639 : vector<16x32xf32>
    %c0_335 = arith.constant 0 : index
    %c0_336 = arith.constant 0 : index
    %641 = vector.load %arg10[%c0_335, %c0_336] : memref<16x32xf32, #tpu.memory_space<vmem>>, vector<16x32xf32>
    tpu.vector_store %arg10[%c0_335, %c0_336], %640 {strides = array<i32>} : memref<16x32xf32, #tpu.memory_space<vmem>>, vector<16x32xf32>,
    return
  }
  func.func @transform_0(%arg0: i32) -> (i32, i32) {
    %c0_i32 = arith.constant 0 : i32
    %c0_i32_0 = arith.constant 0 : i32
    %c0_i32_1 = arith.constant 0 : i32
    return %c0_i32, %c0_i32_0 : i32, i32
  }
  func.func @transform_1(%arg0: i32) -> (i32, i32) {
    %c0_i32 = arith.constant 0 : i32
    %c0_i32_0 = arith.constant 0 : i32
    %c0_i32_1 = arith.constant 0 : i32
    return %c0_i32, %c0_i32_0 : i32, i32
  }
  func.func @transform_2(%arg0: i32) -> (i32, i32) {
    %c0_i32 = arith.constant 0 : i32
    %c0_i32_0 = arith.constant 0 : i32
    %c0_i32_1 = arith.constant 0 : i32
    return %c0_i32, %c0_i32_0 : i32, i32
  }
  func.func @transform_3(%arg0: i32) -> (i32, i32, i32) {
    %c0_i32 = arith.constant 0 : i32
    %c0_i32_0 = arith.constant 0 : i32
    %c0_i32_1 = arith.constant 0 : i32
    %c0_i32_2 = arith.constant 0 : i32
    return %c0_i32, %c0_i32_0, %c0_i32_1 : i32, i32, i32
  }
  func.func @transform_4(%arg0: i32) -> (i32, i32) {
    %c0_i32 = arith.constant 0 : i32
    %c0_i32_0 = arith.constant 0 : i32
    %c0_i32_1 = arith.constant 0 : i32
    return %c0_i32, %c0_i32_0 : i32, i32
  }
  func.func @transform_5(%arg0: i32) -> (i32, i32, i32) {
    %c0_i32 = arith.constant 0 : i32
    %c0_i32_0 = arith.constant 0 : i32
    %c0_i32_1 = arith.constant 0 : i32
    %c0_i32_2 = arith.constant 0 : i32
    return %c0_i32, %c0_i32_0, %c0_i32_1 : i32, i32, i32
  }
  func.func @transform_6(%arg0: i32) -> (i32, i32, i32) {
    %c0_i32 = arith.constant 0 : i32
    %c0_i32_0 = arith.constant 0 : i32
    %c0_i32_1 = arith.constant 0 : i32
    %c0_i32_2 = arith.constant 0 : i32
    return %c0_i32, %c0_i32_0, %c0_i32_1 : i32, i32, i32
  }
  func.func @transform_7(%arg0: i32) -> (i32, i32, i32) {
    %c0_i32 = arith.constant 0 : i32
    %c0_i32_0 = arith.constant 0 : i32
    %c0_i32_1 = arith.constant 0 : i32
    %c0_i32_2 = arith.constant 0 : i32
    return %c0_i32, %c0_i32_0, %c0_i32_1 : i32, i32, i32
  }
  func.func @transform_8(%arg0: i32) -> (i32, i32, i32) {
    %c0_i32 = arith.constant 0 : i32
    %c0_i32_0 = arith.constant 0 : i32
    %c0_i32_1 = arith.constant 0 : i32
    %c0_i32_2 = arith.constant 0 : i32
    return %c0_i32, %c0_i32_0, %c0_i32_1 : i32, i32, i32
  }
  func.func @transform_9(%arg0: i32) -> (i32, i32) {
    %c0_i32 = arith.constant 0 : i32
    %c0_i32_0 = arith.constant 0 : i32
    %c0_i32_1 = arith.constant 0 : i32
    return %c0_i32, %c0_i32_0 : i32, i32
  }
}

</mosaic_0001>

<llo_original>
// kernel: transformer_forward.1
$region0: #{transformer_forward.1}
  #allocation0 [shape = 'u32[]', space=smem, size = 0x4, offset = 0x4, fixed_abs, tag = 'smem constant byte address 0x4 - core index']
  #allocation1 [shape = 'u32[144,128]{1,0:T(1,128)}', space=vmem, size = 0x12000, scoped, tag = 'internal scratch']
  %s0 = inlined_call_operand.vmem [shape: s32[16,1], index: 0, kind: input, shape index: {}]
  %s1 = inlined_call_operand.vmem [shape: s32[16,1], index: 1, kind: input, shape index: {}]
  %s2 = inlined_call_operand.vmem [shape: s32[16,8], index: 2, kind: input, shape index: {}]
  %s3 = inlined_call_operand.vmem [shape: f32[2,50,32], index: 3, kind: input, shape index: {}]
  %s4 = inlined_call_operand.vmem [shape: f32[16,32], index: 4, kind: input, shape index: {}]
  %s5 = inlined_call_operand.vmem [shape: f32[11,32,64], index: 5, kind: input, shape index: {}]
  %s6 = inlined_call_operand.vmem [shape: f32[11,1,64], index: 6, kind: input, shape index: {}]
  %s7 = inlined_call_operand.vmem [shape: f32[5,64,32], index: 7, kind: input, shape index: {}]
  %s8 = inlined_call_operand.vmem [shape: f32[7,1,32], index: 8, kind: input, shape index: {}]
  %s9 = inlined_call_operand.hbm [shape: f32[16,32], index: 9, kind: output, shape index: {}]
  %s10 = sld [smem:[#allocation0]]
  $region46: #{transformer_forward.1} parent=0
    _
  %s12 = ssub.s32 1, %s10
  %s13 = scalar_select 0, %s12, %s10
  $region1: #{transformer_forward.1} parent=0
    #allocation2 [shape = 'u8[8192]{0}', space=vmem, size = 0x2000, scoped, tag = 'output window, operand 0, single buffered']
    #allocation3 [shape = 's32[1]{0}', space=sflag, size = 0x4, scoped, tag = 'scoped memory for transformer_forward.1']
    %14 = vsyncpa [#allocation3], 0
    // Predicated region
    $region2: #{transformer_forward.1} parent=1 // pred_check
      _
    $region3: #{transformer_forward.1} parent=1 // pred_check_branch
      %16 = sbr.rel (0) target = $region5
    $region4: #{transformer_forward.1} parent=1 // pred_region
      _
    $region5: #{transformer_forward.1} parent=1 // pred_fallthru
      _
    // Predicated region
    $region6: #{transformer_forward.1} parent=1 // pred_check
      _
    $region7: #{transformer_forward.1} parent=1 // pred_check_branch
      %18 = sbr.rel (0) target = $region9
    $region8: #{transformer_forward.1} parent=1 // pred_region
      _
    $region9: #{transformer_forward.1} parent=1 // pred_fallthru
      _
    // Predicated region
    $region10: #{transformer_forward.1} parent=1 // pred_check
      _
    $region11: #{transformer_forward.1} parent=1 // pred_check_branch
      %20 = sbr.rel (0) target = $region13
    $region12: #{transformer_forward.1} parent=1 // pred_region
      _
    $region13: #{transformer_forward.1} parent=1 // pred_fallthru
      _
    // Predicated region
    $region14: #{transformer_forward.1} parent=1 // pred_check
      _
    $region15: #{transformer_forward.1} parent=1 // pred_check_branch
      %22 = sbr.rel (0) target = $region17
    $region16: #{transformer_forward.1} parent=1 // pred_region
      _
    $region17: #{transformer_forward.1} parent=1 // pred_fallthru
      _
    // Predicated region
    $region18: #{transformer_forward.1} parent=1 // pred_check
      _
    $region19: #{transformer_forward.1} parent=1 // pred_check_branch
      %24 = sbr.rel (0) target = $region21
    $region20: #{transformer_forward.1} parent=1 // pred_region
      _
    $region21: #{transformer_forward.1} parent=1 // pred_fallthru
      _
    // Predicated region
    $region22: #{transformer_forward.1} parent=1 // pred_check
      _
    $region23: #{transformer_forward.1} parent=1 // pred_check_branch
      %26 = sbr.rel (0) target = $region25
    $region24: #{transformer_forward.1} parent=1 // pred_region
      _
    $region25: #{transformer_forward.1} parent=1 // pred_fallthru
      _
    // Predicated region
    $region26: #{transformer_forward.1} parent=1 // pred_check
      _
    $region27: #{transformer_forward.1} parent=1 // pred_check_branch
      %28 = sbr.rel (0) target = $region29
    $region28: #{transformer_forward.1} parent=1 // pred_region
      _
    $region29: #{transformer_forward.1} parent=1 // pred_fallthru
      _
    // Predicated region
    $region30: #{transformer_forward.1} parent=1 // pred_check
      _
    $region31: #{transformer_forward.1} parent=1 // pred_check_branch
      %30 = sbr.rel (0) target = $region33
    $region32: #{transformer_forward.1} parent=1 // pred_region
      _
    $region33: #{transformer_forward.1} parent=1 // pred_fallthru
      _
    // Predicated region
    $region34: #{transformer_forward.1} parent=1 // pred_check
      _
    $region35: #{transformer_forward.1} parent=1 // pred_check_branch
      %32 = sbr.rel (0) target = $region37
    $region36: #{transformer_forward.1} parent=1 // pred_region
      _
    $region37: #{transformer_forward.1} parent=1 // pred_fallthru
      _
    %s33 = scalar_lea.vmem %s8, 5
    %v34 = vld [vmem:[%s33] sm:$0x1]
    %s35 = scalar_lea.vmem %s8, 6
    %v36 = vld [vmem:[%s35] sm:$0x1]
    %v37 = vld [vmem:[%s4] sm:$0xff]
    %v38 = vld [vmem:[%s4 + $0x8] sm:$0xff]
    %v39 = vlaneseq
    %v40 = vshrl.u32 %v39, 7
    %v41 = vadd.s32 %v40, 8
    %v42 = vlaneseq
    %v43 = vand.u32 %v42, 127
    %vm44 = vcmp.ge.s32.totalorder %v40, 8
    %vm45 = vcmp.ge.s32.totalorder %v41, 8
    %vm46 = vcmp.ge.s32.totalorder %v43, 8
    %vm47 = vmxor %vm44, %vm46
    %vm48 = vmxor %vm45, %vm46
    %v49 = vsel %vm47, -1e+09, 0.0
    %v50 = vsel %vm48, -1e+09, 0.0
    %v51 = vld [vmem:[%s2] sm:$0xff]
    %v52 = vld [vmem:[%s2 + $0x8] sm:$0xff]
    %vm53 = vcmp.eq.s32.totalorder %v51, 0
    %vm54 = vcmp.eq.s32.totalorder %v52, 0
    %v55 = vsel %vm53, -1e+09, 0.0
    %v56 = vsel %vm54, -1e+09, 0.0
    %59 = vrot.lane.b32.xlu0 %v55, 8
    %v60 = vpop.permute.xlu0 %59
    %61 = vrot.lane.b32.xlu0 %v56, 8
    %v62 = vpop.permute.xlu0 %61
    %vm65 = vcmask 64512
    %v66 = vsel %vm65, %v55, %v60
    %v67 = vsel %vm65, %v56, %v62
    %v68 = vadd.f32 %v49, %v66
    %v69 = vadd.f32 %v50, %v67
    %v70 = vld [vmem:[%s0] sm:$0xff]
    %v71 = vld [vmem:[%s0 + $0x8] sm:$0xff]
    %72 = vset.pattern.permute.xlu0 0
    %73 = vperm.xlu0 %72, %v70
    %v74 = vpop.permute.xlu0 %73
    %75 = vset.pattern.permute.xlu0 0
    %76 = vperm.xlu0 %75, %v71
    %v77 = vpop.permute.xlu0 %76
    %vm78 = vcmp.eq.s32.totalorder %v74, %v43
    %vm79 = vcmp.eq.s32.totalorder %v77, %v43
    %v80 = vsel %vm78, 1, 0
    %v81 = vsel %vm79, 1, 0
    %v82 = vcvt.s32.f32 %v80
    %v83 = vcvt.s32.f32 %v81
    %v84 = vld [vmem:[%s3] sm:$0xff]
    %v85 = vld [vmem:[%s3 + $0x8] sm:$0xff]
    %v86 = vld [vmem:[%s3 + $0x10] sm:$0xff]
    %v87 = vld [vmem:[%s3 + $0x18] sm:$0xff]
    %v88 = vld [vmem:[%s3 + $0x20] sm:$0xff]
    %v89 = vld [vmem:[%s3 + $0x28] sm:$0xff]
    %v90 = vld [vmem:[%s3 + $0x30] sm:$0x3]
    %vm91 = vcmask 408576
    %v93 = vsel %vm91, %v82, 0
    %v96 = vsel %vm91, %v83, 0
    %vm98 = vcmask 1041408
    %v100 = vsel %vm98, %v90, 0
    %102 = vmatprep.subr.mxu0 0.0
    %103 = vmatpush1.msra.mxu0 0.0
    %104 = vmatprep.subr.mxu0 0.0
    %105 = vmatpush1.msra.mxu0 0.0
    %106 = vmatprep.subr.mxu0 0.0
    %107 = vmatpush1.msra.mxu0 0.0
    %108 = vmatprep.subr.mxu0 0.0
    %109 = vmatpush1.msra.mxu0 0.0
    %110 = vmatprep.subr.mxu0 0.0
    %111 = vmatpush1.msra.mxu0 0.0
    %112 = vmatprep.subr.mxu0 0.0
    %113 = vmatpush1.msra.mxu0 0.0
    %114 = vmatprep.subr.mxu0 0.0
    %115 = vmatpush1.msra.mxu0 0.0
    %116 = vmatprep.subr.mxu0 0.0
    %117 = vmatpush1.msra.mxu0 0.0
    %118 = vmatprep.subr.mxu0 0.0
    %119 = vmatpush1.msra.mxu0 0.0
    %120 = vmatprep.subr.mxu0 0.0
    %121 = vmatpush1.msra.mxu0 %v100
    %122 = vmatprep.subr.mxu0 0.0
    %123 = vmatpush1.msra.mxu0 %v89
    %124 = vmatprep.subr.mxu0 0.0
    %125 = vmatpush1.msra.mxu0 %v88
    %126 = vmatprep.subr.mxu0 0.0
    %127 = vmatpush1.msra.mxu0 %v87
    %128 = vmatprep.subr.mxu0 0.0
    %129 = vmatpush1.msra.mxu0 %v86
    %130 = vmatprep.subr.mxu0 0.0
    %131 = vmatpush1.msra.mxu0 %v85
    %132 = vmatprep.subr.mxu0 0.0
    %133 = vmatpush1.msra.mxu0 %v84
    %134 = vmatprep.subr.mxu0 0.0
    %135 = vmatpush2.msra.mxu0 0.0
    %136 = vmatprep.subr.mxu0 0.0
    %137 = vmatpush2.msra.mxu0 0.0
    %138 = vmatprep.subr.mxu0 0.0
    %139 = vmatpush2.msra.mxu0 0.0
    %140 = vmatprep.subr.mxu0 0.0
    %141 = vmatpush2.msra.mxu0 0.0
    %142 = vmatprep.subr.mxu0 0.0
    %143 = vmatpush2.msra.mxu0 0.0
    %144 = vmatprep.subr.mxu0 0.0
    %145 = vmatpush2.msra.mxu0 0.0
    %146 = vmatprep.subr.mxu0 0.0
    %147 = vmatpush2.msra.mxu0 0.0
    %148 = vmatprep.subr.mxu0 0.0
    %149 = vmatpush2.msra.mxu0 0.0
    %150 = vmatprep.subr.mxu0 0.0
    %151 = vmatpush2.msra.mxu0 0.0
    %152 = vmatprep.subr.mxu0 0.0
    %153 = vmatpush2.msra.mxu0 0.0
    %154 = vmatprep.subr.mxu0 0.0
    %155 = vmatpush2.msra.mxu0 0.0
    %156 = vmatprep.subr.mxu0 0.0
    %157 = vmatpush2.msra.mxu0 0.0
    %158 = vmatprep.subr.mxu0 0.0
    %159 = vmatpush2.msra.mxu0 0.0
    %160 = vmatprep.subr.mxu0 0.0
    %161 = vmatpush2.msra.mxu0 0.0
    %162 = vmatprep.subr.mxu0 0.0
    %163 = vmatpush2.msra.mxu0 0.0
    %164 = vmatprep.subr.mxu0 0.0
    %165 = vmatpush2.msra.mxu0 0.0
    %166 = vmatprep.mubr.f32.mxu0 0.0
    %167 = vmatmul.mubr.f32.gmra.mxu0 %v93
    %v168 = vpop.f32.mrf.mxu0
    %v169 = vadd.f32 0.0, %v168
    %v170 = vpop.f32.mrf.mxu0
    %171 = vmatprep.mubr.f32.mxu0 0.0
    %172 = vmatmul.mubr.f32.gmra.mxu0 %v96
    %v173 = vpop.f32.mrf.mxu0
    %v174 = vadd.f32 0.0, %v173
    %v175 = vpop.f32.mrf.mxu0
    %176 = vdwg.mxu0
    %v177 = vmul.f32 %v169, 5.656854
    %v178 = vmul.f32 %v174, 5.656854
    %v179 = vadd.f32 %v177, %v37
    %v180 = vadd.f32 %v178, %v38
    %v181 = vld [vmem:[%s1] sm:$0xff]
    %v182 = vld [vmem:[%s1 + $0x8] sm:$0xff]
    %183 = vset.pattern.permute.xlu0 0
    %184 = vperm.xlu0 %183, %v181
    %v185 = vpop.permute.xlu0 %184
    %186 = vset.pattern.permute.xlu0 0
    %187 = vperm.xlu0 %186, %v182
    %v188 = vpop.permute.xlu0 %187
    %vm189 = vcmp.eq.s32.totalorder %v185, %v43
    %vm190 = vcmp.eq.s32.totalorder %v188, %v43
    %v191 = vsel %vm189, 1, 0
    %v192 = vsel %vm190, 1, 0
    %v193 = vcvt.s32.f32 %v191
    %v194 = vcvt.s32.f32 %v192
    %s195 = scalar_lea.vmem %s3, 56
    %v196 = vld [vmem:[%s195] sm:$0xff]
    %v197 = vld [vmem:[%s195 + $0x8] sm:$0xff]
    %v198 = vld [vmem:[%s195 + $0x10] sm:$0xff]
    %v199 = vld [vmem:[%s195 + $0x18] sm:$0xff]
    %v200 = vld [vmem:[%s195 + $0x20] sm:$0xff]
    %v201 = vld [vmem:[%s195 + $0x28] sm:$0xff]
    %v202 = vld [vmem:[%s195 + $0x30] sm:$0x3]
    %v204 = vsel %vm91, %v193, 0
    %v207 = vsel %vm91, %v194, 0
    %v210 = vsel %vm98, %v202, 0
    %212 = vmatprep.subr.mxu0 0.0
    %213 = vmatpush1.msra.mxu0 0.0
    %214 = vmatprep.subr.mxu0 0.0
    %215 = vmatpush1.msra.mxu0 0.0
    %216 = vmatprep.subr.mxu0 0.0
    %217 = vmatpush1.msra.mxu0 0.0
    %218 = vmatprep.subr.mxu0 0.0
    %219 = vmatpush1.msra.mxu0 0.0
    %220 = vmatprep.subr.mxu0 0.0
    %221 = vmatpush1.msra.mxu0 0.0
    %222 = vmatprep.subr.mxu0 0.0
    %223 = vmatpush1.msra.mxu0 0.0
    %224 = vmatprep.subr.mxu0 0.0
    %225 = vmatpush1.msra.mxu0 0.0
    %226 = vmatprep.subr.mxu0 0.0
    %227 = vmatpush1.msra.mxu0 0.0
    %228 = vmatprep.subr.mxu0 0.0
    %229 = vmatpush1.msra.mxu0 0.0
    %230 = vmatprep.subr.mxu0 0.0
    %231 = vmatpush1.msra.mxu0 %v210
    %232 = vmatprep.subr.mxu0 0.0
    %233 = vmatpush1.msra.mxu0 %v201
    %234 = vmatprep.subr.mxu0 0.0
    %235 = vmatpush1.msra.mxu0 %v200
    %236 = vmatprep.subr.mxu0 0.0
    %237 = vmatpush1.msra.mxu0 %v199
    %238 = vmatprep.subr.mxu0 0.0
    %239 = vmatpush1.msra.mxu0 %v198
    %240 = vmatprep.subr.mxu0 0.0
    %241 = vmatpush1.msra.mxu0 %v197
    %242 = vmatprep.subr.mxu0 0.0
    %243 = vmatpush1.msra.mxu0 %v196
    %244 = vmatprep.subr.mxu0 0.0
    %245 = vmatpush2.msra.mxu0 0.0
    %246 = vmatprep.subr.mxu0 0.0
    %247 = vmatpush2.msra.mxu0 0.0
    %248 = vmatprep.subr.mxu0 0.0
    %249 = vmatpush2.msra.mxu0 0.0
    %250 = vmatprep.subr.mxu0 0.0
    %251 = vmatpush2.msra.mxu0 0.0
    %252 = vmatprep.subr.mxu0 0.0
    %253 = vmatpush2.msra.mxu0 0.0
    %254 = vmatprep.subr.mxu0 0.0
    %255 = vmatpush2.msra.mxu0 0.0
    %256 = vmatprep.subr.mxu0 0.0
    %257 = vmatpush2.msra.mxu0 0.0
    %258 = vmatprep.subr.mxu0 0.0
    %259 = vmatpush2.msra.mxu0 0.0
    %260 = vmatprep.subr.mxu0 0.0
    %261 = vmatpush2.msra.mxu0 0.0
    %262 = vmatprep.subr.mxu0 0.0
    %263 = vmatpush2.msra.mxu0 0.0
    %264 = vmatprep.subr.mxu0 0.0
    %265 = vmatpush2.msra.mxu0 0.0
    %266 = vmatprep.subr.mxu0 0.0
    %267 = vmatpush2.msra.mxu0 0.0
    %268 = vmatprep.subr.mxu0 0.0
    %269 = vmatpush2.msra.mxu0 0.0
    %270 = vmatprep.subr.mxu0 0.0
    %271 = vmatpush2.msra.mxu0 0.0
    %272 = vmatprep.subr.mxu0 0.0
    %273 = vmatpush2.msra.mxu0 0.0
    %274 = vmatprep.subr.mxu0 0.0
    %275 = vmatpush2.msra.mxu0 0.0
    %276 = vmatprep.mubr.f32.mxu0 0.0
    %277 = vmatmul.mubr.f32.gmra.mxu0 %v204
    %v278 = vpop.f32.mrf.mxu0
    %v279 = vadd.f32 0.0, %v278
    %v280 = vpop.f32.mrf.mxu0
    %281 = vmatprep.mubr.f32.mxu0 0.0
    %282 = vmatmul.mubr.f32.gmra.mxu0 %v207
    %v283 = vpop.f32.mrf.mxu0
    %v284 = vadd.f32 0.0, %v283
    %v285 = vpop.f32.mrf.mxu0
    %286 = vdwg.mxu0
    %v287 = vmul.f32 %v279, 5.656854
    %v288 = vmul.f32 %v284, 5.656854
    %v289 = vadd.f32 %v287, %v37
    %v290 = vadd.f32 %v288, %v38
    %v291 = vld [vmem:[%s5] sm:$0xff]
    %v292 = vld [vmem:[%s5 + $0x8] sm:$0xff]
    %v293 = vld [vmem:[%s5 + $0x10] sm:$0xff]
    %v294 = vld [vmem:[%s5 + $0x18] sm:$0xff]
    %v295 = vld [vmem:[%s6] sm:$0x1]
    %v297 = vlaneseq
    %v298 = vshrl.u32 %v297, 7
    %v299 = vsub.s32 0, %v298
    %v300 = vrot.slane %v295, %v299
    %vm302 = vcmask 261120
    %v304 = vsel %vm302, %v179, 0
    %v307 = vsel %vm302, %v180, 0
    %309 = vmatprep.subr.mxu0 0.0
    %310 = vmatpush1.msra.mxu0 0.0
    %311 = vmatprep.subr.mxu0 0.0
    %312 = vmatpush1.msra.mxu0 0.0
    %313 = vmatprep.subr.mxu0 0.0
    %314 = vmatpush1.msra.mxu0 0.0
    %315 = vmatprep.subr.mxu0 0.0
    %316 = vmatpush1.msra.mxu0 0.0
    %317 = vmatprep.subr.mxu0 0.0
    %318 = vmatpush1.msra.mxu0 0.0
    %319 = vmatprep.subr.mxu0 0.0
    %320 = vmatpush1.msra.mxu0 0.0
    %321 = vmatprep.subr.mxu0 0.0
    %322 = vmatpush1.msra.mxu0 0.0
    %323 = vmatprep.subr.mxu0 0.0
    %324 = vmatpush1.msra.mxu0 0.0
    %325 = vmatprep.subr.mxu0 0.0
    %326 = vmatpush1.msra.mxu0 0.0
    %327 = vmatprep.subr.mxu0 0.0
    %328 = vmatpush1.msra.mxu0 0.0
    %329 = vmatprep.subr.mxu0 0.0
    %330 = vmatpush1.msra.mxu0 0.0
    %331 = vmatprep.subr.mxu0 0.0
    %332 = vmatpush1.msra.mxu0 0.0
    %333 = vmatprep.subr.mxu0 0.0
    %334 = vmatpush1.msra.mxu0 %v294
    %335 = vmatprep.subr.mxu0 0.0
    %336 = vmatpush1.msra.mxu0 %v293
    %337 = vmatprep.subr.mxu0 0.0
    %338 = vmatpush1.msra.mxu0 %v292
    %339 = vmatprep.subr.mxu0 0.0
    %340 = vmatpush1.msra.mxu0 %v291
    %341 = vmatprep.subr.mxu0 0.0
    %342 = vmatpush2.msra.mxu0 0.0
    %343 = vmatprep.subr.mxu0 0.0
    %344 = vmatpush2.msra.mxu0 0.0
    %345 = vmatprep.subr.mxu0 0.0
    %346 = vmatpush2.msra.mxu0 0.0
    %347 = vmatprep.subr.mxu0 0.0
    %348 = vmatpush2.msra.mxu0 0.0
    %349 = vmatprep.subr.mxu0 0.0
    %350 = vmatpush2.msra.mxu0 0.0
    %351 = vmatprep.subr.mxu0 0.0
    %352 = vmatpush2.msra.mxu0 0.0
    %353 = vmatprep.subr.mxu0 0.0
    %354 = vmatpush2.msra.mxu0 0.0
    %355 = vmatprep.subr.mxu0 0.0
    %356 = vmatpush2.msra.mxu0 0.0
    %357 = vmatprep.subr.mxu0 0.0
    %358 = vmatpush2.msra.mxu0 0.0
    %359 = vmatprep.subr.mxu0 0.0
    %360 = vmatpush2.msra.mxu0 0.0
    %361 = vmatprep.subr.mxu0 0.0
    %362 = vmatpush2.msra.mxu0 0.0
    %363 = vmatprep.subr.mxu0 0.0
    %364 = vmatpush2.msra.mxu0 0.0
    %365 = vmatprep.subr.mxu0 0.0
    %366 = vmatpush2.msra.mxu0 0.0
    %367 = vmatprep.subr.mxu0 0.0
    %368 = vmatpush2.msra.mxu0 0.0
    %369 = vmatprep.subr.mxu0 0.0
    %370 = vmatpush2.msra.mxu0 0.0
    %371 = vmatprep.subr.mxu0 0.0
    %372 = vmatpush2.msra.mxu0 0.0
    %373 = vmatprep.mubr.f32.mxu0 0.0
    %374 = vmatmul.mubr.f32.gmra.mxu0 %v304
    %v375 = vpop.f32.mrf.mxu0
    %v376 = vadd.f32 %v300, %v375
    %v377 = vpop.f32.mrf.mxu0
    %378 = vmatprep.mubr.f32.mxu0 0.0
    %379 = vmatmul.mubr.f32.gmra.mxu0 %v307
    %v380 = vpop.f32.mrf.mxu0
    %v381 = vadd.f32 %v300, %v380
    %v382 = vpop.f32.mrf.mxu0
    %383 = vdwg.mxu0
    %s384 = scalar_lea.vmem %s5, 32
    %v385 = vld [vmem:[%s384] sm:$0xff]
    %v386 = vld [vmem:[%s384 + $0x8] sm:$0xff]
    %v387 = vld [vmem:[%s384 + $0x10] sm:$0xff]
    %v388 = vld [vmem:[%s384 + $0x18] sm:$0xff]
    %s389 = scalar_lea.vmem %s6, 1
    %v390 = vld [vmem:[%s389] sm:$0x1]
    %v392 = vlaneseq
    %v393 = vshrl.u32 %v392, 7
    %v394 = vsub.s32 0, %v393
    %v395 = vrot.slane %v390, %v394
    %397 = vmatprep.subr.mxu0 0.0
    %398 = vmatpush1.msra.mxu0 0.0
    %399 = vmatprep.subr.mxu0 0.0
    %400 = vmatpush1.msra.mxu0 0.0
    %401 = vmatprep.subr.mxu0 0.0
    %402 = vmatpush1.msra.mxu0 0.0
    %403 = vmatprep.subr.mxu0 0.0
    %404 = vmatpush1.msra.mxu0 0.0
    %405 = vmatprep.subr.mxu0 0.0
    %406 = vmatpush1.msra.mxu0 0.0
    %407 = vmatprep.subr.mxu0 0.0
    %408 = vmatpush1.msra.mxu0 0.0
    %409 = vmatprep.subr.mxu0 0.0
    %410 = vmatpush1.msra.mxu0 0.0
    %411 = vmatprep.subr.mxu0 0.0
    %412 = vmatpush1.msra.mxu0 0.0
    %413 = vmatprep.subr.mxu0 0.0
    %414 = vmatpush1.msra.mxu0 0.0
    %415 = vmatprep.subr.mxu0 0.0
    %416 = vmatpush1.msra.mxu0 0.0
    %417 = vmatprep.subr.mxu0 0.0
    %418 = vmatpush1.msra.mxu0 0.0
    %419 = vmatprep.subr.mxu0 0.0
    %420 = vmatpush1.msra.mxu0 0.0
    %421 = vmatprep.subr.mxu0 0.0
    %422 = vmatpush1.msra.mxu0 %v388
    %423 = vmatprep.subr.mxu0 0.0
    %424 = vmatpush1.msra.mxu0 %v387
    %425 = vmatprep.subr.mxu0 0.0
    %426 = vmatpush1.msra.mxu0 %v386
    %427 = vmatprep.subr.mxu0 0.0
    %428 = vmatpush1.msra.mxu0 %v385
    %429 = vmatprep.subr.mxu0 0.0
    %430 = vmatpush2.msra.mxu0 0.0
    %431 = vmatprep.subr.mxu0 0.0
    %432 = vmatpush2.msra.mxu0 0.0
    %433 = vmatprep.subr.mxu0 0.0
    %434 = vmatpush2.msra.mxu0 0.0
    %435 = vmatprep.subr.mxu0 0.0
    %436 = vmatpush2.msra.mxu0 0.0
    %437 = vmatprep.subr.mxu0 0.0
    %438 = vmatpush2.msra.mxu0 0.0
    %439 = vmatprep.subr.mxu0 0.0
    %440 = vmatpush2.msra.mxu0 0.0
    %441 = vmatprep.subr.mxu0 0.0
    %442 = vmatpush2.msra.mxu0 0.0
    %443 = vmatprep.subr.mxu0 0.0
    %444 = vmatpush2.msra.mxu0 0.0
    %445 = vmatprep.subr.mxu0 0.0
    %446 = vmatpush2.msra.mxu0 0.0
    %447 = vmatprep.subr.mxu0 0.0
    %448 = vmatpush2.msra.mxu0 0.0
    %449 = vmatprep.subr.mxu0 0.0
    %450 = vmatpush2.msra.mxu0 0.0
    %451 = vmatprep.subr.mxu0 0.0
    %452 = vmatpush2.msra.mxu0 0.0
    %453 = vmatprep.subr.mxu0 0.0
    %454 = vmatpush2.msra.mxu0 0.0
    %455 = vmatprep.subr.mxu0 0.0
    %456 = vmatpush2.msra.mxu0 0.0
    %457 = vmatprep.subr.mxu0 0.0
    %458 = vmatpush2.msra.mxu0 0.0
    %459 = vmatprep.subr.mxu0 0.0
    %460 = vmatpush2.msra.mxu0 0.0
    %461 = vmatprep.mubr.f32.mxu0 0.0
    %462 = vmatmul.mubr.f32.gmra.mxu0 %v304
    %v463 = vpop.f32.mrf.mxu0
    %v464 = vadd.f32 %v395, %v463
    %v465 = vpop.f32.mrf.mxu0
    %466 = vmatprep.mubr.f32.mxu0 0.0
    %467 = vmatmul.mubr.f32.gmra.mxu0 %v307
    %v468 = vpop.f32.mrf.mxu0
    %v469 = vadd.f32 %v395, %v468
    %v470 = vpop.f32.mrf.mxu0
    %471 = vdwg.mxu0
    %s472 = scalar_lea.vmem %s5, 64
    %v473 = vld [vmem:[%s472] sm:$0xff]
    %v474 = vld [vmem:[%s472 + $0x8] sm:$0xff]
    %v475 = vld [vmem:[%s472 + $0x10] sm:$0xff]
    %v476 = vld [vmem:[%s472 + $0x18] sm:$0xff]
    %s477 = scalar_lea.vmem %s6, 2
    %v478 = vld [vmem:[%s477] sm:$0x1]
    %v480 = vlaneseq
    %v481 = vshrl.u32 %v480, 7
    %v482 = vsub.s32 0, %v481
    %v483 = vrot.slane %v478, %v482
    %485 = vmatprep.subr.mxu0 0.0
    %486 = vmatpush1.msra.mxu0 0.0
    %487 = vmatprep.subr.mxu0 0.0
    %488 = vmatpush1.msra.mxu0 0.0
    %489 = vmatprep.subr.mxu0 0.0
    %490 = vmatpush1.msra.mxu0 0.0
    %491 = vmatprep.subr.mxu0 0.0
    %492 = vmatpush1.msra.mxu0 0.0
    %493 = vmatprep.subr.mxu0 0.0
    %494 = vmatpush1.msra.mxu0 0.0
    %495 = vmatprep.subr.mxu0 0.0
    %496 = vmatpush1.msra.mxu0 0.0
    %497 = vmatprep.subr.mxu0 0.0
    %498 = vmatpush1.msra.mxu0 0.0
    %499 = vmatprep.subr.mxu0 0.0
    %500 = vmatpush1.msra.mxu0 0.0
    %501 = vmatprep.subr.mxu0 0.0
    %502 = vmatpush1.msra.mxu0 0.0
    %503 = vmatprep.subr.mxu0 0.0
    %504 = vmatpush1.msra.mxu0 0.0
    %505 = vmatprep.subr.mxu0 0.0
    %506 = vmatpush1.msra.mxu0 0.0
    %507 = vmatprep.subr.mxu0 0.0
    %508 = vmatpush1.msra.mxu0 0.0
    %509 = vmatprep.subr.mxu0 0.0
    %510 = vmatpush1.msra.mxu0 %v476
    %511 = vmatprep.subr.mxu0 0.0
    %512 = vmatpush1.msra.mxu0 %v475
    %513 = vmatprep.subr.mxu0 0.0
    %514 = vmatpush1.msra.mxu0 %v474
    %515 = vmatprep.subr.mxu0 0.0
    %516 = vmatpush1.msra.mxu0 %v473
    %517 = vmatprep.subr.mxu0 0.0
    %518 = vmatpush2.msra.mxu0 0.0
    %519 = vmatprep.subr.mxu0 0.0
    %520 = vmatpush2.msra.mxu0 0.0
    %521 = vmatprep.subr.mxu0 0.0
    %522 = vmatpush2.msra.mxu0 0.0
    %523 = vmatprep.subr.mxu0 0.0
    %524 = vmatpush2.msra.mxu0 0.0
    %525 = vmatprep.subr.mxu0 0.0
    %526 = vmatpush2.msra.mxu0 0.0
    %527 = vmatprep.subr.mxu0 0.0
    %528 = vmatpush2.msra.mxu0 0.0
    %529 = vmatprep.subr.mxu0 0.0
    %530 = vmatpush2.msra.mxu0 0.0
    %531 = vmatprep.subr.mxu0 0.0
    %532 = vmatpush2.msra.mxu0 0.0
    %533 = vmatprep.subr.mxu0 0.0
    %534 = vmatpush2.msra.mxu0 0.0
    %535 = vmatprep.subr.mxu0 0.0
    %536 = vmatpush2.msra.mxu0 0.0
    %537 = vmatprep.subr.mxu0 0.0
    %538 = vmatpush2.msra.mxu0 0.0
    %539 = vmatprep.subr.mxu0 0.0
    %540 = vmatpush2.msra.mxu0 0.0
    %541 = vmatprep.subr.mxu0 0.0
    %542 = vmatpush2.msra.mxu0 0.0
    %543 = vmatprep.subr.mxu0 0.0
    %544 = vmatpush2.msra.mxu0 0.0
    %545 = vmatprep.subr.mxu0 0.0
    %546 = vmatpush2.msra.mxu0 0.0
    %547 = vmatprep.subr.mxu0 0.0
    %548 = vmatpush2.msra.mxu0 0.0
    %549 = vmatprep.mubr.f32.mxu0 0.0
    %550 = vmatmul.mubr.f32.gmra.mxu0 %v304
    %v551 = vpop.f32.mrf.mxu0
    %v552 = vadd.f32 %v483, %v551
    %v553 = vpop.f32.mrf.mxu0
    %554 = vmatprep.mubr.f32.mxu0 0.0
    %555 = vmatmul.mubr.f32.gmra.mxu0 %v307
    %v556 = vpop.f32.mrf.mxu0
    %v557 = vadd.f32 %v483, %v556
    %v558 = vpop.f32.mrf.mxu0
    %559 = vdwg.mxu0
    %vm560 = vcmask 523264
    %v562 = vsel %vm560, %v376, 0
    %v565 = vsel %vm560, %v381, 0
    %v568 = vsel %vm560, %v464, 0
    %v571 = vsel %vm560, %v469, 0
    %573 = vmatprep.subr.mxu0 0.0
    %574 = vmatpush1.xpose.msra.mxu0 0.0
    %575 = vmatprep.subr.mxu0 0.0
    %576 = vmatpush1.xpose.msra.mxu0 0.0
    %577 = vmatprep.subr.mxu0 0.0
    %578 = vmatpush1.xpose.msra.mxu0 0.0
    %579 = vmatprep.subr.mxu0 0.0
    %580 = vmatpush1.xpose.msra.mxu0 0.0
    %581 = vmatprep.subr.mxu0 0.0
    %582 = vmatpush1.xpose.msra.mxu0 0.0
    %583 = vmatprep.subr.mxu0 0.0
    %584 = vmatpush1.xpose.msra.mxu0 0.0
    %585 = vmatprep.subr.mxu0 0.0
    %586 = vmatpush1.xpose.msra.mxu0 0.0
    %587 = vmatprep.subr.mxu0 0.0
    %588 = vmatpush1.xpose.msra.mxu0 0.0
    %589 = vmatprep.subr.mxu0 0.0
    %590 = vmatpush1.xpose.msra.mxu0 0.0
    %591 = vmatprep.subr.mxu0 0.0
    %592 = vmatpush1.xpose.msra.mxu0 0.0
    %593 = vmatprep.subr.mxu0 0.0
    %594 = vmatpush1.xpose.msra.mxu0 0.0
    %595 = vmatprep.subr.mxu0 0.0
    %596 = vmatpush1.xpose.msra.mxu0 0.0
    %597 = vmatprep.subr.mxu0 0.0
    %598 = vmatpush1.xpose.msra.mxu0 0.0
    %599 = vmatprep.subr.mxu0 0.0
    %600 = vmatpush1.xpose.msra.mxu0 0.0
    %601 = vmatprep.subr.mxu0 0.0
    %602 = vmatpush1.xpose.msra.mxu0 %v571
    %603 = vmatprep.subr.mxu0 0.0
    %604 = vmatpush1.xpose.msra.mxu0 %v568
    %605 = vmatprep.subr.mxu0 0.0
    %606 = vmatpush2.xpose.msra.mxu0 0.0
    %607 = vmatprep.subr.mxu0 0.0
    %608 = vmatpush2.xpose.msra.mxu0 0.0
    %609 = vmatprep.subr.mxu0 0.0
    %610 = vmatpush2.xpose.msra.mxu0 0.0
    %611 = vmatprep.subr.mxu0 0.0
    %612 = vmatpush2.xpose.msra.mxu0 0.0
    %613 = vmatprep.subr.mxu0 0.0
    %614 = vmatpush2.xpose.msra.mxu0 0.0
    %615 = vmatprep.subr.mxu0 0.0
    %616 = vmatpush2.xpose.msra.mxu0 0.0
    %617 = vmatprep.subr.mxu0 0.0
    %618 = vmatpush2.xpose.msra.mxu0 0.0
    %619 = vmatprep.subr.mxu0 0.0
    %620 = vmatpush2.xpose.msra.mxu0 0.0
    %621 = vmatprep.subr.mxu0 0.0
    %622 = vmatpush2.xpose.msra.mxu0 0.0
    %623 = vmatprep.subr.mxu0 0.0
    %624 = vmatpush2.xpose.msra.mxu0 0.0
    %625 = vmatprep.subr.mxu0 0.0
    %626 = vmatpush2.xpose.msra.mxu0 0.0
    %627 = vmatprep.subr.mxu0 0.0
    %628 = vmatpush2.xpose.msra.mxu0 0.0
    %629 = vmatprep.subr.mxu0 0.0
    %630 = vmatpush2.xpose.msra.mxu0 0.0
    %631 = vmatprep.subr.mxu0 0.0
    %632 = vmatpush2.xpose.msra.mxu0 0.0
    %633 = vmatprep.subr.mxu0 0.0
    %634 = vmatpush2.xpose.msra.mxu0 0.0
    %635 = vmatprep.subr.mxu0 0.0
    %636 = vmatpush2.xpose.msra.mxu0 0.0
    %637 = vmatprep.mubr.f32.mxu0 0.0
    %638 = vmatmul.mubr.f32.gmra.mxu0 %v562
    %v639 = vpop.f32.mrf.mxu0
    %v640 = vadd.f32 %v49, %v639
    %v641 = vpop.f32.mrf.mxu0
    %642 = vmatprep.mubr.f32.mxu0 0.0
    %643 = vmatmul.mubr.f32.gmra.mxu0 %v565
    %v644 = vpop.f32.mrf.mxu0
    %v645 = vadd.f32 %v50, %v644
    %v646 = vpop.f32.mrf.mxu0
    %647 = vdwg.mxu0
    %vm648 = vcmask 130048
    %v649 = vsel %vm648, %v640, -inf
    %650 = vmax.xlane.f32.xlu0 %v649
    %v651 = vpop.xlane.xlu0 %650
    %v652 = vsel %vm648, %v645, -inf
    %653 = vmax.xlane.f32.xlu0 %v652
    %v654 = vpop.xlane.xlu0 %653
    %v655 = vsub.f32 %v640, %v651
    %v656 = vsub.f32 %v645, %v654
    %v657 = vmul.f32 %v655, 1.442695
    %v658 = vpow.pop %v657
    %v659 = vmul.f32 %v656, 1.442695
    %v660 = vpow.pop %v659
    %v661 = vsel %vm648, %v658, 0.0
    %662 = vadd.xlane.f32.xlu0 %v661
    %v663 = vpop.xlane.xlu0 %662
    %v664 = vsel %vm648, %v660, 0.0
    %665 = vadd.xlane.f32.xlu0 %v664
    %v666 = vpop.xlane.xlu0 %665
    %v667 = vrcp.pop %v663
    %v668 = vrcp.pop %v666
    %v669 = vmul.f32 %v658, %v667
    %v670 = vmul.f32 %v660, %v668
    %v672 = vsel %vm648, %v669, 0
    %v675 = vsel %vm648, %v670, 0
    %677 = vmatprep.subr.mxu0 0.0
    %678 = vmatpush1.msra.mxu0 0.0
    %679 = vmatprep.subr.mxu0 0.0
    %680 = vmatpush1.msra.mxu0 0.0
    %681 = vmatprep.subr.mxu0 0.0
    %682 = vmatpush1.msra.mxu0 0.0
    %683 = vmatprep.subr.mxu0 0.0
    %684 = vmatpush1.msra.mxu0 0.0
    %685 = vmatprep.subr.mxu0 0.0
    %686 = vmatpush1.msra.mxu0 0.0
    %687 = vmatprep.subr.mxu0 0.0
    %688 = vmatpush1.msra.mxu0 0.0
    %689 = vmatprep.subr.mxu0 0.0
    %690 = vmatpush1.msra.mxu0 0.0
    %691 = vmatprep.subr.mxu0 0.0
    %692 = vmatpush1.msra.mxu0 0.0
    %693 = vmatprep.subr.mxu0 0.0
    %694 = vmatpush1.msra.mxu0 0.0
    %695 = vmatprep.subr.mxu0 0.0
    %696 = vmatpush1.msra.mxu0 0.0
    %697 = vmatprep.subr.mxu0 0.0
    %698 = vmatpush1.msra.mxu0 0.0
    %699 = vmatprep.subr.mxu0 0.0
    %700 = vmatpush1.msra.mxu0 0.0
    %701 = vmatprep.subr.mxu0 0.0
    %702 = vmatpush1.msra.mxu0 0.0
    %703 = vmatprep.subr.mxu0 0.0
    %704 = vmatpush1.msra.mxu0 0.0
    %705 = vmatprep.subr.mxu0 0.0
    %706 = vmatpush1.msra.mxu0 %v557
    %707 = vmatprep.subr.mxu0 0.0
    %708 = vmatpush1.msra.mxu0 %v552
    %709 = vmatprep.subr.mxu0 0.0
    %710 = vmatpush2.msra.mxu0 0.0
    %711 = vmatprep.subr.mxu0 0.0
    %712 = vmatpush2.msra.mxu0 0.0
    %713 = vmatprep.subr.mxu0 0.0
    %714 = vmatpush2.msra.mxu0 0.0
    %715 = vmatprep.subr.mxu0 0.0
    %716 = vmatpush2.msra.mxu0 0.0
    %717 = vmatprep.subr.mxu0 0.0
    %718 = vmatpush2.msra.mxu0 0.0
    %719 = vmatprep.subr.mxu0 0.0
    %720 = vmatpush2.msra.mxu0 0.0
    %721 = vmatprep.subr.mxu0 0.0
    %722 = vmatpush2.msra.mxu0 0.0
    %723 = vmatprep.subr.mxu0 0.0
    %724 = vmatpush2.msra.mxu0 0.0
    %725 = vmatprep.subr.mxu0 0.0
    %726 = vmatpush2.msra.mxu0 0.0
    %727 = vmatprep.subr.mxu0 0.0
    %728 = vmatpush2.msra.mxu0 0.0
    %729 = vmatprep.subr.mxu0 0.0
    %730 = vmatpush2.msra.mxu0 0.0
    %731 = vmatprep.subr.mxu0 0.0
    %732 = vmatpush2.msra.mxu0 0.0
    %733 = vmatprep.subr.mxu0 0.0
    %734 = vmatpush2.msra.mxu0 0.0
    %735 = vmatprep.subr.mxu0 0.0
    %736 = vmatpush2.msra.mxu0 0.0
    %737 = vmatprep.subr.mxu0 0.0
    %738 = vmatpush2.msra.mxu0 0.0
    %739 = vmatprep.subr.mxu0 0.0
    %740 = vmatpush2.msra.mxu0 0.0
    %741 = vmatprep.mubr.f32.mxu0 0.0
    %742 = vmatmul.mubr.f32.gmra.mxu0 %v672
    %v743 = vpop.f32.mrf.mxu0
    %v744 = vadd.f32 0.0, %v743
    %v745 = vpop.f32.mrf.mxu0
    %746 = vmatprep.mubr.f32.mxu0 0.0
    %747 = vmatmul.mubr.f32.gmra.mxu0 %v675
    %v748 = vpop.f32.mrf.mxu0
    %v749 = vadd.f32 0.0, %v748
    %v750 = vpop.f32.mrf.mxu0
    %751 = vdwg.mxu0
    %v752 = vld [vmem:[%s7] sm:$0xff]
    %v753 = vld [vmem:[%s7 + $0x8] sm:$0xff]
    %v754 = vld [vmem:[%s7 + $0x10] sm:$0xff]
    %v755 = vld [vmem:[%s7 + $0x18] sm:$0xff]
    %v756 = vld [vmem:[%s7 + $0x20] sm:$0xff]
    %v757 = vld [vmem:[%s7 + $0x28] sm:$0xff]
    %v758 = vld [vmem:[%s7 + $0x30] sm:$0xff]
    %v759 = vld [vmem:[%s7 + $0x38] sm:$0xff]
    %v760 = vld [vmem:[%s8] sm:$0x1]
    %v762 = vlaneseq
    %v763 = vshrl.u32 %v762, 7
    %v764 = vsub.s32 0, %v763
    %v765 = vrot.slane %v760, %v764
    %v768 = vsel %vm560, %v744, 0
    %v771 = vsel %vm560, %v749, 0
    %773 = vmatprep.subr.mxu0 0.0
    %774 = vmatpush1.msra.mxu0 0.0
    %775 = vmatprep.subr.mxu0 0.0
    %776 = vmatpush1.msra.mxu0 0.0
    %777 = vmatprep.subr.mxu0 0.0
    %778 = vmatpush1.msra.mxu0 0.0
    %779 = vmatprep.subr.mxu0 0.0
    %780 = vmatpush1.msra.mxu0 0.0
    %781 = vmatprep.subr.mxu0 0.0
    %782 = vmatpush1.msra.mxu0 0.0
    %783 = vmatprep.subr.mxu0 0.0
    %784 = vmatpush1.msra.mxu0 0.0
    %785 = vmatprep.subr.mxu0 0.0
    %786 = vmatpush1.msra.mxu0 0.0
    %787 = vmatprep.subr.mxu0 0.0
    %788 = vmatpush1.msra.mxu0 0.0
    %789 = vmatprep.subr.mxu0 0.0
    %790 = vmatpush1.msra.mxu0 %v759
    %791 = vmatprep.subr.mxu0 0.0
    %792 = vmatpush1.msra.mxu0 %v758
    %793 = vmatprep.subr.mxu0 0.0
    %794 = vmatpush1.msra.mxu0 %v757
    %795 = vmatprep.subr.mxu0 0.0
    %796 = vmatpush1.msra.mxu0 %v756
    %797 = vmatprep.subr.mxu0 0.0
    %798 = vmatpush1.msra.mxu0 %v755
    %799 = vmatprep.subr.mxu0 0.0
    %800 = vmatpush1.msra.mxu0 %v754
    %801 = vmatprep.subr.mxu0 0.0
    %802 = vmatpush1.msra.mxu0 %v753
    %803 = vmatprep.subr.mxu0 0.0
    %804 = vmatpush1.msra.mxu0 %v752
    %805 = vmatprep.subr.mxu0 0.0
    %806 = vmatpush2.msra.mxu0 0.0
    %807 = vmatprep.subr.mxu0 0.0
    %808 = vmatpush2.msra.mxu0 0.0
    %809 = vmatprep.subr.mxu0 0.0
    %810 = vmatpush2.msra.mxu0 0.0
    %811 = vmatprep.subr.mxu0 0.0
    %812 = vmatpush2.msra.mxu0 0.0
    %813 = vmatprep.subr.mxu0 0.0
    %814 = vmatpush2.msra.mxu0 0.0
    %815 = vmatprep.subr.mxu0 0.0
    %816 = vmatpush2.msra.mxu0 0.0
    %817 = vmatprep.subr.mxu0 0.0
    %818 = vmatpush2.msra.mxu0 0.0
    %819 = vmatprep.subr.mxu0 0.0
    %820 = vmatpush2.msra.mxu0 0.0
    %821 = vmatprep.subr.mxu0 0.0
    %822 = vmatpush2.msra.mxu0 0.0
    %823 = vmatprep.subr.mxu0 0.0
    %824 = vmatpush2.msra.mxu0 0.0
    %825 = vmatprep.subr.mxu0 0.0
    %826 = vmatpush2.msra.mxu0 0.0
    %827 = vmatprep.subr.mxu0 0.0
    %828 = vmatpush2.msra.mxu0 0.0
    %829 = vmatprep.subr.mxu0 0.0
    %830 = vmatpush2.msra.mxu0 0.0
    %831 = vmatprep.subr.mxu0 0.0
    %832 = vmatpush2.msra.mxu0 0.0
    %833 = vmatprep.subr.mxu0 0.0
    %834 = vmatpush2.msra.mxu0 0.0
    %835 = vmatprep.subr.mxu0 0.0
    %836 = vmatpush2.msra.mxu0 0.0
    %837 = vmatprep.mubr.f32.mxu0 0.0
    %838 = vmatmul.mubr.f32.gmra.mxu0 %v768
    %v839 = vpop.f32.mrf.mxu0
    %v840 = vadd.f32 %v765, %v839
    %v841 = vpop.f32.mrf.mxu0
    %842 = vmatprep.mubr.f32.mxu0 0.0
    %843 = vmatmul.mubr.f32.gmra.mxu0 %v771
    %v844 = vpop.f32.mrf.mxu0
    %v845 = vadd.f32 %v765, %v844
    %v846 = vpop.f32.mrf.mxu0
    %847 = vdwg.mxu0
    %v848 = vadd.f32 %v179, %v840
    %v849 = vadd.f32 %v180, %v845
    %v850 = vsel %vm302, %v848, 0.0
    %851 = vadd.xlane.f32.xlu0 %v850
    %v852 = vpop.xlane.xlu0 %851
    %v853 = vsel %vm302, %v849, 0.0
    %854 = vadd.xlane.f32.xlu0 %v853
    %v855 = vpop.xlane.xlu0 %854
    %v856 = vmul.f32 %v848, %v848
    %v857 = vmul.f32 %v849, %v849
    %v858 = vsel %vm302, %v856, 0.0
    %859 = vadd.xlane.f32.xlu0 %v858
    %v860 = vpop.xlane.xlu0 %859
    %v861 = vsel %vm302, %v857, 0.0
    %862 = vadd.xlane.f32.xlu0 %v861
    %v863 = vpop.xlane.xlu0 %862
    %v864 = vmul.f32 %v852, 0.03125
    %v865 = vmul.f32 %v855, 0.03125
    %v866 = vmul.f32 %v852, %v864
    %v867 = vmul.f32 %v855, %v865
    %v868 = vsub.f32 %v860, %v866
    %v869 = vsub.f32 %v863, %v867
    %v870 = vmul.f32 %v868, 0.032258064
    %v871 = vmul.f32 %v869, 0.032258064
    %v872 = vmax.f32 %v870, 0.0
    %v873 = vmax.f32 %v871, 0.0
    %v874 = vrsqrt.pop %v872
    %v875 = vmul.f32 %v872, %v874
    %vm876 = vcmp.eq.f32.partialorder %v872, inf
    %v877 = vsel %vm876, %v872, %v875
    %vm878 = vcmp.eq.f32.partialorder %v872, 0.0
    %v879 = vand.u32 %v872, 2147483648
    %v880 = vsel %vm878, %v879, %v877
    %v881 = vrsqrt.pop %v873
    %v882 = vmul.f32 %v873, %v881
    %vm883 = vcmp.eq.f32.partialorder %v873, inf
    %v884 = vsel %vm883, %v873, %v882
    %vm885 = vcmp.eq.f32.partialorder %v873, 0.0
    %v886 = vand.u32 %v873, 2147483648
    %v887 = vsel %vm885, %v886, %v884
    %v888 = vadd.f32 %v880, 1e-06
    %v889 = vadd.f32 %v887, 1e-06
    %v890 = vsub.f32 %v848, %v864
    %v891 = vsub.f32 %v849, %v865
    %v893 = vlaneseq
    %v894 = vshrl.u32 %v893, 7
    %v895 = vsub.s32 0, %v894
    %v896 = vrot.slane %v34, %v895
    %v898 = vmul.f32 %v896, %v890
    %v899 = vmul.f32 %v896, %v891
    %v900 = vrcp.pop %v888
    %v901 = vrcp.pop %v889
    %v902 = vmul.f32 %v898, %v900
    %v903 = vmul.f32 %v899, %v901
    %v905 = vlaneseq
    %v906 = vshrl.u32 %v905, 7
    %v907 = vsub.s32 0, %v906
    %v908 = vrot.slane %v36, %v907
    %v910 = vadd.f32 %v902, %v908
    %v911 = vadd.f32 %v903, %v908
    %s912 = scalar_lea.vmem %s5, 288
    %v913 = vld [vmem:[%s912] sm:$0xff]
    %v914 = vld [vmem:[%s912 + $0x8] sm:$0xff]
    %v915 = vld [vmem:[%s912 + $0x10] sm:$0xff]
    %v916 = vld [vmem:[%s912 + $0x18] sm:$0xff]
    %s917 = scalar_lea.vmem %s6, 9
    %v918 = vld [vmem:[%s917] sm:$0x1]
    %v920 = vlaneseq
    %v921 = vshrl.u32 %v920, 7
    %v922 = vsub.s32 0, %v921
    %v923 = vrot.slane %v918, %v922
    %v926 = vsel %vm302, %v910, 0
    %v929 = vsel %vm302, %v911, 0
    %931 = vmatprep.subr.mxu0 0.0
    %932 = vmatpush1.msra.mxu0 0.0
    %933 = vmatprep.subr.mxu0 0.0
    %934 = vmatpush1.msra.mxu0 0.0
    %935 = vmatprep.subr.mxu0 0.0
    %936 = vmatpush1.msra.mxu0 0.0
    %937 = vmatprep.subr.mxu0 0.0
    %938 = vmatpush1.msra.mxu0 0.0
    %939 = vmatprep.subr.mxu0 0.0
    %940 = vmatpush1.msra.mxu0 0.0
    %941 = vmatprep.subr.mxu0 0.0
    %942 = vmatpush1.msra.mxu0 0.0
    %943 = vmatprep.subr.mxu0 0.0
    %944 = vmatpush1.msra.mxu0 0.0
    %945 = vmatprep.subr.mxu0 0.0
    %946 = vmatpush1.msra.mxu0 0.0
    %947 = vmatprep.subr.mxu0 0.0
    %948 = vmatpush1.msra.mxu0 0.0
    %949 = vmatprep.subr.mxu0 0.0
    %950 = vmatpush1.msra.mxu0 0.0
    %951 = vmatprep.subr.mxu0 0.0
    %952 = vmatpush1.msra.mxu0 0.0
    %953 = vmatprep.subr.mxu0 0.0
    %954 = vmatpush1.msra.mxu0 0.0
    %955 = vmatprep.subr.mxu0 0.0
    %956 = vmatpush1.msra.mxu0 %v916
    %957 = vmatprep.subr.mxu0 0.0
    %958 = vmatpush1.msra.mxu0 %v915
    %959 = vmatprep.subr.mxu0 0.0
    %960 = vmatpush1.msra.mxu0 %v914
    %961 = vmatprep.subr.mxu0 0.0
    %962 = vmatpush1.msra.mxu0 %v913
    %963 = vmatprep.subr.mxu0 0.0
    %964 = vmatpush2.msra.mxu0 0.0
    %965 = vmatprep.subr.mxu0 0.0
    %966 = vmatpush2.msra.mxu0 0.0
    %967 = vmatprep.subr.mxu0 0.0
    %968 = vmatpush2.msra.mxu0 0.0
    %969 = vmatprep.subr.mxu0 0.0
    %970 = vmatpush2.msra.mxu0 0.0
    %971 = vmatprep.subr.mxu0 0.0
    %972 = vmatpush2.msra.mxu0 0.0
    %973 = vmatprep.subr.mxu0 0.0
    %974 = vmatpush2.msra.mxu0 0.0
    %975 = vmatprep.subr.mxu0 0.0
    %976 = vmatpush2.msra.mxu0 0.0
    %977 = vmatprep.subr.mxu0 0.0
    %978 = vmatpush2.msra.mxu0 0.0
    %979 = vmatprep.subr.mxu0 0.0
    %980 = vmatpush2.msra.mxu0 0.0
    %981 = vmatprep.subr.mxu0 0.0
    %982 = vmatpush2.msra.mxu0 0.0
    %983 = vmatprep.subr.mxu0 0.0
    %984 = vmatpush2.msra.mxu0 0.0
    %985 = vmatprep.subr.mxu0 0.0
    %986 = vmatpush2.msra.mxu0 0.0
    %987 = vmatprep.subr.mxu0 0.0
    %988 = vmatpush2.msra.mxu0 0.0
    %989 = vmatprep.subr.mxu0 0.0
    %990 = vmatpush2.msra.mxu0 0.0
    %991 = vmatprep.subr.mxu0 0.0
    %992 = vmatpush2.msra.mxu0 0.0
    %993 = vmatprep.subr.mxu0 0.0
    %994 = vmatpush2.msra.mxu0 0.0
    %995 = vmatprep.mubr.f32.mxu0 0.0
    %996 = vmatmul.mubr.f32.gmra.mxu0 %v926
    %v997 = vpop.f32.mrf.mxu0
    %v998 = vadd.f32 %v923, %v997
    %v999 = vpop.f32.mrf.mxu0
    %1000 = vmatprep.mubr.f32.mxu0 0.0
    %1001 = vmatmul.mubr.f32.gmra.mxu0 %v929
    %v1002 = vpop.f32.mrf.mxu0
    %v1003 = vadd.f32 %v923, %v1002
    %v1004 = vpop.f32.mrf.mxu0
    %1005 = vdwg.mxu0
    %v1006 = vmax.f32 %v998, 0.0
    %v1007 = vmax.f32 %v1003, 0.0
    %s1008 = scalar_lea.vmem %s7, 192
    %v1009 = vld [vmem:[%s1008] sm:$0xff]
    %v1010 = vld [vmem:[%s1008 + $0x8] sm:$0xff]
    %v1011 = vld [vmem:[%s1008 + $0x10] sm:$0xff]
    %v1012 = vld [vmem:[%s1008 + $0x18] sm:$0xff]
    %v1013 = vld [vmem:[%s1008 + $0x20] sm:$0xff]
    %v1014 = vld [vmem:[%s1008 + $0x28] sm:$0xff]
    %v1015 = vld [vmem:[%s1008 + $0x30] sm:$0xff]
    %v1016 = vld [vmem:[%s1008 + $0x38] sm:$0xff]
    %s1017 = scalar_lea.vmem %s8, 3
    %v1018 = vld [vmem:[%s1017] sm:$0x1]
    %v1020 = vlaneseq
    %v1021 = vshrl.u32 %v1020, 7
    %v1022 = vsub.s32 0, %v1021
    %v1023 = vrot.slane %v1018, %v1022
    %v1026 = vsel %vm560, %v1006, 0
    %v1029 = vsel %vm560, %v1007, 0
    %1031 = vmatprep.subr.mxu0 0.0
    %1032 = vmatpush1.msra.mxu0 0.0
    %1033 = vmatprep.subr.mxu0 0.0
    %1034 = vmatpush1.msra.mxu0 0.0
    %1035 = vmatprep.subr.mxu0 0.0
    %1036 = vmatpush1.msra.mxu0 0.0
    %1037 = vmatprep.subr.mxu0 0.0
    %1038 = vmatpush1.msra.mxu0 0.0
    %1039 = vmatprep.subr.mxu0 0.0
    %1040 = vmatpush1.msra.mxu0 0.0
    %1041 = vmatprep.subr.mxu0 0.0
    %1042 = vmatpush1.msra.mxu0 0.0
    %1043 = vmatprep.subr.mxu0 0.0
    %1044 = vmatpush1.msra.mxu0 0.0
    %1045 = vmatprep.subr.mxu0 0.0
    %1046 = vmatpush1.msra.mxu0 0.0
    %1047 = vmatprep.subr.mxu0 0.0
    %1048 = vmatpush1.msra.mxu0 %v1016
    %1049 = vmatprep.subr.mxu0 0.0
    %1050 = vmatpush1.msra.mxu0 %v1015
    %1051 = vmatprep.subr.mxu0 0.0
    %1052 = vmatpush1.msra.mxu0 %v1014
    %1053 = vmatprep.subr.mxu0 0.0
    %1054 = vmatpush1.msra.mxu0 %v1013
    %1055 = vmatprep.subr.mxu0 0.0
    %1056 = vmatpush1.msra.mxu0 %v1012
    %1057 = vmatprep.subr.mxu0 0.0
    %1058 = vmatpush1.msra.mxu0 %v1011
    %1059 = vmatprep.subr.mxu0 0.0
    %1060 = vmatpush1.msra.mxu0 %v1010
    %1061 = vmatprep.subr.mxu0 0.0
    %1062 = vmatpush1.msra.mxu0 %v1009
    %1063 = vmatprep.subr.mxu0 0.0
    %1064 = vmatpush2.msra.mxu0 0.0
    %1065 = vmatprep.subr.mxu0 0.0
    %1066 = vmatpush2.msra.mxu0 0.0
    %1067 = vmatprep.subr.mxu0 0.0
    %1068 = vmatpush2.msra.mxu0 0.0
    %1069 = vmatprep.subr.mxu0 0.0
    %1070 = vmatpush2.msra.mxu0 0.0
    %1071 = vmatprep.subr.mxu0 0.0
    %1072 = vmatpush2.msra.mxu0 0.0
    %1073 = vmatprep.subr.mxu0 0.0
    %1074 = vmatpush2.msra.mxu0 0.0
    %1075 = vmatprep.subr.mxu0 0.0
    %1076 = vmatpush2.msra.mxu0 0.0
    %1077 = vmatprep.subr.mxu0 0.0
    %1078 = vmatpush2.msra.mxu0 0.0
    %1079 = vmatprep.subr.mxu0 0.0
    %1080 = vmatpush2.msra.mxu0 0.0
    %1081 = vmatprep.subr.mxu0 0.0
    %1082 = vmatpush2.msra.mxu0 0.0
    %1083 = vmatprep.subr.mxu0 0.0
    %1084 = vmatpush2.msra.mxu0 0.0
    %1085 = vmatprep.subr.mxu0 0.0
    %1086 = vmatpush2.msra.mxu0 0.0
    %1087 = vmatprep.subr.mxu0 0.0
    %1088 = vmatpush2.msra.mxu0 0.0
    %1089 = vmatprep.subr.mxu0 0.0
    %1090 = vmatpush2.msra.mxu0 0.0
    %1091 = vmatprep.subr.mxu0 0.0
    %1092 = vmatpush2.msra.mxu0 0.0
    %1093 = vmatprep.subr.mxu0 0.0
    %1094 = vmatpush2.msra.mxu0 0.0
    %1095 = vmatprep.mubr.f32.mxu0 0.0
    %1096 = vmatmul.mubr.f32.gmra.mxu0 %v1026
    %v1097 = vpop.f32.mrf.mxu0
    %v1098 = vadd.f32 %v1023, %v1097
    %v1099 = vpop.f32.mrf.mxu0
    %1100 = vmatprep.mubr.f32.mxu0 0.0
    %1101 = vmatmul.mubr.f32.gmra.mxu0 %v1029
    %v1102 = vpop.f32.mrf.mxu0
    %v1103 = vadd.f32 %v1023, %v1102
    %v1104 = vpop.f32.mrf.mxu0
    %1105 = vdwg.mxu0
    %v1106 = vadd.f32 %v910, %v1098
    %v1107 = vadd.f32 %v911, %v1103
    %v1108 = vsel %vm302, %v1106, 0.0
    %1109 = vadd.xlane.f32.xlu0 %v1108
    %v1110 = vpop.xlane.xlu0 %1109
    %v1111 = vsel %vm302, %v1107, 0.0
    %1112 = vadd.xlane.f32.xlu0 %v1111
    %v1113 = vpop.xlane.xlu0 %1112
    %v1114 = vmul.f32 %v1106, %v1106
    %v1115 = vmul.f32 %v1107, %v1107
    %v1116 = vsel %vm302, %v1114, 0.0
    %1117 = vadd.xlane.f32.xlu0 %v1116
    %v1118 = vpop.xlane.xlu0 %1117
    %v1119 = vsel %vm302, %v1115, 0.0
    %1120 = vadd.xlane.f32.xlu0 %v1119
    %v1121 = vpop.xlane.xlu0 %1120
    %v1122 = vmul.f32 %v1110, 0.03125
    %v1123 = vmul.f32 %v1113, 0.03125
    %v1124 = vmul.f32 %v1110, %v1122
    %v1125 = vmul.f32 %v1113, %v1123
    %v1126 = vsub.f32 %v1118, %v1124
    %v1127 = vsub.f32 %v1121, %v1125
    %v1128 = vmul.f32 %v1126, 0.032258064
    %v1129 = vmul.f32 %v1127, 0.032258064
    %v1130 = vmax.f32 %v1128, 0.0
    %v1131 = vmax.f32 %v1129, 0.0
    %v1132 = vrsqrt.pop %v1130
    %v1133 = vmul.f32 %v1130, %v1132
    %vm1134 = vcmp.eq.f32.partialorder %v1130, inf
    %v1135 = vsel %vm1134, %v1130, %v1133
    %vm1136 = vcmp.eq.f32.partialorder %v1130, 0.0
    %v1137 = vand.u32 %v1130, 2147483648
    %v1138 = vsel %vm1136, %v1137, %v1135
    %v1139 = vrsqrt.pop %v1131
    %v1140 = vmul.f32 %v1131, %v1139
    %vm1141 = vcmp.eq.f32.partialorder %v1131, inf
    %v1142 = vsel %vm1141, %v1131, %v1140
    %vm1143 = vcmp.eq.f32.partialorder %v1131, 0.0
    %v1144 = vand.u32 %v1131, 2147483648
    %v1145 = vsel %vm1143, %v1144, %v1142
    %v1146 = vadd.f32 %v1138, 1e-06
    %v1147 = vadd.f32 %v1145, 1e-06
    %v1148 = vsub.f32 %v1106, %v1122
    %v1149 = vsub.f32 %v1107, %v1123
    %v1150 = vmul.f32 %v896, %v1148
    %v1151 = vmul.f32 %v896, %v1149
    %v1152 = vrcp.pop %v1146
    %v1153 = vrcp.pop %v1147
    %v1154 = vmul.f32 %v1150, %v1152
    %v1155 = vmul.f32 %v1151, %v1153
    %v1156 = vadd.f32 %v1154, %v908
    %v1157 = vadd.f32 %v1155, %v908
    %v1159 = vsel %vm302, %v1156, 0
    %v1162 = vsel %vm302, %v1157, 0
    %1164 = vmatprep.subr.mxu0 0.0
    %1165 = vmatpush1.msra.mxu0 0.0
    %1166 = vmatprep.subr.mxu0 0.0
    %1167 = vmatpush1.msra.mxu0 0.0
    %1168 = vmatprep.subr.mxu0 0.0
    %1169 = vmatpush1.msra.mxu0 0.0
    %1170 = vmatprep.subr.mxu0 0.0
    %1171 = vmatpush1.msra.mxu0 0.0
    %1172 = vmatprep.subr.mxu0 0.0
    %1173 = vmatpush1.msra.mxu0 0.0
    %1174 = vmatprep.subr.mxu0 0.0
    %1175 = vmatpush1.msra.mxu0 0.0
    %1176 = vmatprep.subr.mxu0 0.0
    %1177 = vmatpush1.msra.mxu0 0.0
    %1178 = vmatprep.subr.mxu0 0.0
    %1179 = vmatpush1.msra.mxu0 0.0
    %1180 = vmatprep.subr.mxu0 0.0
    %1181 = vmatpush1.msra.mxu0 0.0
    %1182 = vmatprep.subr.mxu0 0.0
    %1183 = vmatpush1.msra.mxu0 0.0
    %1184 = vmatprep.subr.mxu0 0.0
    %1185 = vmatpush1.msra.mxu0 0.0
    %1186 = vmatprep.subr.mxu0 0.0
    %1187 = vmatpush1.msra.mxu0 0.0
    %1188 = vmatprep.subr.mxu0 0.0
    %1189 = vmatpush1.msra.mxu0 %v294
    %1190 = vmatprep.subr.mxu0 0.0
    %1191 = vmatpush1.msra.mxu0 %v293
    %1192 = vmatprep.subr.mxu0 0.0
    %1193 = vmatpush1.msra.mxu0 %v292
    %1194 = vmatprep.subr.mxu0 0.0
    %1195 = vmatpush1.msra.mxu0 %v291
    %1196 = vmatprep.subr.mxu0 0.0
    %1197 = vmatpush2.msra.mxu0 0.0
    %1198 = vmatprep.subr.mxu0 0.0
    %1199 = vmatpush2.msra.mxu0 0.0
    %1200 = vmatprep.subr.mxu0 0.0
    %1201 = vmatpush2.msra.mxu0 0.0
    %1202 = vmatprep.subr.mxu0 0.0
    %1203 = vmatpush2.msra.mxu0 0.0
    %1204 = vmatprep.subr.mxu0 0.0
    %1205 = vmatpush2.msra.mxu0 0.0
    %1206 = vmatprep.subr.mxu0 0.0
    %1207 = vmatpush2.msra.mxu0 0.0
    %1208 = vmatprep.subr.mxu0 0.0
    %1209 = vmatpush2.msra.mxu0 0.0
    %1210 = vmatprep.subr.mxu0 0.0
    %1211 = vmatpush2.msra.mxu0 0.0
    %1212 = vmatprep.subr.mxu0 0.0
    %1213 = vmatpush2.msra.mxu0 0.0
    %1214 = vmatprep.subr.mxu0 0.0
    %1215 = vmatpush2.msra.mxu0 0.0
    %1216 = vmatprep.subr.mxu0 0.0
    %1217 = vmatpush2.msra.mxu0 0.0
    %1218 = vmatprep.subr.mxu0 0.0
    %1219 = vmatpush2.msra.mxu0 0.0
    %1220 = vmatprep.subr.mxu0 0.0
    %1221 = vmatpush2.msra.mxu0 0.0
    %1222 = vmatprep.subr.mxu0 0.0
    %1223 = vmatpush2.msra.mxu0 0.0
    %1224 = vmatprep.subr.mxu0 0.0
    %1225 = vmatpush2.msra.mxu0 0.0
    %1226 = vmatprep.subr.mxu0 0.0
    %1227 = vmatpush2.msra.mxu0 0.0
    %1228 = vmatprep.mubr.f32.mxu0 0.0
    %1229 = vmatmul.mubr.f32.gmra.mxu0 %v1159
    %v1230 = vpop.f32.mrf.mxu0
    %v1231 = vadd.f32 %v300, %v1230
    %v1232 = vpop.f32.mrf.mxu0
    %1233 = vmatprep.mubr.f32.mxu0 0.0
    %1234 = vmatmul.mubr.f32.gmra.mxu0 %v1162
    %v1235 = vpop.f32.mrf.mxu0
    %v1236 = vadd.f32 %v300, %v1235
    %v1237 = vpop.f32.mrf.mxu0
    %1238 = vdwg.mxu0
    %1239 = vmatprep.subr.mxu0 0.0
    %1240 = vmatpush1.msra.mxu0 0.0
    %1241 = vmatprep.subr.mxu0 0.0
    %1242 = vmatpush1.msra.mxu0 0.0
    %1243 = vmatprep.subr.mxu0 0.0
    %1244 = vmatpush1.msra.mxu0 0.0
    %1245 = vmatprep.subr.mxu0 0.0
    %1246 = vmatpush1.msra.mxu0 0.0
    %1247 = vmatprep.subr.mxu0 0.0
    %1248 = vmatpush1.msra.mxu0 0.0
    %1249 = vmatprep.subr.mxu0 0.0
    %1250 = vmatpush1.msra.mxu0 0.0
    %1251 = vmatprep.subr.mxu0 0.0
    %1252 = vmatpush1.msra.mxu0 0.0
    %1253 = vmatprep.subr.mxu0 0.0
    %1254 = vmatpush1.msra.mxu0 0.0
    %1255 = vmatprep.subr.mxu0 0.0
    %1256 = vmatpush1.msra.mxu0 0.0
    %1257 = vmatprep.subr.mxu0 0.0
    %1258 = vmatpush1.msra.mxu0 0.0
    %1259 = vmatprep.subr.mxu0 0.0
    %1260 = vmatpush1.msra.mxu0 0.0
    %1261 = vmatprep.subr.mxu0 0.0
    %1262 = vmatpush1.msra.mxu0 0.0
    %1263 = vmatprep.subr.mxu0 0.0
    %1264 = vmatpush1.msra.mxu0 %v388
    %1265 = vmatprep.subr.mxu0 0.0
    %1266 = vmatpush1.msra.mxu0 %v387
    %1267 = vmatprep.subr.mxu0 0.0
    %1268 = vmatpush1.msra.mxu0 %v386
    %1269 = vmatprep.subr.mxu0 0.0
    %1270 = vmatpush1.msra.mxu0 %v385
    %1271 = vmatprep.subr.mxu0 0.0
    %1272 = vmatpush2.msra.mxu0 0.0
    %1273 = vmatprep.subr.mxu0 0.0
    %1274 = vmatpush2.msra.mxu0 0.0
    %1275 = vmatprep.subr.mxu0 0.0
    %1276 = vmatpush2.msra.mxu0 0.0
    %1277 = vmatprep.subr.mxu0 0.0
    %1278 = vmatpush2.msra.mxu0 0.0
    %1279 = vmatprep.subr.mxu0 0.0
    %1280 = vmatpush2.msra.mxu0 0.0
    %1281 = vmatprep.subr.mxu0 0.0
    %1282 = vmatpush2.msra.mxu0 0.0
    %1283 = vmatprep.subr.mxu0 0.0
    %1284 = vmatpush2.msra.mxu0 0.0
    %1285 = vmatprep.subr.mxu0 0.0
    %1286 = vmatpush2.msra.mxu0 0.0
    %1287 = vmatprep.subr.mxu0 0.0
    %1288 = vmatpush2.msra.mxu0 0.0
    %1289 = vmatprep.subr.mxu0 0.0
    %1290 = vmatpush2.msra.mxu0 0.0
    %1291 = vmatprep.subr.mxu0 0.0
    %1292 = vmatpush2.msra.mxu0 0.0
    %1293 = vmatprep.subr.mxu0 0.0
    %1294 = vmatpush2.msra.mxu0 0.0
    %1295 = vmatprep.subr.mxu0 0.0
    %1296 = vmatpush2.msra.mxu0 0.0
    %1297 = vmatprep.subr.mxu0 0.0
    %1298 = vmatpush2.msra.mxu0 0.0
    %1299 = vmatprep.subr.mxu0 0.0
    %1300 = vmatpush2.msra.mxu0 0.0
    %1301 = vmatprep.subr.mxu0 0.0
    %1302 = vmatpush2.msra.mxu0 0.0
    %1303 = vmatprep.mubr.f32.mxu0 0.0
    %1304 = vmatmul.mubr.f32.gmra.mxu0 %v1159
    %v1305 = vpop.f32.mrf.mxu0
    %v1306 = vadd.f32 %v395, %v1305
    %v1307 = vpop.f32.mrf.mxu0
    %1308 = vmatprep.mubr.f32.mxu0 0.0
    %1309 = vmatmul.mubr.f32.gmra.mxu0 %v1162
    %v1310 = vpop.f32.mrf.mxu0
    %v1311 = vadd.f32 %v395, %v1310
    %v1312 = vpop.f32.mrf.mxu0
    %1313 = vdwg.mxu0
    %1314 = vmatprep.subr.mxu0 0.0
    %1315 = vmatpush1.msra.mxu0 0.0
    %1316 = vmatprep.subr.mxu0 0.0
    %1317 = vmatpush1.msra.mxu0 0.0
    %1318 = vmatprep.subr.mxu0 0.0
    %1319 = vmatpush1.msra.mxu0 0.0
    %1320 = vmatprep.subr.mxu0 0.0
    %1321 = vmatpush1.msra.mxu0 0.0
    %1322 = vmatprep.subr.mxu0 0.0
    %1323 = vmatpush1.msra.mxu0 0.0
    %1324 = vmatprep.subr.mxu0 0.0
    %1325 = vmatpush1.msra.mxu0 0.0
    %1326 = vmatprep.subr.mxu0 0.0
    %1327 = vmatpush1.msra.mxu0 0.0
    %1328 = vmatprep.subr.mxu0 0.0
    %1329 = vmatpush1.msra.mxu0 0.0
    %1330 = vmatprep.subr.mxu0 0.0
    %1331 = vmatpush1.msra.mxu0 0.0
    %1332 = vmatprep.subr.mxu0 0.0
    %1333 = vmatpush1.msra.mxu0 0.0
    %1334 = vmatprep.subr.mxu0 0.0
    %1335 = vmatpush1.msra.mxu0 0.0
    %1336 = vmatprep.subr.mxu0 0.0
    %1337 = vmatpush1.msra.mxu0 0.0
    %1338 = vmatprep.subr.mxu0 0.0
    %1339 = vmatpush1.msra.mxu0 %v476
    %1340 = vmatprep.subr.mxu0 0.0
    %1341 = vmatpush1.msra.mxu0 %v475
    %1342 = vmatprep.subr.mxu0 0.0
    %1343 = vmatpush1.msra.mxu0 %v474
    %1344 = vmatprep.subr.mxu0 0.0
    %1345 = vmatpush1.msra.mxu0 %v473
    %1346 = vmatprep.subr.mxu0 0.0
    %1347 = vmatpush2.msra.mxu0 0.0
    %1348 = vmatprep.subr.mxu0 0.0
    %1349 = vmatpush2.msra.mxu0 0.0
    %1350 = vmatprep.subr.mxu0 0.0
    %1351 = vmatpush2.msra.mxu0 0.0
    %1352 = vmatprep.subr.mxu0 0.0
    %1353 = vmatpush2.msra.mxu0 0.0
    %1354 = vmatprep.subr.mxu0 0.0
    %1355 = vmatpush2.msra.mxu0 0.0
    %1356 = vmatprep.subr.mxu0 0.0
    %1357 = vmatpush2.msra.mxu0 0.0
    %1358 = vmatprep.subr.mxu0 0.0
    %1359 = vmatpush2.msra.mxu0 0.0
    %1360 = vmatprep.subr.mxu0 0.0
    %1361 = vmatpush2.msra.mxu0 0.0
    %1362 = vmatprep.subr.mxu0 0.0
    %1363 = vmatpush2.msra.mxu0 0.0
    %1364 = vmatprep.subr.mxu0 0.0
    %1365 = vmatpush2.msra.mxu0 0.0
    %1366 = vmatprep.subr.mxu0 0.0
    %1367 = vmatpush2.msra.mxu0 0.0
    %1368 = vmatprep.subr.mxu0 0.0
    %1369 = vmatpush2.msra.mxu0 0.0
    %1370 = vmatprep.subr.mxu0 0.0
    %1371 = vmatpush2.msra.mxu0 0.0
    %1372 = vmatprep.subr.mxu0 0.0
    %1373 = vmatpush2.msra.mxu0 0.0
    %1374 = vmatprep.subr.mxu0 0.0
    %1375 = vmatpush2.msra.mxu0 0.0
    %1376 = vmatprep.subr.mxu0 0.0
    %1377 = vmatpush2.msra.mxu0 0.0
    %1378 = vmatprep.mubr.f32.mxu0 0.0
    %1379 = vmatmul.mubr.f32.gmra.mxu0 %v1159
    %v1380 = vpop.f32.mrf.mxu0
    %v1381 = vadd.f32 %v483, %v1380
    %v1382 = vpop.f32.mrf.mxu0
    %1383 = vmatprep.mubr.f32.mxu0 0.0
    %1384 = vmatmul.mubr.f32.gmra.mxu0 %v1162
    %v1385 = vpop.f32.mrf.mxu0
    %v1386 = vadd.f32 %v483, %v1385
    %v1387 = vpop.f32.mrf.mxu0
    %1388 = vdwg.mxu0
    %v1390 = vsel %vm560, %v1231, 0
    %v1393 = vsel %vm560, %v1236, 0
    %v1396 = vsel %vm560, %v1306, 0
    %v1399 = vsel %vm560, %v1311, 0
    %1401 = vmatprep.subr.mxu0 0.0
    %1402 = vmatpush1.xpose.msra.mxu0 0.0
    %1403 = vmatprep.subr.mxu0 0.0
    %1404 = vmatpush1.xpose.msra.mxu0 0.0
    %1405 = vmatprep.subr.mxu0 0.0
    %1406 = vmatpush1.xpose.msra.mxu0 0.0
    %1407 = vmatprep.subr.mxu0 0.0
    %1408 = vmatpush1.xpose.msra.mxu0 0.0
    %1409 = vmatprep.subr.mxu0 0.0
    %1410 = vmatpush1.xpose.msra.mxu0 0.0
    %1411 = vmatprep.subr.mxu0 0.0
    %1412 = vmatpush1.xpose.msra.mxu0 0.0
    %1413 = vmatprep.subr.mxu0 0.0
    %1414 = vmatpush1.xpose.msra.mxu0 0.0
    %1415 = vmatprep.subr.mxu0 0.0
    %1416 = vmatpush1.xpose.msra.mxu0 0.0
    %1417 = vmatprep.subr.mxu0 0.0
    %1418 = vmatpush1.xpose.msra.mxu0 0.0
    %1419 = vmatprep.subr.mxu0 0.0
    %1420 = vmatpush1.xpose.msra.mxu0 0.0
    %1421 = vmatprep.subr.mxu0 0.0
    %1422 = vmatpush1.xpose.msra.mxu0 0.0
    %1423 = vmatprep.subr.mxu0 0.0
    %1424 = vmatpush1.xpose.msra.mxu0 0.0
    %1425 = vmatprep.subr.mxu0 0.0
    %1426 = vmatpush1.xpose.msra.mxu0 0.0
    %1427 = vmatprep.subr.mxu0 0.0
    %1428 = vmatpush1.xpose.msra.mxu0 0.0
    %1429 = vmatprep.subr.mxu0 0.0
    %1430 = vmatpush1.xpose.msra.mxu0 %v1399
    %1431 = vmatprep.subr.mxu0 0.0
    %1432 = vmatpush1.xpose.msra.mxu0 %v1396
    %1433 = vmatprep.subr.mxu0 0.0
    %1434 = vmatpush2.xpose.msra.mxu0 0.0
    %1435 = vmatprep.subr.mxu0 0.0
    %1436 = vmatpush2.xpose.msra.mxu0 0.0
    %1437 = vmatprep.subr.mxu0 0.0
    %1438 = vmatpush2.xpose.msra.mxu0 0.0
    %1439 = vmatprep.subr.mxu0 0.0
    %1440 = vmatpush2.xpose.msra.mxu0 0.0
    %1441 = vmatprep.subr.mxu0 0.0
    %1442 = vmatpush2.xpose.msra.mxu0 0.0
    %1443 = vmatprep.subr.mxu0 0.0
    %1444 = vmatpush2.xpose.msra.mxu0 0.0
    %1445 = vmatprep.subr.mxu0 0.0
    %1446 = vmatpush2.xpose.msra.mxu0 0.0
    %1447 = vmatprep.subr.mxu0 0.0
    %1448 = vmatpush2.xpose.msra.mxu0 0.0
    %1449 = vmatprep.subr.mxu0 0.0
    %1450 = vmatpush2.xpose.msra.mxu0 0.0
    %1451 = vmatprep.subr.mxu0 0.0
    %1452 = vmatpush2.xpose.msra.mxu0 0.0
    %1453 = vmatprep.subr.mxu0 0.0
    %1454 = vmatpush2.xpose.msra.mxu0 0.0
    %1455 = vmatprep.subr.mxu0 0.0
    %1456 = vmatpush2.xpose.msra.mxu0 0.0
    %1457 = vmatprep.subr.mxu0 0.0
    %1458 = vmatpush2.xpose.msra.mxu0 0.0
    %1459 = vmatprep.subr.mxu0 0.0
    %1460 = vmatpush2.xpose.msra.mxu0 0.0
    %1461 = vmatprep.subr.mxu0 0.0
    %1462 = vmatpush2.xpose.msra.mxu0 0.0
    %1463 = vmatprep.subr.mxu0 0.0
    %1464 = vmatpush2.xpose.msra.mxu0 0.0
    %1465 = vmatprep.mubr.f32.mxu0 0.0
    %1466 = vmatmul.mubr.f32.gmra.mxu0 %v1390
    %v1467 = vpop.f32.mrf.mxu0
    %v1468 = vadd.f32 %v49, %v1467
    %v1469 = vpop.f32.mrf.mxu0
    %1470 = vmatprep.mubr.f32.mxu0 0.0
    %1471 = vmatmul.mubr.f32.gmra.mxu0 %v1393
    %v1472 = vpop.f32.mrf.mxu0
    %v1473 = vadd.f32 %v50, %v1472
    %v1474 = vpop.f32.mrf.mxu0
    %1475 = vdwg.mxu0
    %v1476 = vsel %vm648, %v1468, -inf
    %1477 = vmax.xlane.f32.xlu0 %v1476
    %v1478 = vpop.xlane.xlu0 %1477
    %v1479 = vsel %vm648, %v1473, -inf
    %1480 = vmax.xlane.f32.xlu0 %v1479
    %v1481 = vpop.xlane.xlu0 %1480
    %v1482 = vsub.f32 %v1468, %v1478
    %v1483 = vsub.f32 %v1473, %v1481
    %v1484 = vmul.f32 %v1482, 1.442695
    %v1485 = vpow.pop %v1484
    %v1486 = vmul.f32 %v1483, 1.442695
    %v1487 = vpow.pop %v1486
    %v1488 = vsel %vm648, %v1485, 0.0
    %1489 = vadd.xlane.f32.xlu0 %v1488
    %v1490 = vpop.xlane.xlu0 %1489
    %v1491 = vsel %vm648, %v1487, 0.0
    %1492 = vadd.xlane.f32.xlu0 %v1491
    %v1493 = vpop.xlane.xlu0 %1492
    %v1494 = vrcp.pop %v1490
    %v1495 = vrcp.pop %v1493
    %v1496 = vmul.f32 %v1485, %v1494
    %v1497 = vmul.f32 %v1487, %v1495
    %v1499 = vsel %vm648, %v1496, 0
    %v1502 = vsel %vm648, %v1497, 0
    %1504 = vmatprep.subr.mxu0 0.0
    %1505 = vmatpush1.msra.mxu0 0.0
    %1506 = vmatprep.subr.mxu0 0.0
    %1507 = vmatpush1.msra.mxu0 0.0
    %1508 = vmatprep.subr.mxu0 0.0
    %1509 = vmatpush1.msra.mxu0 0.0
    %1510 = vmatprep.subr.mxu0 0.0
    %1511 = vmatpush1.msra.mxu0 0.0
    %1512 = vmatprep.subr.mxu0 0.0
    %1513 = vmatpush1.msra.mxu0 0.0
    %1514 = vmatprep.subr.mxu0 0.0
    %1515 = vmatpush1.msra.mxu0 0.0
    %1516 = vmatprep.subr.mxu0 0.0
    %1517 = vmatpush1.msra.mxu0 0.0
    %1518 = vmatprep.subr.mxu0 0.0
    %1519 = vmatpush1.msra.mxu0 0.0
    %1520 = vmatprep.subr.mxu0 0.0
    %1521 = vmatpush1.msra.mxu0 0.0
    %1522 = vmatprep.subr.mxu0 0.0
    %1523 = vmatpush1.msra.mxu0 0.0
    %1524 = vmatprep.subr.mxu0 0.0
    %1525 = vmatpush1.msra.mxu0 0.0
    %1526 = vmatprep.subr.mxu0 0.0
    %1527 = vmatpush1.msra.mxu0 0.0
    %1528 = vmatprep.subr.mxu0 0.0
    %1529 = vmatpush1.msra.mxu0 0.0
    %1530 = vmatprep.subr.mxu0 0.0
    %1531 = vmatpush1.msra.mxu0 0.0
    %1532 = vmatprep.subr.mxu0 0.0
    %1533 = vmatpush1.msra.mxu0 %v1386
    %1534 = vmatprep.subr.mxu0 0.0
    %1535 = vmatpush1.msra.mxu0 %v1381
    %1536 = vmatprep.subr.mxu0 0.0
    %1537 = vmatpush2.msra.mxu0 0.0
    %1538 = vmatprep.subr.mxu0 0.0
    %1539 = vmatpush2.msra.mxu0 0.0
    %1540 = vmatprep.subr.mxu0 0.0
    %1541 = vmatpush2.msra.mxu0 0.0
    %1542 = vmatprep.subr.mxu0 0.0
    %1543 = vmatpush2.msra.mxu0 0.0
    %1544 = vmatprep.subr.mxu0 0.0
    %1545 = vmatpush2.msra.mxu0 0.0
    %1546 = vmatprep.subr.mxu0 0.0
    %1547 = vmatpush2.msra.mxu0 0.0
    %1548 = vmatprep.subr.mxu0 0.0
    %1549 = vmatpush2.msra.mxu0 0.0
    %1550 = vmatprep.subr.mxu0 0.0
    %1551 = vmatpush2.msra.mxu0 0.0
    %1552 = vmatprep.subr.mxu0 0.0
    %1553 = vmatpush2.msra.mxu0 0.0
    %1554 = vmatprep.subr.mxu0 0.0
    %1555 = vmatpush2.msra.mxu0 0.0
    %1556 = vmatprep.subr.mxu0 0.0
    %1557 = vmatpush2.msra.mxu0 0.0
    %1558 = vmatprep.subr.mxu0 0.0
    %1559 = vmatpush2.msra.mxu0 0.0
    %1560 = vmatprep.subr.mxu0 0.0
    %1561 = vmatpush2.msra.mxu0 0.0
    %1562 = vmatprep.subr.mxu0 0.0
    %1563 = vmatpush2.msra.mxu0 0.0
    %1564 = vmatprep.subr.mxu0 0.0
    %1565 = vmatpush2.msra.mxu0 0.0
    %1566 = vmatprep.subr.mxu0 0.0
    %1567 = vmatpush2.msra.mxu0 0.0
    %1568 = vmatprep.mubr.f32.mxu0 0.0
    %1569 = vmatmul.mubr.f32.gmra.mxu0 %v1499
    %v1570 = vpop.f32.mrf.mxu0
    %v1571 = vadd.f32 0.0, %v1570
    %v1572 = vpop.f32.mrf.mxu0
    %1573 = vmatprep.mubr.f32.mxu0 0.0
    %1574 = vmatmul.mubr.f32.gmra.mxu0 %v1502
    %v1575 = vpop.f32.mrf.mxu0
    %v1576 = vadd.f32 0.0, %v1575
    %v1577 = vpop.f32.mrf.mxu0
    %1578 = vdwg.mxu0
    %v1580 = vsel %vm560, %v1571, 0
    %v1583 = vsel %vm560, %v1576, 0
    %1585 = vmatprep.subr.mxu0 0.0
    %1586 = vmatpush1.msra.mxu0 0.0
    %1587 = vmatprep.subr.mxu0 0.0
    %1588 = vmatpush1.msra.mxu0 0.0
    %1589 = vmatprep.subr.mxu0 0.0
    %1590 = vmatpush1.msra.mxu0 0.0
    %1591 = vmatprep.subr.mxu0 0.0
    %1592 = vmatpush1.msra.mxu0 0.0
    %1593 = vmatprep.subr.mxu0 0.0
    %1594 = vmatpush1.msra.mxu0 0.0
    %1595 = vmatprep.subr.mxu0 0.0
    %1596 = vmatpush1.msra.mxu0 0.0
    %1597 = vmatprep.subr.mxu0 0.0
    %1598 = vmatpush1.msra.mxu0 0.0
    %1599 = vmatprep.subr.mxu0 0.0
    %1600 = vmatpush1.msra.mxu0 0.0
    %1601 = vmatprep.subr.mxu0 0.0
    %1602 = vmatpush1.msra.mxu0 %v759
    %1603 = vmatprep.subr.mxu0 0.0
    %1604 = vmatpush1.msra.mxu0 %v758
    %1605 = vmatprep.subr.mxu0 0.0
    %1606 = vmatpush1.msra.mxu0 %v757
    %1607 = vmatprep.subr.mxu0 0.0
    %1608 = vmatpush1.msra.mxu0 %v756
    %1609 = vmatprep.subr.mxu0 0.0
    %1610 = vmatpush1.msra.mxu0 %v755
    %1611 = vmatprep.subr.mxu0 0.0
    %1612 = vmatpush1.msra.mxu0 %v754
    %1613 = vmatprep.subr.mxu0 0.0
    %1614 = vmatpush1.msra.mxu0 %v753
    %1615 = vmatprep.subr.mxu0 0.0
    %1616 = vmatpush1.msra.mxu0 %v752
    %1617 = vmatprep.subr.mxu0 0.0
    %1618 = vmatpush2.msra.mxu0 0.0
    %1619 = vmatprep.subr.mxu0 0.0
    %1620 = vmatpush2.msra.mxu0 0.0
    %1621 = vmatprep.subr.mxu0 0.0
    %1622 = vmatpush2.msra.mxu0 0.0
    %1623 = vmatprep.subr.mxu0 0.0
    %1624 = vmatpush2.msra.mxu0 0.0
    %1625 = vmatprep.subr.mxu0 0.0
    %1626 = vmatpush2.msra.mxu0 0.0
    %1627 = vmatprep.subr.mxu0 0.0
    %1628 = vmatpush2.msra.mxu0 0.0
    %1629 = vmatprep.subr.mxu0 0.0
    %1630 = vmatpush2.msra.mxu0 0.0
    %1631 = vmatprep.subr.mxu0 0.0
    %1632 = vmatpush2.msra.mxu0 0.0
    %1633 = vmatprep.subr.mxu0 0.0
    %1634 = vmatpush2.msra.mxu0 0.0
    %1635 = vmatprep.subr.mxu0 0.0
    %1636 = vmatpush2.msra.mxu0 0.0
    %1637 = vmatprep.subr.mxu0 0.0
    %1638 = vmatpush2.msra.mxu0 0.0
    %1639 = vmatprep.subr.mxu0 0.0
    %1640 = vmatpush2.msra.mxu0 0.0
    %1641 = vmatprep.subr.mxu0 0.0
    %1642 = vmatpush2.msra.mxu0 0.0
    %1643 = vmatprep.subr.mxu0 0.0
    %1644 = vmatpush2.msra.mxu0 0.0
    %1645 = vmatprep.subr.mxu0 0.0
    %1646 = vmatpush2.msra.mxu0 0.0
    %1647 = vmatprep.subr.mxu0 0.0
    %1648 = vmatpush2.msra.mxu0 0.0
    %1649 = vmatprep.mubr.f32.mxu0 0.0
    %1650 = vmatmul.mubr.f32.gmra.mxu0 %v1580
    %v1651 = vpop.f32.mrf.mxu0
    %v1652 = vadd.f32 %v765, %v1651
    %v1653 = vpop.f32.mrf.mxu0
    %1654 = vmatprep.mubr.f32.mxu0 0.0
    %1655 = vmatmul.mubr.f32.gmra.mxu0 %v1583
    %v1656 = vpop.f32.mrf.mxu0
    %v1657 = vadd.f32 %v765, %v1656
    %v1658 = vpop.f32.mrf.mxu0
    %1659 = vdwg.mxu0
    %v1660 = vadd.f32 %v1156, %v1652
    %v1661 = vadd.f32 %v1157, %v1657
    %v1662 = vsel %vm302, %v1660, 0.0
    %1663 = vadd.xlane.f32.xlu0 %v1662
    %v1664 = vpop.xlane.xlu0 %1663
    %v1665 = vsel %vm302, %v1661, 0.0
    %1666 = vadd.xlane.f32.xlu0 %v1665
    %v1667 = vpop.xlane.xlu0 %1666
    %v1668 = vmul.f32 %v1660, %v1660
    %v1669 = vmul.f32 %v1661, %v1661
    %v1670 = vsel %vm302, %v1668, 0.0
    %1671 = vadd.xlane.f32.xlu0 %v1670
    %v1672 = vpop.xlane.xlu0 %1671
    %v1673 = vsel %vm302, %v1669, 0.0
    %1674 = vadd.xlane.f32.xlu0 %v1673
    %v1675 = vpop.xlane.xlu0 %1674
    %v1676 = vmul.f32 %v1664, 0.03125
    %v1677 = vmul.f32 %v1667, 0.03125
    %v1678 = vmul.f32 %v1664, %v1676
    %v1679 = vmul.f32 %v1667, %v1677
    %v1680 = vsub.f32 %v1672, %v1678
    %v1681 = vsub.f32 %v1675, %v1679
    %v1682 = vmul.f32 %v1680, 0.032258064
    %v1683 = vmul.f32 %v1681, 0.032258064
    %v1684 = vmax.f32 %v1682, 0.0
    %v1685 = vmax.f32 %v1683, 0.0
    %v1686 = vrsqrt.pop %v1684
    %v1687 = vmul.f32 %v1684, %v1686
    %vm1688 = vcmp.eq.f32.partialorder %v1684, inf
    %v1689 = vsel %vm1688, %v1684, %v1687
    %vm1690 = vcmp.eq.f32.partialorder %v1684, 0.0
    %v1691 = vand.u32 %v1684, 2147483648
    %v1692 = vsel %vm1690, %v1691, %v1689
    %v1693 = vrsqrt.pop %v1685
    %v1694 = vmul.f32 %v1685, %v1693
    %vm1695 = vcmp.eq.f32.partialorder %v1685, inf
    %v1696 = vsel %vm1695, %v1685, %v1694
    %vm1697 = vcmp.eq.f32.partialorder %v1685, 0.0
    %v1698 = vand.u32 %v1685, 2147483648
    %v1699 = vsel %vm1697, %v1698, %v1696
    %v1700 = vadd.f32 %v1692, 1e-06
    %v1701 = vadd.f32 %v1699, 1e-06
    %v1702 = vsub.f32 %v1660, %v1676
    %v1703 = vsub.f32 %v1661, %v1677
    %v1704 = vmul.f32 %v896, %v1702
    %v1705 = vmul.f32 %v896, %v1703
    %v1706 = vrcp.pop %v1700
    %v1707 = vrcp.pop %v1701
    %v1708 = vmul.f32 %v1704, %v1706
    %v1709 = vmul.f32 %v1705, %v1707
    %v1710 = vadd.f32 %v1708, %v908
    %v1711 = vadd.f32 %v1709, %v908
    %v1713 = vsel %vm302, %v1710, 0
    %v1716 = vsel %vm302, %v1711, 0
    %1718 = vmatprep.subr.mxu0 0.0
    %1719 = vmatpush1.msra.mxu0 0.0
    %1720 = vmatprep.subr.mxu0 0.0
    %1721 = vmatpush1.msra.mxu0 0.0
    %1722 = vmatprep.subr.mxu0 0.0
    %1723 = vmatpush1.msra.mxu0 0.0
    %1724 = vmatprep.subr.mxu0 0.0
    %1725 = vmatpush1.msra.mxu0 0.0
    %1726 = vmatprep.subr.mxu0 0.0
    %1727 = vmatpush1.msra.mxu0 0.0
    %1728 = vmatprep.subr.mxu0 0.0
    %1729 = vmatpush1.msra.mxu0 0.0
    %1730 = vmatprep.subr.mxu0 0.0
    %1731 = vmatpush1.msra.mxu0 0.0
    %1732 = vmatprep.subr.mxu0 0.0
    %1733 = vmatpush1.msra.mxu0 0.0
    %1734 = vmatprep.subr.mxu0 0.0
    %1735 = vmatpush1.msra.mxu0 0.0
    %1736 = vmatprep.subr.mxu0 0.0
    %1737 = vmatpush1.msra.mxu0 0.0
    %1738 = vmatprep.subr.mxu0 0.0
    %1739 = vmatpush1.msra.mxu0 0.0
    %1740 = vmatprep.subr.mxu0 0.0
    %1741 = vmatpush1.msra.mxu0 0.0
    %1742 = vmatprep.subr.mxu0 0.0
    %1743 = vmatpush1.msra.mxu0 %v916
    %1744 = vmatprep.subr.mxu0 0.0
    %1745 = vmatpush1.msra.mxu0 %v915
    %1746 = vmatprep.subr.mxu0 0.0
    %1747 = vmatpush1.msra.mxu0 %v914
    %1748 = vmatprep.subr.mxu0 0.0
    %1749 = vmatpush1.msra.mxu0 %v913
    %1750 = vmatprep.subr.mxu0 0.0
    %1751 = vmatpush2.msra.mxu0 0.0
    %1752 = vmatprep.subr.mxu0 0.0
    %1753 = vmatpush2.msra.mxu0 0.0
    %1754 = vmatprep.subr.mxu0 0.0
    %1755 = vmatpush2.msra.mxu0 0.0
    %1756 = vmatprep.subr.mxu0 0.0
    %1757 = vmatpush2.msra.mxu0 0.0
    %1758 = vmatprep.subr.mxu0 0.0
    %1759 = vmatpush2.msra.mxu0 0.0
    %1760 = vmatprep.subr.mxu0 0.0
    %1761 = vmatpush2.msra.mxu0 0.0
    %1762 = vmatprep.subr.mxu0 0.0
    %1763 = vmatpush2.msra.mxu0 0.0
    %1764 = vmatprep.subr.mxu0 0.0
    %1765 = vmatpush2.msra.mxu0 0.0
    %1766 = vmatprep.subr.mxu0 0.0
    %1767 = vmatpush2.msra.mxu0 0.0
    %1768 = vmatprep.subr.mxu0 0.0
    %1769 = vmatpush2.msra.mxu0 0.0
    %1770 = vmatprep.subr.mxu0 0.0
    %1771 = vmatpush2.msra.mxu0 0.0
    %1772 = vmatprep.subr.mxu0 0.0
    %1773 = vmatpush2.msra.mxu0 0.0
    %1774 = vmatprep.subr.mxu0 0.0
    %1775 = vmatpush2.msra.mxu0 0.0
    %1776 = vmatprep.subr.mxu0 0.0
    %1777 = vmatpush2.msra.mxu0 0.0
    %1778 = vmatprep.subr.mxu0 0.0
    %1779 = vmatpush2.msra.mxu0 0.0
    %1780 = vmatprep.subr.mxu0 0.0
    %1781 = vmatpush2.msra.mxu0 0.0
    %1782 = vmatprep.mubr.f32.mxu0 0.0
    %1783 = vmatmul.mubr.f32.gmra.mxu0 %v1713
    %v1784 = vpop.f32.mrf.mxu0
    %v1785 = vadd.f32 %v923, %v1784
    %v1786 = vpop.f32.mrf.mxu0
    %1787 = vmatprep.mubr.f32.mxu0 0.0
    %1788 = vmatmul.mubr.f32.gmra.mxu0 %v1716
    %v1789 = vpop.f32.mrf.mxu0
    %v1790 = vadd.f32 %v923, %v1789
    %v1791 = vpop.f32.mrf.mxu0
    %1792 = vdwg.mxu0
    %v1793 = vmax.f32 %v1785, 0.0
    %v1794 = vmax.f32 %v1790, 0.0
    %v1796 = vsel %vm560, %v1793, 0
    %v1799 = vsel %vm560, %v1794, 0
    %1801 = vmatprep.subr.mxu0 0.0
    %1802 = vmatpush1.msra.mxu0 0.0
    %1803 = vmatprep.subr.mxu0 0.0
    %1804 = vmatpush1.msra.mxu0 0.0
    %1805 = vmatprep.subr.mxu0 0.0
    %1806 = vmatpush1.msra.mxu0 0.0
    %1807 = vmatprep.subr.mxu0 0.0
    %1808 = vmatpush1.msra.mxu0 0.0
    %1809 = vmatprep.subr.mxu0 0.0
    %1810 = vmatpush1.msra.mxu0 0.0
    %1811 = vmatprep.subr.mxu0 0.0
    %1812 = vmatpush1.msra.mxu0 0.0
    %1813 = vmatprep.subr.mxu0 0.0
    %1814 = vmatpush1.msra.mxu0 0.0
    %1815 = vmatprep.subr.mxu0 0.0
    %1816 = vmatpush1.msra.mxu0 0.0
    %1817 = vmatprep.subr.mxu0 0.0
    %1818 = vmatpush1.msra.mxu0 %v1016
    %1819 = vmatprep.subr.mxu0 0.0
    %1820 = vmatpush1.msra.mxu0 %v1015
    %1821 = vmatprep.subr.mxu0 0.0
    %1822 = vmatpush1.msra.mxu0 %v1014
    %1823 = vmatprep.subr.mxu0 0.0
    %1824 = vmatpush1.msra.mxu0 %v1013
    %1825 = vmatprep.subr.mxu0 0.0
    %1826 = vmatpush1.msra.mxu0 %v1012
    %1827 = vmatprep.subr.mxu0 0.0
    %1828 = vmatpush1.msra.mxu0 %v1011
    %1829 = vmatprep.subr.mxu0 0.0
    %1830 = vmatpush1.msra.mxu0 %v1010
    %1831 = vmatprep.subr.mxu0 0.0
    %1832 = vmatpush1.msra.mxu0 %v1009
    %1833 = vmatprep.subr.mxu0 0.0
    %1834 = vmatpush2.msra.mxu0 0.0
    %1835 = vmatprep.subr.mxu0 0.0
    %1836 = vmatpush2.msra.mxu0 0.0
    %1837 = vmatprep.subr.mxu0 0.0
    %1838 = vmatpush2.msra.mxu0 0.0
    %1839 = vmatprep.subr.mxu0 0.0
    %1840 = vmatpush2.msra.mxu0 0.0
    %1841 = vmatprep.subr.mxu0 0.0
    %1842 = vmatpush2.msra.mxu0 0.0
    %1843 = vmatprep.subr.mxu0 0.0
    %1844 = vmatpush2.msra.mxu0 0.0
    %1845 = vmatprep.subr.mxu0 0.0
    %1846 = vmatpush2.msra.mxu0 0.0
    %1847 = vmatprep.subr.mxu0 0.0
    %1848 = vmatpush2.msra.mxu0 0.0
    %1849 = vmatprep.subr.mxu0 0.0
    %1850 = vmatpush2.msra.mxu0 0.0
    %1851 = vmatprep.subr.mxu0 0.0
    %1852 = vmatpush2.msra.mxu0 0.0
    %1853 = vmatprep.subr.mxu0 0.0
    %1854 = vmatpush2.msra.mxu0 0.0
    %1855 = vmatprep.subr.mxu0 0.0
    %1856 = vmatpush2.msra.mxu0 0.0
    %1857 = vmatprep.subr.mxu0 0.0
    %1858 = vmatpush2.msra.mxu0 0.0
    %1859 = vmatprep.subr.mxu0 0.0
    %1860 = vmatpush2.msra.mxu0 0.0
    %1861 = vmatprep.subr.mxu0 0.0
    %1862 = vmatpush2.msra.mxu0 0.0
    %1863 = vmatprep.subr.mxu0 0.0
    %1864 = vmatpush2.msra.mxu0 0.0
    %1865 = vmatprep.mubr.f32.mxu0 0.0
    %1866 = vmatmul.mubr.f32.gmra.mxu0 %v1796
    %v1867 = vpop.f32.mrf.mxu0
    %v1868 = vadd.f32 %v1023, %v1867
    %v1869 = vpop.f32.mrf.mxu0
    %1870 = vmatprep.mubr.f32.mxu0 0.0
    %1871 = vmatmul.mubr.f32.gmra.mxu0 %v1799
    %v1872 = vpop.f32.mrf.mxu0
    %v1873 = vadd.f32 %v1023, %v1872
    %v1874 = vpop.f32.mrf.mxu0
    %1875 = vdwg.mxu0
    %v1876 = vadd.f32 %v1710, %v1868
    %v1877 = vadd.f32 %v1711, %v1873
    %v1878 = vsel %vm302, %v1876, 0.0
    %1879 = vadd.xlane.f32.xlu0 %v1878
    %v1880 = vpop.xlane.xlu0 %1879
    %v1881 = vsel %vm302, %v1877, 0.0
    %1882 = vadd.xlane.f32.xlu0 %v1881
    %v1883 = vpop.xlane.xlu0 %1882
    %v1884 = vmul.f32 %v1876, %v1876
    %v1885 = vmul.f32 %v1877, %v1877
    %v1886 = vsel %vm302, %v1884, 0.0
    %1887 = vadd.xlane.f32.xlu0 %v1886
    %v1888 = vpop.xlane.xlu0 %1887
    %v1889 = vsel %vm302, %v1885, 0.0
    %1890 = vadd.xlane.f32.xlu0 %v1889
    %v1891 = vpop.xlane.xlu0 %1890
    %v1892 = vmul.f32 %v1880, 0.03125
    %v1893 = vmul.f32 %v1883, 0.03125
    %v1894 = vmul.f32 %v1880, %v1892
    %v1895 = vmul.f32 %v1883, %v1893
    %v1896 = vsub.f32 %v1888, %v1894
    %v1897 = vsub.f32 %v1891, %v1895
    %v1898 = vmul.f32 %v1896, 0.032258064
    %v1899 = vmul.f32 %v1897, 0.032258064
    %v1900 = vmax.f32 %v1898, 0.0
    %v1901 = vmax.f32 %v1899, 0.0
    %v1902 = vrsqrt.pop %v1900
    %v1903 = vmul.f32 %v1900, %v1902
    %vm1904 = vcmp.eq.f32.partialorder %v1900, inf
    %v1905 = vsel %vm1904, %v1900, %v1903
    %vm1906 = vcmp.eq.f32.partialorder %v1900, 0.0
    %v1907 = vand.u32 %v1900, 2147483648
    %v1908 = vsel %vm1906, %v1907, %v1905
    %v1909 = vrsqrt.pop %v1901
    %v1910 = vmul.f32 %v1901, %v1909
    %vm1911 = vcmp.eq.f32.partialorder %v1901, inf
    %v1912 = vsel %vm1911, %v1901, %v1910
    %vm1913 = vcmp.eq.f32.partialorder %v1901, 0.0
    %v1914 = vand.u32 %v1901, 2147483648
    %v1915 = vsel %vm1913, %v1914, %v1912
    %v1916 = vadd.f32 %v1908, 1e-06
    %v1917 = vadd.f32 %v1915, 1e-06
    %v1918 = vsub.f32 %v1876, %v1892
    %v1919 = vsub.f32 %v1877, %v1893
    %v1920 = vmul.f32 %v896, %v1918
    %v1921 = vmul.f32 %v896, %v1919
    %v1922 = vrcp.pop %v1916
    %v1923 = vrcp.pop %v1917
    %v1924 = vmul.f32 %v1920, %v1922
    %v1925 = vmul.f32 %v1921, %v1923
    %v1926 = vadd.f32 %v1924, %v908
    %v1927 = vadd.f32 %v1925, %v908
    %s1928 = scalar_lea.vmem %s5, 96
    %v1929 = vld [vmem:[%s1928] sm:$0xff]
    %v1930 = vld [vmem:[%s1928 + $0x8] sm:$0xff]
    %v1931 = vld [vmem:[%s1928 + $0x10] sm:$0xff]
    %v1932 = vld [vmem:[%s1928 + $0x18] sm:$0xff]
    %s1933 = scalar_lea.vmem %s6, 3
    %v1934 = vld [vmem:[%s1933] sm:$0x1]
    %v1936 = vlaneseq
    %v1937 = vshrl.u32 %v1936, 7
    %v1938 = vsub.s32 0, %v1937
    %v1939 = vrot.slane %v1934, %v1938
    %v1942 = vsel %vm302, %v289, 0
    %v1945 = vsel %vm302, %v290, 0
    %1947 = vmatprep.subr.mxu0 0.0
    %1948 = vmatpush1.msra.mxu0 0.0
    %1949 = vmatprep.subr.mxu0 0.0
    %1950 = vmatpush1.msra.mxu0 0.0
    %1951 = vmatprep.subr.mxu0 0.0
    %1952 = vmatpush1.msra.mxu0 0.0
    %1953 = vmatprep.subr.mxu0 0.0
    %1954 = vmatpush1.msra.mxu0 0.0
    %1955 = vmatprep.subr.mxu0 0.0
    %1956 = vmatpush1.msra.mxu0 0.0
    %1957 = vmatprep.subr.mxu0 0.0
    %1958 = vmatpush1.msra.mxu0 0.0
    %1959 = vmatprep.subr.mxu0 0.0
    %1960 = vmatpush1.msra.mxu0 0.0
    %1961 = vmatprep.subr.mxu0 0.0
    %1962 = vmatpush1.msra.mxu0 0.0
    %1963 = vmatprep.subr.mxu0 0.0
    %1964 = vmatpush1.msra.mxu0 0.0
    %1965 = vmatprep.subr.mxu0 0.0
    %1966 = vmatpush1.msra.mxu0 0.0
    %1967 = vmatprep.subr.mxu0 0.0
    %1968 = vmatpush1.msra.mxu0 0.0
    %1969 = vmatprep.subr.mxu0 0.0
    %1970 = vmatpush1.msra.mxu0 0.0
    %1971 = vmatprep.subr.mxu0 0.0
    %1972 = vmatpush1.msra.mxu0 %v1932
    %1973 = vmatprep.subr.mxu0 0.0
    %1974 = vmatpush1.msra.mxu0 %v1931
    %1975 = vmatprep.subr.mxu0 0.0
    %1976 = vmatpush1.msra.mxu0 %v1930
    %1977 = vmatprep.subr.mxu0 0.0
    %1978 = vmatpush1.msra.mxu0 %v1929
    %1979 = vmatprep.subr.mxu0 0.0
    %1980 = vmatpush2.msra.mxu0 0.0
    %1981 = vmatprep.subr.mxu0 0.0
    %1982 = vmatpush2.msra.mxu0 0.0
    %1983 = vmatprep.subr.mxu0 0.0
    %1984 = vmatpush2.msra.mxu0 0.0
    %1985 = vmatprep.subr.mxu0 0.0
    %1986 = vmatpush2.msra.mxu0 0.0
    %1987 = vmatprep.subr.mxu0 0.0
    %1988 = vmatpush2.msra.mxu0 0.0
    %1989 = vmatprep.subr.mxu0 0.0
    %1990 = vmatpush2.msra.mxu0 0.0
    %1991 = vmatprep.subr.mxu0 0.0
    %1992 = vmatpush2.msra.mxu0 0.0
    %1993 = vmatprep.subr.mxu0 0.0
    %1994 = vmatpush2.msra.mxu0 0.0
    %1995 = vmatprep.subr.mxu0 0.0
    %1996 = vmatpush2.msra.mxu0 0.0
    %1997 = vmatprep.subr.mxu0 0.0
    %1998 = vmatpush2.msra.mxu0 0.0
    %1999 = vmatprep.subr.mxu0 0.0
    %2000 = vmatpush2.msra.mxu0 0.0
    %2001 = vmatprep.subr.mxu0 0.0
    %2002 = vmatpush2.msra.mxu0 0.0
    %2003 = vmatprep.subr.mxu0 0.0
    %2004 = vmatpush2.msra.mxu0 0.0
    %2005 = vmatprep.subr.mxu0 0.0
    %2006 = vmatpush2.msra.mxu0 0.0
    %2007 = vmatprep.subr.mxu0 0.0
    %2008 = vmatpush2.msra.mxu0 0.0
    %2009 = vmatprep.subr.mxu0 0.0
    %2010 = vmatpush2.msra.mxu0 0.0
    %2011 = vmatprep.mubr.f32.mxu0 0.0
    %2012 = vmatmul.mubr.f32.gmra.mxu0 %v1942
    %v2013 = vpop.f32.mrf.mxu0
    %v2014 = vadd.f32 %v1939, %v2013
    %v2015 = vpop.f32.mrf.mxu0
    %2016 = vmatprep.mubr.f32.mxu0 0.0
    %2017 = vmatmul.mubr.f32.gmra.mxu0 %v1945
    %v2018 = vpop.f32.mrf.mxu0
    %v2019 = vadd.f32 %v1939, %v2018
    %v2020 = vpop.f32.mrf.mxu0
    %2021 = vdwg.mxu0
    %s2022 = scalar_lea.vmem %s5, 128
    %v2023 = vld [vmem:[%s2022] sm:$0xff]
    %v2024 = vld [vmem:[%s2022 + $0x8] sm:$0xff]
    %v2025 = vld [vmem:[%s2022 + $0x10] sm:$0xff]
    %v2026 = vld [vmem:[%s2022 + $0x18] sm:$0xff]
    %s2027 = scalar_lea.vmem %s6, 4
    %v2028 = vld [vmem:[%s2027] sm:$0x1]
    %v2030 = vlaneseq
    %v2031 = vshrl.u32 %v2030, 7
    %v2032 = vsub.s32 0, %v2031
    %v2033 = vrot.slane %v2028, %v2032
    %2035 = vmatprep.subr.mxu0 0.0
    %2036 = vmatpush1.msra.mxu0 0.0
    %2037 = vmatprep.subr.mxu0 0.0
    %2038 = vmatpush1.msra.mxu0 0.0
    %2039 = vmatprep.subr.mxu0 0.0
    %2040 = vmatpush1.msra.mxu0 0.0
    %2041 = vmatprep.subr.mxu0 0.0
    %2042 = vmatpush1.msra.mxu0 0.0
    %2043 = vmatprep.subr.mxu0 0.0
    %2044 = vmatpush1.msra.mxu0 0.0
    %2045 = vmatprep.subr.mxu0 0.0
    %2046 = vmatpush1.msra.mxu0 0.0
    %2047 = vmatprep.subr.mxu0 0.0
    %2048 = vmatpush1.msra.mxu0 0.0
    %2049 = vmatprep.subr.mxu0 0.0
    %2050 = vmatpush1.msra.mxu0 0.0
    %2051 = vmatprep.subr.mxu0 0.0
    %2052 = vmatpush1.msra.mxu0 0.0
    %2053 = vmatprep.subr.mxu0 0.0
    %2054 = vmatpush1.msra.mxu0 0.0
    %2055 = vmatprep.subr.mxu0 0.0
    %2056 = vmatpush1.msra.mxu0 0.0
    %2057 = vmatprep.subr.mxu0 0.0
    %2058 = vmatpush1.msra.mxu0 0.0
    %2059 = vmatprep.subr.mxu0 0.0
    %2060 = vmatpush1.msra.mxu0 %v2026
    %2061 = vmatprep.subr.mxu0 0.0
    %2062 = vmatpush1.msra.mxu0 %v2025
    %2063 = vmatprep.subr.mxu0 0.0
    %2064 = vmatpush1.msra.mxu0 %v2024
    %2065 = vmatprep.subr.mxu0 0.0
    %2066 = vmatpush1.msra.mxu0 %v2023
    %2067 = vmatprep.subr.mxu0 0.0
    %2068 = vmatpush2.msra.mxu0 0.0
    %2069 = vmatprep.subr.mxu0 0.0
    %2070 = vmatpush2.msra.mxu0 0.0
    %2071 = vmatprep.subr.mxu0 0.0
    %2072 = vmatpush2.msra.mxu0 0.0
    %2073 = vmatprep.subr.mxu0 0.0
    %2074 = vmatpush2.msra.mxu0 0.0
    %2075 = vmatprep.subr.mxu0 0.0
    %2076 = vmatpush2.msra.mxu0 0.0
    %2077 = vmatprep.subr.mxu0 0.0
    %2078 = vmatpush2.msra.mxu0 0.0
    %2079 = vmatprep.subr.mxu0 0.0
    %2080 = vmatpush2.msra.mxu0 0.0
    %2081 = vmatprep.subr.mxu0 0.0
    %2082 = vmatpush2.msra.mxu0 0.0
    %2083 = vmatprep.subr.mxu0 0.0
    %2084 = vmatpush2.msra.mxu0 0.0
    %2085 = vmatprep.subr.mxu0 0.0
    %2086 = vmatpush2.msra.mxu0 0.0
    %2087 = vmatprep.subr.mxu0 0.0
    %2088 = vmatpush2.msra.mxu0 0.0
    %2089 = vmatprep.subr.mxu0 0.0
    %2090 = vmatpush2.msra.mxu0 0.0
    %2091 = vmatprep.subr.mxu0 0.0
    %2092 = vmatpush2.msra.mxu0 0.0
    %2093 = vmatprep.subr.mxu0 0.0
    %2094 = vmatpush2.msra.mxu0 0.0
    %2095 = vmatprep.subr.mxu0 0.0
    %2096 = vmatpush2.msra.mxu0 0.0
    %2097 = vmatprep.subr.mxu0 0.0
    %2098 = vmatpush2.msra.mxu0 0.0
    %2099 = vmatprep.mubr.f32.mxu0 0.0
    %2100 = vmatmul.mubr.f32.gmra.mxu0 %v1942
    %v2101 = vpop.f32.mrf.mxu0
    %v2102 = vadd.f32 %v2033, %v2101
    %v2103 = vpop.f32.mrf.mxu0
    %2104 = vmatprep.mubr.f32.mxu0 0.0
    %2105 = vmatmul.mubr.f32.gmra.mxu0 %v1945
    %v2106 = vpop.f32.mrf.mxu0
    %v2107 = vadd.f32 %v2033, %v2106
    %v2108 = vpop.f32.mrf.mxu0
    %2109 = vdwg.mxu0
    %s2110 = scalar_lea.vmem %s5, 160
    %v2111 = vld [vmem:[%s2110] sm:$0xff]
    %v2112 = vld [vmem:[%s2110 + $0x8] sm:$0xff]
    %v2113 = vld [vmem:[%s2110 + $0x10] sm:$0xff]
    %v2114 = vld [vmem:[%s2110 + $0x18] sm:$0xff]
    %s2115 = scalar_lea.vmem %s6, 5
    %v2116 = vld [vmem:[%s2115] sm:$0x1]
    %v2118 = vlaneseq
    %v2119 = vshrl.u32 %v2118, 7
    %v2120 = vsub.s32 0, %v2119
    %v2121 = vrot.slane %v2116, %v2120
    %2123 = vmatprep.subr.mxu0 0.0
    %2124 = vmatpush1.msra.mxu0 0.0
    %2125 = vmatprep.subr.mxu0 0.0
    %2126 = vmatpush1.msra.mxu0 0.0
    %2127 = vmatprep.subr.mxu0 0.0
    %2128 = vmatpush1.msra.mxu0 0.0
    %2129 = vmatprep.subr.mxu0 0.0
    %2130 = vmatpush1.msra.mxu0 0.0
    %2131 = vmatprep.subr.mxu0 0.0
    %2132 = vmatpush1.msra.mxu0 0.0
    %2133 = vmatprep.subr.mxu0 0.0
    %2134 = vmatpush1.msra.mxu0 0.0
    %2135 = vmatprep.subr.mxu0 0.0
    %2136 = vmatpush1.msra.mxu0 0.0
    %2137 = vmatprep.subr.mxu0 0.0
    %2138 = vmatpush1.msra.mxu0 0.0
    %2139 = vmatprep.subr.mxu0 0.0
    %2140 = vmatpush1.msra.mxu0 0.0
    %2141 = vmatprep.subr.mxu0 0.0
    %2142 = vmatpush1.msra.mxu0 0.0
    %2143 = vmatprep.subr.mxu0 0.0
    %2144 = vmatpush1.msra.mxu0 0.0
    %2145 = vmatprep.subr.mxu0 0.0
    %2146 = vmatpush1.msra.mxu0 0.0
    %2147 = vmatprep.subr.mxu0 0.0
    %2148 = vmatpush1.msra.mxu0 %v2114
    %2149 = vmatprep.subr.mxu0 0.0
    %2150 = vmatpush1.msra.mxu0 %v2113
    %2151 = vmatprep.subr.mxu0 0.0
    %2152 = vmatpush1.msra.mxu0 %v2112
    %2153 = vmatprep.subr.mxu0 0.0
    %2154 = vmatpush1.msra.mxu0 %v2111
    %2155 = vmatprep.subr.mxu0 0.0
    %2156 = vmatpush2.msra.mxu0 0.0
    %2157 = vmatprep.subr.mxu0 0.0
    %2158 = vmatpush2.msra.mxu0 0.0
    %2159 = vmatprep.subr.mxu0 0.0
    %2160 = vmatpush2.msra.mxu0 0.0
    %2161 = vmatprep.subr.mxu0 0.0
    %2162 = vmatpush2.msra.mxu0 0.0
    %2163 = vmatprep.subr.mxu0 0.0
    %2164 = vmatpush2.msra.mxu0 0.0
    %2165 = vmatprep.subr.mxu0 0.0
    %2166 = vmatpush2.msra.mxu0 0.0
    %2167 = vmatprep.subr.mxu0 0.0
    %2168 = vmatpush2.msra.mxu0 0.0
    %2169 = vmatprep.subr.mxu0 0.0
    %2170 = vmatpush2.msra.mxu0 0.0
    %2171 = vmatprep.subr.mxu0 0.0
    %2172 = vmatpush2.msra.mxu0 0.0
    %2173 = vmatprep.subr.mxu0 0.0
    %2174 = vmatpush2.msra.mxu0 0.0
    %2175 = vmatprep.subr.mxu0 0.0
    %2176 = vmatpush2.msra.mxu0 0.0
    %2177 = vmatprep.subr.mxu0 0.0
    %2178 = vmatpush2.msra.mxu0 0.0
    %2179 = vmatprep.subr.mxu0 0.0
    %2180 = vmatpush2.msra.mxu0 0.0
    %2181 = vmatprep.subr.mxu0 0.0
    %2182 = vmatpush2.msra.mxu0 0.0
    %2183 = vmatprep.subr.mxu0 0.0
    %2184 = vmatpush2.msra.mxu0 0.0
    %2185 = vmatprep.subr.mxu0 0.0
    %2186 = vmatpush2.msra.mxu0 0.0
    %2187 = vmatprep.mubr.f32.mxu0 0.0
    %2188 = vmatmul.mubr.f32.gmra.mxu0 %v1942
    %v2189 = vpop.f32.mrf.mxu0
    %v2190 = vadd.f32 %v2121, %v2189
    %v2191 = vpop.f32.mrf.mxu0
    %2192 = vmatprep.mubr.f32.mxu0 0.0
    %2193 = vmatmul.mubr.f32.gmra.mxu0 %v1945
    %v2194 = vpop.f32.mrf.mxu0
    %v2195 = vadd.f32 %v2121, %v2194
    %v2196 = vpop.f32.mrf.mxu0
    %2197 = vdwg.mxu0
    %v2199 = vsel %vm560, %v2014, 0
    %v2202 = vsel %vm560, %v2019, 0
    %v2205 = vsel %vm560, %v2102, 0
    %v2208 = vsel %vm560, %v2107, 0
    %2210 = vmatprep.subr.mxu0 0.0
    %2211 = vmatpush1.xpose.msra.mxu0 0.0
    %2212 = vmatprep.subr.mxu0 0.0
    %2213 = vmatpush1.xpose.msra.mxu0 0.0
    %2214 = vmatprep.subr.mxu0 0.0
    %2215 = vmatpush1.xpose.msra.mxu0 0.0
    %2216 = vmatprep.subr.mxu0 0.0
    %2217 = vmatpush1.xpose.msra.mxu0 0.0
    %2218 = vmatprep.subr.mxu0 0.0
    %2219 = vmatpush1.xpose.msra.mxu0 0.0
    %2220 = vmatprep.subr.mxu0 0.0
    %2221 = vmatpush1.xpose.msra.mxu0 0.0
    %2222 = vmatprep.subr.mxu0 0.0
    %2223 = vmatpush1.xpose.msra.mxu0 0.0
    %2224 = vmatprep.subr.mxu0 0.0
    %2225 = vmatpush1.xpose.msra.mxu0 0.0
    %2226 = vmatprep.subr.mxu0 0.0
    %2227 = vmatpush1.xpose.msra.mxu0 0.0
    %2228 = vmatprep.subr.mxu0 0.0
    %2229 = vmatpush1.xpose.msra.mxu0 0.0
    %2230 = vmatprep.subr.mxu0 0.0
    %2231 = vmatpush1.xpose.msra.mxu0 0.0
    %2232 = vmatprep.subr.mxu0 0.0
    %2233 = vmatpush1.xpose.msra.mxu0 0.0
    %2234 = vmatprep.subr.mxu0 0.0
    %2235 = vmatpush1.xpose.msra.mxu0 0.0
    %2236 = vmatprep.subr.mxu0 0.0
    %2237 = vmatpush1.xpose.msra.mxu0 0.0
    %2238 = vmatprep.subr.mxu0 0.0
    %2239 = vmatpush1.xpose.msra.mxu0 %v2208
    %2240 = vmatprep.subr.mxu0 0.0
    %2241 = vmatpush1.xpose.msra.mxu0 %v2205
    %2242 = vmatprep.subr.mxu0 0.0
    %2243 = vmatpush2.xpose.msra.mxu0 0.0
    %2244 = vmatprep.subr.mxu0 0.0
    %2245 = vmatpush2.xpose.msra.mxu0 0.0
    %2246 = vmatprep.subr.mxu0 0.0
    %2247 = vmatpush2.xpose.msra.mxu0 0.0
    %2248 = vmatprep.subr.mxu0 0.0
    %2249 = vmatpush2.xpose.msra.mxu0 0.0
    %2250 = vmatprep.subr.mxu0 0.0
    %2251 = vmatpush2.xpose.msra.mxu0 0.0
    %2252 = vmatprep.subr.mxu0 0.0
    %2253 = vmatpush2.xpose.msra.mxu0 0.0
    %2254 = vmatprep.subr.mxu0 0.0
    %2255 = vmatpush2.xpose.msra.mxu0 0.0
    %2256 = vmatprep.subr.mxu0 0.0
    %2257 = vmatpush2.xpose.msra.mxu0 0.0
    %2258 = vmatprep.subr.mxu0 0.0
    %2259 = vmatpush2.xpose.msra.mxu0 0.0
    %2260 = vmatprep.subr.mxu0 0.0
    %2261 = vmatpush2.xpose.msra.mxu0 0.0
    %2262 = vmatprep.subr.mxu0 0.0
    %2263 = vmatpush2.xpose.msra.mxu0 0.0
    %2264 = vmatprep.subr.mxu0 0.0
    %2265 = vmatpush2.xpose.msra.mxu0 0.0
    %2266 = vmatprep.subr.mxu0 0.0
    %2267 = vmatpush2.xpose.msra.mxu0 0.0
    %2268 = vmatprep.subr.mxu0 0.0
    %2269 = vmatpush2.xpose.msra.mxu0 0.0
    %2270 = vmatprep.subr.mxu0 0.0
    %2271 = vmatpush2.xpose.msra.mxu0 0.0
    %2272 = vmatprep.subr.mxu0 0.0
    %2273 = vmatpush2.xpose.msra.mxu0 0.0
    %2274 = vmatprep.mubr.f32.mxu0 0.0
    %2275 = vmatmul.mubr.f32.gmra.mxu0 %v2199
    %v2276 = vpop.f32.mrf.mxu0
    %v2277 = vadd.f32 %v68, %v2276
    %v2278 = vpop.f32.mrf.mxu0
    %2279 = vmatprep.mubr.f32.mxu0 0.0
    %2280 = vmatmul.mubr.f32.gmra.mxu0 %v2202
    %v2281 = vpop.f32.mrf.mxu0
    %v2282 = vadd.f32 %v69, %v2281
    %v2283 = vpop.f32.mrf.mxu0
    %2284 = vdwg.mxu0
    %v2285 = vsel %vm648, %v2277, -inf
    %2286 = vmax.xlane.f32.xlu0 %v2285
    %v2287 = vpop.xlane.xlu0 %2286
    %v2288 = vsel %vm648, %v2282, -inf
    %2289 = vmax.xlane.f32.xlu0 %v2288
    %v2290 = vpop.xlane.xlu0 %2289
    %v2291 = vsub.f32 %v2277, %v2287
    %v2292 = vsub.f32 %v2282, %v2290
    %v2293 = vmul.f32 %v2291, 1.442695
    %v2294 = vpow.pop %v2293
    %v2295 = vmul.f32 %v2292, 1.442695
    %v2296 = vpow.pop %v2295
    %v2297 = vsel %vm648, %v2294, 0.0
    %2298 = vadd.xlane.f32.xlu0 %v2297
    %v2299 = vpop.xlane.xlu0 %2298
    %v2300 = vsel %vm648, %v2296, 0.0
    %2301 = vadd.xlane.f32.xlu0 %v2300
    %v2302 = vpop.xlane.xlu0 %2301
    %v2303 = vrcp.pop %v2299
    %v2304 = vrcp.pop %v2302
    %v2305 = vmul.f32 %v2294, %v2303
    %v2306 = vmul.f32 %v2296, %v2304
    %v2308 = vsel %vm648, %v2305, 0
    %v2311 = vsel %vm648, %v2306, 0
    %2313 = vmatprep.subr.mxu0 0.0
    %2314 = vmatpush1.msra.mxu0 0.0
    %2315 = vmatprep.subr.mxu0 0.0
    %2316 = vmatpush1.msra.mxu0 0.0
    %2317 = vmatprep.subr.mxu0 0.0
    %2318 = vmatpush1.msra.mxu0 0.0
    %2319 = vmatprep.subr.mxu0 0.0
    %2320 = vmatpush1.msra.mxu0 0.0
    %2321 = vmatprep.subr.mxu0 0.0
    %2322 = vmatpush1.msra.mxu0 0.0
    %2323 = vmatprep.subr.mxu0 0.0
    %2324 = vmatpush1.msra.mxu0 0.0
    %2325 = vmatprep.subr.mxu0 0.0
    %2326 = vmatpush1.msra.mxu0 0.0
    %2327 = vmatprep.subr.mxu0 0.0
    %2328 = vmatpush1.msra.mxu0 0.0
    %2329 = vmatprep.subr.mxu0 0.0
    %2330 = vmatpush1.msra.mxu0 0.0
    %2331 = vmatprep.subr.mxu0 0.0
    %2332 = vmatpush1.msra.mxu0 0.0
    %2333 = vmatprep.subr.mxu0 0.0
    %2334 = vmatpush1.msra.mxu0 0.0
    %2335 = vmatprep.subr.mxu0 0.0
    %2336 = vmatpush1.msra.mxu0 0.0
    %2337 = vmatprep.subr.mxu0 0.0
    %2338 = vmatpush1.msra.mxu0 0.0
    %2339 = vmatprep.subr.mxu0 0.0
    %2340 = vmatpush1.msra.mxu0 0.0
    %2341 = vmatprep.subr.mxu0 0.0
    %2342 = vmatpush1.msra.mxu0 %v2195
    %2343 = vmatprep.subr.mxu0 0.0
    %2344 = vmatpush1.msra.mxu0 %v2190
    %2345 = vmatprep.subr.mxu0 0.0
    %2346 = vmatpush2.msra.mxu0 0.0
    %2347 = vmatprep.subr.mxu0 0.0
    %2348 = vmatpush2.msra.mxu0 0.0
    %2349 = vmatprep.subr.mxu0 0.0
    %2350 = vmatpush2.msra.mxu0 0.0
    %2351 = vmatprep.subr.mxu0 0.0
    %2352 = vmatpush2.msra.mxu0 0.0
    %2353 = vmatprep.subr.mxu0 0.0
    %2354 = vmatpush2.msra.mxu0 0.0
    %2355 = vmatprep.subr.mxu0 0.0
    %2356 = vmatpush2.msra.mxu0 0.0
    %2357 = vmatprep.subr.mxu0 0.0
    %2358 = vmatpush2.msra.mxu0 0.0
    %2359 = vmatprep.subr.mxu0 0.0
    %2360 = vmatpush2.msra.mxu0 0.0
    %2361 = vmatprep.subr.mxu0 0.0
    %2362 = vmatpush2.msra.mxu0 0.0
    %2363 = vmatprep.subr.mxu0 0.0
    %2364 = vmatpush2.msra.mxu0 0.0
    %2365 = vmatprep.subr.mxu0 0.0
    %2366 = vmatpush2.msra.mxu0 0.0
    %2367 = vmatprep.subr.mxu0 0.0
    %2368 = vmatpush2.msra.mxu0 0.0
    %2369 = vmatprep.subr.mxu0 0.0
    %2370 = vmatpush2.msra.mxu0 0.0
    %2371 = vmatprep.subr.mxu0 0.0
    %2372 = vmatpush2.msra.mxu0 0.0
    %2373 = vmatprep.subr.mxu0 0.0
    %2374 = vmatpush2.msra.mxu0 0.0
    %2375 = vmatprep.subr.mxu0 0.0
    %2376 = vmatpush2.msra.mxu0 0.0
    %2377 = vmatprep.mubr.f32.mxu0 0.0
    %2378 = vmatmul.mubr.f32.gmra.mxu0 %v2308
    %v2379 = vpop.f32.mrf.mxu0
    %v2380 = vadd.f32 0.0, %v2379
    %v2381 = vpop.f32.mrf.mxu0
    %2382 = vmatprep.mubr.f32.mxu0 0.0
    %2383 = vmatmul.mubr.f32.gmra.mxu0 %v2311
    %v2384 = vpop.f32.mrf.mxu0
    %v2385 = vadd.f32 0.0, %v2384
    %v2386 = vpop.f32.mrf.mxu0
    %2387 = vdwg.mxu0
    %s2388 = scalar_lea.vmem %s7, 64
    %v2389 = vld [vmem:[%s2388] sm:$0xff]
    %v2390 = vld [vmem:[%s2388 + $0x8] sm:$0xff]
    %v2391 = vld [vmem:[%s2388 + $0x10] sm:$0xff]
    %v2392 = vld [vmem:[%s2388 + $0x18] sm:$0xff]
    %v2393 = vld [vmem:[%s2388 + $0x20] sm:$0xff]
    %v2394 = vld [vmem:[%s2388 + $0x28] sm:$0xff]
    %v2395 = vld [vmem:[%s2388 + $0x30] sm:$0xff]
    %v2396 = vld [vmem:[%s2388 + $0x38] sm:$0xff]
    %s2397 = scalar_lea.vmem %s8, 1
    %v2398 = vld [vmem:[%s2397] sm:$0x1]
    %v2400 = vlaneseq
    %v2401 = vshrl.u32 %v2400, 7
    %v2402 = vsub.s32 0, %v2401
    %v2403 = vrot.slane %v2398, %v2402
    %v2406 = vsel %vm560, %v2380, 0
    %v2409 = vsel %vm560, %v2385, 0
    %2411 = vmatprep.subr.mxu0 0.0
    %2412 = vmatpush1.msra.mxu0 0.0
    %2413 = vmatprep.subr.mxu0 0.0
    %2414 = vmatpush1.msra.mxu0 0.0
    %2415 = vmatprep.subr.mxu0 0.0
    %2416 = vmatpush1.msra.mxu0 0.0
    %2417 = vmatprep.subr.mxu0 0.0
    %2418 = vmatpush1.msra.mxu0 0.0
    %2419 = vmatprep.subr.mxu0 0.0
    %2420 = vmatpush1.msra.mxu0 0.0
    %2421 = vmatprep.subr.mxu0 0.0
    %2422 = vmatpush1.msra.mxu0 0.0
    %2423 = vmatprep.subr.mxu0 0.0
    %2424 = vmatpush1.msra.mxu0 0.0
    %2425 = vmatprep.subr.mxu0 0.0
    %2426 = vmatpush1.msra.mxu0 0.0
    %2427 = vmatprep.subr.mxu0 0.0
    %2428 = vmatpush1.msra.mxu0 %v2396
    %2429 = vmatprep.subr.mxu0 0.0
    %2430 = vmatpush1.msra.mxu0 %v2395
    %2431 = vmatprep.subr.mxu0 0.0
    %2432 = vmatpush1.msra.mxu0 %v2394
    %2433 = vmatprep.subr.mxu0 0.0
    %2434 = vmatpush1.msra.mxu0 %v2393
    %2435 = vmatprep.subr.mxu0 0.0
    %2436 = vmatpush1.msra.mxu0 %v2392
    %2437 = vmatprep.subr.mxu0 0.0
    %2438 = vmatpush1.msra.mxu0 %v2391
    %2439 = vmatprep.subr.mxu0 0.0
    %2440 = vmatpush1.msra.mxu0 %v2390
    %2441 = vmatprep.subr.mxu0 0.0
    %2442 = vmatpush1.msra.mxu0 %v2389
    %2443 = vmatprep.subr.mxu0 0.0
    %2444 = vmatpush2.msra.mxu0 0.0
    %2445 = vmatprep.subr.mxu0 0.0
    %2446 = vmatpush2.msra.mxu0 0.0
    %2447 = vmatprep.subr.mxu0 0.0
    %2448 = vmatpush2.msra.mxu0 0.0
    %2449 = vmatprep.subr.mxu0 0.0
    %2450 = vmatpush2.msra.mxu0 0.0
    %2451 = vmatprep.subr.mxu0 0.0
    %2452 = vmatpush2.msra.mxu0 0.0
    %2453 = vmatprep.subr.mxu0 0.0
    %2454 = vmatpush2.msra.mxu0 0.0
    %2455 = vmatprep.subr.mxu0 0.0
    %2456 = vmatpush2.msra.mxu0 0.0
    %2457 = vmatprep.subr.mxu0 0.0
    %2458 = vmatpush2.msra.mxu0 0.0
    %2459 = vmatprep.subr.mxu0 0.0
    %2460 = vmatpush2.msra.mxu0 0.0
    %2461 = vmatprep.subr.mxu0 0.0
    %2462 = vmatpush2.msra.mxu0 0.0
    %2463 = vmatprep.subr.mxu0 0.0
    %2464 = vmatpush2.msra.mxu0 0.0
    %2465 = vmatprep.subr.mxu0 0.0
    %2466 = vmatpush2.msra.mxu0 0.0
    %2467 = vmatprep.subr.mxu0 0.0
    %2468 = vmatpush2.msra.mxu0 0.0
    %2469 = vmatprep.subr.mxu0 0.0
    %2470 = vmatpush2.msra.mxu0 0.0
    %2471 = vmatprep.subr.mxu0 0.0
    %2472 = vmatpush2.msra.mxu0 0.0
    %2473 = vmatprep.subr.mxu0 0.0
    %2474 = vmatpush2.msra.mxu0 0.0
    %2475 = vmatprep.mubr.f32.mxu0 0.0
    %2476 = vmatmul.mubr.f32.gmra.mxu0 %v2406
    %v2477 = vpop.f32.mrf.mxu0
    %v2478 = vadd.f32 %v2403, %v2477
    %v2479 = vpop.f32.mrf.mxu0
    %2480 = vmatprep.mubr.f32.mxu0 0.0
    %2481 = vmatmul.mubr.f32.gmra.mxu0 %v2409
    %v2482 = vpop.f32.mrf.mxu0
    %v2483 = vadd.f32 %v2403, %v2482
    %v2484 = vpop.f32.mrf.mxu0
    %2485 = vdwg.mxu0
    %v2486 = vadd.f32 %v289, %v2478
    %v2487 = vadd.f32 %v290, %v2483
    %v2488 = vsel %vm302, %v2486, 0.0
    %2489 = vadd.xlane.f32.xlu0 %v2488
    %v2490 = vpop.xlane.xlu0 %2489
    %v2491 = vsel %vm302, %v2487, 0.0
    %2492 = vadd.xlane.f32.xlu0 %v2491
    %v2493 = vpop.xlane.xlu0 %2492
    %v2494 = vmul.f32 %v2486, %v2486
    %v2495 = vmul.f32 %v2487, %v2487
    %v2496 = vsel %vm302, %v2494, 0.0
    %2497 = vadd.xlane.f32.xlu0 %v2496
    %v2498 = vpop.xlane.xlu0 %2497
    %v2499 = vsel %vm302, %v2495, 0.0
    %2500 = vadd.xlane.f32.xlu0 %v2499
    %v2501 = vpop.xlane.xlu0 %2500
    %v2502 = vmul.f32 %v2490, 0.03125
    %v2503 = vmul.f32 %v2493, 0.03125
    %v2504 = vmul.f32 %v2490, %v2502
    %v2505 = vmul.f32 %v2493, %v2503
    %v2506 = vsub.f32 %v2498, %v2504
    %v2507 = vsub.f32 %v2501, %v2505
    %v2508 = vmul.f32 %v2506, 0.032258064
    %v2509 = vmul.f32 %v2507, 0.032258064
    %v2510 = vmax.f32 %v2508, 0.0
    %v2511 = vmax.f32 %v2509, 0.0
    %v2512 = vrsqrt.pop %v2510
    %v2513 = vmul.f32 %v2510, %v2512
    %vm2514 = vcmp.eq.f32.partialorder %v2510, inf
    %v2515 = vsel %vm2514, %v2510, %v2513
    %vm2516 = vcmp.eq.f32.partialorder %v2510, 0.0
    %v2517 = vand.u32 %v2510, 2147483648
    %v2518 = vsel %vm2516, %v2517, %v2515
    %v2519 = vrsqrt.pop %v2511
    %v2520 = vmul.f32 %v2511, %v2519
    %vm2521 = vcmp.eq.f32.partialorder %v2511, inf
    %v2522 = vsel %vm2521, %v2511, %v2520
    %vm2523 = vcmp.eq.f32.partialorder %v2511, 0.0
    %v2524 = vand.u32 %v2511, 2147483648
    %v2525 = vsel %vm2523, %v2524, %v2522
    %v2526 = vadd.f32 %v2518, 1e-06
    %v2527 = vadd.f32 %v2525, 1e-06
    %v2528 = vsub.f32 %v2486, %v2502
    %v2529 = vsub.f32 %v2487, %v2503
    %v2530 = vmul.f32 %v896, %v2528
    %v2531 = vmul.f32 %v896, %v2529
    %v2532 = vrcp.pop %v2526
    %v2533 = vrcp.pop %v2527
    %v2534 = vmul.f32 %v2530, %v2532
    %v2535 = vmul.f32 %v2531, %v2533
    %v2536 = vadd.f32 %v2534, %v908
    %v2537 = vadd.f32 %v2535, %v908
    %s2538 = scalar_lea.vmem %s5, 192
    %v2539 = vld [vmem:[%s2538] sm:$0xff]
    %v2540 = vld [vmem:[%s2538 + $0x8] sm:$0xff]
    %v2541 = vld [vmem:[%s2538 + $0x10] sm:$0xff]
    %v2542 = vld [vmem:[%s2538 + $0x18] sm:$0xff]
    %s2543 = scalar_lea.vmem %s6, 6
    %v2544 = vld [vmem:[%s2543] sm:$0x1]
    %v2546 = vlaneseq
    %v2547 = vshrl.u32 %v2546, 7
    %v2548 = vsub.s32 0, %v2547
    %v2549 = vrot.slane %v2544, %v2548
    %v2552 = vsel %vm302, %v2536, 0
    %v2555 = vsel %vm302, %v2537, 0
    %2557 = vmatprep.subr.mxu0 0.0
    %2558 = vmatpush1.msra.mxu0 0.0
    %2559 = vmatprep.subr.mxu0 0.0
    %2560 = vmatpush1.msra.mxu0 0.0
    %2561 = vmatprep.subr.mxu0 0.0
    %2562 = vmatpush1.msra.mxu0 0.0
    %2563 = vmatprep.subr.mxu0 0.0
    %2564 = vmatpush1.msra.mxu0 0.0
    %2565 = vmatprep.subr.mxu0 0.0
    %2566 = vmatpush1.msra.mxu0 0.0
    %2567 = vmatprep.subr.mxu0 0.0
    %2568 = vmatpush1.msra.mxu0 0.0
    %2569 = vmatprep.subr.mxu0 0.0
    %2570 = vmatpush1.msra.mxu0 0.0
    %2571 = vmatprep.subr.mxu0 0.0
    %2572 = vmatpush1.msra.mxu0 0.0
    %2573 = vmatprep.subr.mxu0 0.0
    %2574 = vmatpush1.msra.mxu0 0.0
    %2575 = vmatprep.subr.mxu0 0.0
    %2576 = vmatpush1.msra.mxu0 0.0
    %2577 = vmatprep.subr.mxu0 0.0
    %2578 = vmatpush1.msra.mxu0 0.0
    %2579 = vmatprep.subr.mxu0 0.0
    %2580 = vmatpush1.msra.mxu0 0.0
    %2581 = vmatprep.subr.mxu0 0.0
    %2582 = vmatpush1.msra.mxu0 %v2542
    %2583 = vmatprep.subr.mxu0 0.0
    %2584 = vmatpush1.msra.mxu0 %v2541
    %2585 = vmatprep.subr.mxu0 0.0
    %2586 = vmatpush1.msra.mxu0 %v2540
    %2587 = vmatprep.subr.mxu0 0.0
    %2588 = vmatpush1.msra.mxu0 %v2539
    %2589 = vmatprep.subr.mxu0 0.0
    %2590 = vmatpush2.msra.mxu0 0.0
    %2591 = vmatprep.subr.mxu0 0.0
    %2592 = vmatpush2.msra.mxu0 0.0
    %2593 = vmatprep.subr.mxu0 0.0
    %2594 = vmatpush2.msra.mxu0 0.0
    %2595 = vmatprep.subr.mxu0 0.0
    %2596 = vmatpush2.msra.mxu0 0.0
    %2597 = vmatprep.subr.mxu0 0.0
    %2598 = vmatpush2.msra.mxu0 0.0
    %2599 = vmatprep.subr.mxu0 0.0
    %2600 = vmatpush2.msra.mxu0 0.0
    %2601 = vmatprep.subr.mxu0 0.0
    %2602 = vmatpush2.msra.mxu0 0.0
    %2603 = vmatprep.subr.mxu0 0.0
    %2604 = vmatpush2.msra.mxu0 0.0
    %2605 = vmatprep.subr.mxu0 0.0
    %2606 = vmatpush2.msra.mxu0 0.0
    %2607 = vmatprep.subr.mxu0 0.0
    %2608 = vmatpush2.msra.mxu0 0.0
    %2609 = vmatprep.subr.mxu0 0.0
    %2610 = vmatpush2.msra.mxu0 0.0
    %2611 = vmatprep.subr.mxu0 0.0
    %2612 = vmatpush2.msra.mxu0 0.0
    %2613 = vmatprep.subr.mxu0 0.0
    %2614 = vmatpush2.msra.mxu0 0.0
    %2615 = vmatprep.subr.mxu0 0.0
    %2616 = vmatpush2.msra.mxu0 0.0
    %2617 = vmatprep.subr.mxu0 0.0
    %2618 = vmatpush2.msra.mxu0 0.0
    %2619 = vmatprep.subr.mxu0 0.0
    %2620 = vmatpush2.msra.mxu0 0.0
    %2621 = vmatprep.mubr.f32.mxu0 0.0
    %2622 = vmatmul.mubr.f32.gmra.mxu0 %v2552
    %v2623 = vpop.f32.mrf.mxu0
    %v2624 = vadd.f32 %v2549, %v2623
    %v2625 = vpop.f32.mrf.mxu0
    %2626 = vmatprep.mubr.f32.mxu0 0.0
    %2627 = vmatmul.mubr.f32.gmra.mxu0 %v2555
    %v2628 = vpop.f32.mrf.mxu0
    %v2629 = vadd.f32 %v2549, %v2628
    %v2630 = vpop.f32.mrf.mxu0
    %2631 = vdwg.mxu0
    %s2632 = scalar_lea.vmem %s5, 224
    %v2633 = vld [vmem:[%s2632] sm:$0xff]
    %v2634 = vld [vmem:[%s2632 + $0x8] sm:$0xff]
    %v2635 = vld [vmem:[%s2632 + $0x10] sm:$0xff]
    %v2636 = vld [vmem:[%s2632 + $0x18] sm:$0xff]
    %s2637 = scalar_lea.vmem %s6, 7
    %v2638 = vld [vmem:[%s2637] sm:$0x1]
    %v2640 = vlaneseq
    %v2641 = vshrl.u32 %v2640, 7
    %v2642 = vsub.s32 0, %v2641
    %v2643 = vrot.slane %v2638, %v2642
    %v2646 = vsel %vm302, %v1926, 0
    %v2649 = vsel %vm302, %v1927, 0
    %2651 = vmatprep.subr.mxu0 0.0
    %2652 = vmatpush1.msra.mxu0 0.0
    %2653 = vmatprep.subr.mxu0 0.0
    %2654 = vmatpush1.msra.mxu0 0.0
    %2655 = vmatprep.subr.mxu0 0.0
    %2656 = vmatpush1.msra.mxu0 0.0
    %2657 = vmatprep.subr.mxu0 0.0
    %2658 = vmatpush1.msra.mxu0 0.0
    %2659 = vmatprep.subr.mxu0 0.0
    %2660 = vmatpush1.msra.mxu0 0.0
    %2661 = vmatprep.subr.mxu0 0.0
    %2662 = vmatpush1.msra.mxu0 0.0
    %2663 = vmatprep.subr.mxu0 0.0
    %2664 = vmatpush1.msra.mxu0 0.0
    %2665 = vmatprep.subr.mxu0 0.0
    %2666 = vmatpush1.msra.mxu0 0.0
    %2667 = vmatprep.subr.mxu0 0.0
    %2668 = vmatpush1.msra.mxu0 0.0
    %2669 = vmatprep.subr.mxu0 0.0
    %2670 = vmatpush1.msra.mxu0 0.0
    %2671 = vmatprep.subr.mxu0 0.0
    %2672 = vmatpush1.msra.mxu0 0.0
    %2673 = vmatprep.subr.mxu0 0.0
    %2674 = vmatpush1.msra.mxu0 0.0
    %2675 = vmatprep.subr.mxu0 0.0
    %2676 = vmatpush1.msra.mxu0 %v2636
    %2677 = vmatprep.subr.mxu0 0.0
    %2678 = vmatpush1.msra.mxu0 %v2635
    %2679 = vmatprep.subr.mxu0 0.0
    %2680 = vmatpush1.msra.mxu0 %v2634
    %2681 = vmatprep.subr.mxu0 0.0
    %2682 = vmatpush1.msra.mxu0 %v2633
    %2683 = vmatprep.subr.mxu0 0.0
    %2684 = vmatpush2.msra.mxu0 0.0
    %2685 = vmatprep.subr.mxu0 0.0
    %2686 = vmatpush2.msra.mxu0 0.0
    %2687 = vmatprep.subr.mxu0 0.0
    %2688 = vmatpush2.msra.mxu0 0.0
    %2689 = vmatprep.subr.mxu0 0.0
    %2690 = vmatpush2.msra.mxu0 0.0
    %2691 = vmatprep.subr.mxu0 0.0
    %2692 = vmatpush2.msra.mxu0 0.0
    %2693 = vmatprep.subr.mxu0 0.0
    %2694 = vmatpush2.msra.mxu0 0.0
    %2695 = vmatprep.subr.mxu0 0.0
    %2696 = vmatpush2.msra.mxu0 0.0
    %2697 = vmatprep.subr.mxu0 0.0
    %2698 = vmatpush2.msra.mxu0 0.0
    %2699 = vmatprep.subr.mxu0 0.0
    %2700 = vmatpush2.msra.mxu0 0.0
    %2701 = vmatprep.subr.mxu0 0.0
    %2702 = vmatpush2.msra.mxu0 0.0
    %2703 = vmatprep.subr.mxu0 0.0
    %2704 = vmatpush2.msra.mxu0 0.0
    %2705 = vmatprep.subr.mxu0 0.0
    %2706 = vmatpush2.msra.mxu0 0.0
    %2707 = vmatprep.subr.mxu0 0.0
    %2708 = vmatpush2.msra.mxu0 0.0
    %2709 = vmatprep.subr.mxu0 0.0
    %2710 = vmatpush2.msra.mxu0 0.0
    %2711 = vmatprep.subr.mxu0 0.0
    %2712 = vmatpush2.msra.mxu0 0.0
    %2713 = vmatprep.subr.mxu0 0.0
    %2714 = vmatpush2.msra.mxu0 0.0
    %2715 = vmatprep.mubr.f32.mxu0 0.0
    %2716 = vmatmul.mubr.f32.gmra.mxu0 %v2646
    %v2717 = vpop.f32.mrf.mxu0
    %v2718 = vadd.f32 %v2643, %v2717
    %v2719 = vpop.f32.mrf.mxu0
    %2720 = vmatprep.mubr.f32.mxu0 0.0
    %2721 = vmatmul.mubr.f32.gmra.mxu0 %v2649
    %v2722 = vpop.f32.mrf.mxu0
    %v2723 = vadd.f32 %v2643, %v2722
    %v2724 = vpop.f32.mrf.mxu0
    %2725 = vdwg.mxu0
    %s2726 = scalar_lea.vmem %s5, 256
    %v2727 = vld [vmem:[%s2726] sm:$0xff]
    %v2728 = vld [vmem:[%s2726 + $0x8] sm:$0xff]
    %v2729 = vld [vmem:[%s2726 + $0x10] sm:$0xff]
    %v2730 = vld [vmem:[%s2726 + $0x18] sm:$0xff]
    %s2731 = scalar_lea.vmem %s6, 8
    %v2732 = vld [vmem:[%s2731] sm:$0x1]
    %v2734 = vlaneseq
    %v2735 = vshrl.u32 %v2734, 7
    %v2736 = vsub.s32 0, %v2735
    %v2737 = vrot.slane %v2732, %v2736
    %2739 = vmatprep.subr.mxu0 0.0
    %2740 = vmatpush1.msra.mxu0 0.0
    %2741 = vmatprep.subr.mxu0 0.0
    %2742 = vmatpush1.msra.mxu0 0.0
    %2743 = vmatprep.subr.mxu0 0.0
    %2744 = vmatpush1.msra.mxu0 0.0
    %2745 = vmatprep.subr.mxu0 0.0
    %2746 = vmatpush1.msra.mxu0 0.0
    %2747 = vmatprep.subr.mxu0 0.0
    %2748 = vmatpush1.msra.mxu0 0.0
    %2749 = vmatprep.subr.mxu0 0.0
    %2750 = vmatpush1.msra.mxu0 0.0
    %2751 = vmatprep.subr.mxu0 0.0
    %2752 = vmatpush1.msra.mxu0 0.0
    %2753 = vmatprep.subr.mxu0 0.0
    %2754 = vmatpush1.msra.mxu0 0.0
    %2755 = vmatprep.subr.mxu0 0.0
    %2756 = vmatpush1.msra.mxu0 0.0
    %2757 = vmatprep.subr.mxu0 0.0
    %2758 = vmatpush1.msra.mxu0 0.0
    %2759 = vmatprep.subr.mxu0 0.0
    %2760 = vmatpush1.msra.mxu0 0.0
    %2761 = vmatprep.subr.mxu0 0.0
    %2762 = vmatpush1.msra.mxu0 0.0
    %2763 = vmatprep.subr.mxu0 0.0
    %2764 = vmatpush1.msra.mxu0 %v2730
    %2765 = vmatprep.subr.mxu0 0.0
    %2766 = vmatpush1.msra.mxu0 %v2729
    %2767 = vmatprep.subr.mxu0 0.0
    %2768 = vmatpush1.msra.mxu0 %v2728
    %2769 = vmatprep.subr.mxu0 0.0
    %2770 = vmatpush1.msra.mxu0 %v2727
    %2771 = vmatprep.subr.mxu0 0.0
    %2772 = vmatpush2.msra.mxu0 0.0
    %2773 = vmatprep.subr.mxu0 0.0
    %2774 = vmatpush2.msra.mxu0 0.0
    %2775 = vmatprep.subr.mxu0 0.0
    %2776 = vmatpush2.msra.mxu0 0.0
    %2777 = vmatprep.subr.mxu0 0.0
    %2778 = vmatpush2.msra.mxu0 0.0
    %2779 = vmatprep.subr.mxu0 0.0
    %2780 = vmatpush2.msra.mxu0 0.0
    %2781 = vmatprep.subr.mxu0 0.0
    %2782 = vmatpush2.msra.mxu0 0.0
    %2783 = vmatprep.subr.mxu0 0.0
    %2784 = vmatpush2.msra.mxu0 0.0
    %2785 = vmatprep.subr.mxu0 0.0
    %2786 = vmatpush2.msra.mxu0 0.0
    %2787 = vmatprep.subr.mxu0 0.0
    %2788 = vmatpush2.msra.mxu0 0.0
    %2789 = vmatprep.subr.mxu0 0.0
    %2790 = vmatpush2.msra.mxu0 0.0
    %2791 = vmatprep.subr.mxu0 0.0
    %2792 = vmatpush2.msra.mxu0 0.0
    %2793 = vmatprep.subr.mxu0 0.0
    %2794 = vmatpush2.msra.mxu0 0.0
    %2795 = vmatprep.subr.mxu0 0.0
    %2796 = vmatpush2.msra.mxu0 0.0
    %2797 = vmatprep.subr.mxu0 0.0
    %2798 = vmatpush2.msra.mxu0 0.0
    %2799 = vmatprep.subr.mxu0 0.0
    %2800 = vmatpush2.msra.mxu0 0.0
    %2801 = vmatprep.subr.mxu0 0.0
    %2802 = vmatpush2.msra.mxu0 0.0
    %2803 = vmatprep.mubr.f32.mxu0 0.0
    %2804 = vmatmul.mubr.f32.gmra.mxu0 %v2646
    %v2805 = vpop.f32.mrf.mxu0
    %v2806 = vadd.f32 %v2737, %v2805
    %v2807 = vpop.f32.mrf.mxu0
    %2808 = vmatprep.mubr.f32.mxu0 0.0
    %2809 = vmatmul.mubr.f32.gmra.mxu0 %v2649
    %v2810 = vpop.f32.mrf.mxu0
    %v2811 = vadd.f32 %v2737, %v2810
    %v2812 = vpop.f32.mrf.mxu0
    %2813 = vdwg.mxu0
    %v2815 = vsel %vm560, %v2624, 0
    %v2818 = vsel %vm560, %v2629, 0
    %v2821 = vsel %vm560, %v2718, 0
    %v2824 = vsel %vm560, %v2723, 0
    %2826 = vmatprep.subr.mxu0 0.0
    %2827 = vmatpush1.xpose.msra.mxu0 0.0
    %2828 = vmatprep.subr.mxu0 0.0
    %2829 = vmatpush1.xpose.msra.mxu0 0.0
    %2830 = vmatprep.subr.mxu0 0.0
    %2831 = vmatpush1.xpose.msra.mxu0 0.0
    %2832 = vmatprep.subr.mxu0 0.0
    %2833 = vmatpush1.xpose.msra.mxu0 0.0
    %2834 = vmatprep.subr.mxu0 0.0
    %2835 = vmatpush1.xpose.msra.mxu0 0.0
    %2836 = vmatprep.subr.mxu0 0.0
    %2837 = vmatpush1.xpose.msra.mxu0 0.0
    %2838 = vmatprep.subr.mxu0 0.0
    %2839 = vmatpush1.xpose.msra.mxu0 0.0
    %2840 = vmatprep.subr.mxu0 0.0
    %2841 = vmatpush1.xpose.msra.mxu0 0.0
    %2842 = vmatprep.subr.mxu0 0.0
    %2843 = vmatpush1.xpose.msra.mxu0 0.0
    %2844 = vmatprep.subr.mxu0 0.0
    %2845 = vmatpush1.xpose.msra.mxu0 0.0
    %2846 = vmatprep.subr.mxu0 0.0
    %2847 = vmatpush1.xpose.msra.mxu0 0.0
    %2848 = vmatprep.subr.mxu0 0.0
    %2849 = vmatpush1.xpose.msra.mxu0 0.0
    %2850 = vmatprep.subr.mxu0 0.0
    %2851 = vmatpush1.xpose.msra.mxu0 0.0
    %2852 = vmatprep.subr.mxu0 0.0
    %2853 = vmatpush1.xpose.msra.mxu0 0.0
    %2854 = vmatprep.subr.mxu0 0.0
    %2855 = vmatpush1.xpose.msra.mxu0 %v2824
    %2856 = vmatprep.subr.mxu0 0.0
    %2857 = vmatpush1.xpose.msra.mxu0 %v2821
    %2858 = vmatprep.subr.mxu0 0.0
    %2859 = vmatpush2.xpose.msra.mxu0 0.0
    %2860 = vmatprep.subr.mxu0 0.0
    %2861 = vmatpush2.xpose.msra.mxu0 0.0
    %2862 = vmatprep.subr.mxu0 0.0
    %2863 = vmatpush2.xpose.msra.mxu0 0.0
    %2864 = vmatprep.subr.mxu0 0.0
    %2865 = vmatpush2.xpose.msra.mxu0 0.0
    %2866 = vmatprep.subr.mxu0 0.0
    %2867 = vmatpush2.xpose.msra.mxu0 0.0
    %2868 = vmatprep.subr.mxu0 0.0
    %2869 = vmatpush2.xpose.msra.mxu0 0.0
    %2870 = vmatprep.subr.mxu0 0.0
    %2871 = vmatpush2.xpose.msra.mxu0 0.0
    %2872 = vmatprep.subr.mxu0 0.0
    %2873 = vmatpush2.xpose.msra.mxu0 0.0
    %2874 = vmatprep.subr.mxu0 0.0
    %2875 = vmatpush2.xpose.msra.mxu0 0.0
    %2876 = vmatprep.subr.mxu0 0.0
    %2877 = vmatpush2.xpose.msra.mxu0 0.0
    %2878 = vmatprep.subr.mxu0 0.0
    %2879 = vmatpush2.xpose.msra.mxu0 0.0
    %2880 = vmatprep.subr.mxu0 0.0
    %2881 = vmatpush2.xpose.msra.mxu0 0.0
    %2882 = vmatprep.subr.mxu0 0.0
    %2883 = vmatpush2.xpose.msra.mxu0 0.0
    %2884 = vmatprep.subr.mxu0 0.0
    %2885 = vmatpush2.xpose.msra.mxu0 0.0
    %2886 = vmatprep.subr.mxu0 0.0
    %2887 = vmatpush2.xpose.msra.mxu0 0.0
    %2888 = vmatprep.subr.mxu0 0.0
    %2889 = vmatpush2.xpose.msra.mxu0 0.0
    %2890 = vmatprep.mubr.f32.mxu0 0.0
    %2891 = vmatmul.mubr.f32.gmra.mxu0 %v2815
    %v2892 = vpop.f32.mrf.mxu0
    %v2893 = vadd.f32 %v49, %v2892
    %v2894 = vpop.f32.mrf.mxu0
    %2895 = vmatprep.mubr.f32.mxu0 0.0
    %2896 = vmatmul.mubr.f32.gmra.mxu0 %v2818
    %v2897 = vpop.f32.mrf.mxu0
    %v2898 = vadd.f32 %v50, %v2897
    %v2899 = vpop.f32.mrf.mxu0
    %2900 = vdwg.mxu0
    %v2901 = vsel %vm648, %v2893, -inf
    %2902 = vmax.xlane.f32.xlu0 %v2901
    %v2903 = vpop.xlane.xlu0 %2902
    %v2904 = vsel %vm648, %v2898, -inf
    %2905 = vmax.xlane.f32.xlu0 %v2904
    %v2906 = vpop.xlane.xlu0 %2905
    %v2907 = vsub.f32 %v2893, %v2903
    %v2908 = vsub.f32 %v2898, %v2906
    %v2909 = vmul.f32 %v2907, 1.442695
    %v2910 = vpow.pop %v2909
    %v2911 = vmul.f32 %v2908, 1.442695
    %v2912 = vpow.pop %v2911
    %v2913 = vsel %vm648, %v2910, 0.0
    %2914 = vadd.xlane.f32.xlu0 %v2913
    %v2915 = vpop.xlane.xlu0 %2914
    %v2916 = vsel %vm648, %v2912, 0.0
    %2917 = vadd.xlane.f32.xlu0 %v2916
    %v2918 = vpop.xlane.xlu0 %2917
    %v2919 = vrcp.pop %v2915
    %v2920 = vrcp.pop %v2918
    %v2921 = vmul.f32 %v2910, %v2919
    %v2922 = vmul.f32 %v2912, %v2920
    %v2924 = vsel %vm648, %v2921, 0
    %v2927 = vsel %vm648, %v2922, 0
    %2929 = vmatprep.subr.mxu0 0.0
    %2930 = vmatpush1.msra.mxu0 0.0
    %2931 = vmatprep.subr.mxu0 0.0
    %2932 = vmatpush1.msra.mxu0 0.0
    %2933 = vmatprep.subr.mxu0 0.0
    %2934 = vmatpush1.msra.mxu0 0.0
    %2935 = vmatprep.subr.mxu0 0.0
    %2936 = vmatpush1.msra.mxu0 0.0
    %2937 = vmatprep.subr.mxu0 0.0
    %2938 = vmatpush1.msra.mxu0 0.0
    %2939 = vmatprep.subr.mxu0 0.0
    %2940 = vmatpush1.msra.mxu0 0.0
    %2941 = vmatprep.subr.mxu0 0.0
    %2942 = vmatpush1.msra.mxu0 0.0
    %2943 = vmatprep.subr.mxu0 0.0
    %2944 = vmatpush1.msra.mxu0 0.0
    %2945 = vmatprep.subr.mxu0 0.0
    %2946 = vmatpush1.msra.mxu0 0.0
    %2947 = vmatprep.subr.mxu0 0.0
    %2948 = vmatpush1.msra.mxu0 0.0
    %2949 = vmatprep.subr.mxu0 0.0
    %2950 = vmatpush1.msra.mxu0 0.0
    %2951 = vmatprep.subr.mxu0 0.0
    %2952 = vmatpush1.msra.mxu0 0.0
    %2953 = vmatprep.subr.mxu0 0.0
    %2954 = vmatpush1.msra.mxu0 0.0
    %2955 = vmatprep.subr.mxu0 0.0
    %2956 = vmatpush1.msra.mxu0 0.0
    %2957 = vmatprep.subr.mxu0 0.0
    %2958 = vmatpush1.msra.mxu0 %v2811
    %2959 = vmatprep.subr.mxu0 0.0
    %2960 = vmatpush1.msra.mxu0 %v2806
    %2961 = vmatprep.subr.mxu0 0.0
    %2962 = vmatpush2.msra.mxu0 0.0
    %2963 = vmatprep.subr.mxu0 0.0
    %2964 = vmatpush2.msra.mxu0 0.0
    %2965 = vmatprep.subr.mxu0 0.0
    %2966 = vmatpush2.msra.mxu0 0.0
    %2967 = vmatprep.subr.mxu0 0.0
    %2968 = vmatpush2.msra.mxu0 0.0
    %2969 = vmatprep.subr.mxu0 0.0
    %2970 = vmatpush2.msra.mxu0 0.0
    %2971 = vmatprep.subr.mxu0 0.0
    %2972 = vmatpush2.msra.mxu0 0.0
    %2973 = vmatprep.subr.mxu0 0.0
    %2974 = vmatpush2.msra.mxu0 0.0
    %2975 = vmatprep.subr.mxu0 0.0
    %2976 = vmatpush2.msra.mxu0 0.0
    %2977 = vmatprep.subr.mxu0 0.0
    %2978 = vmatpush2.msra.mxu0 0.0
    %2979 = vmatprep.subr.mxu0 0.0
    %2980 = vmatpush2.msra.mxu0 0.0
    %2981 = vmatprep.subr.mxu0 0.0
    %2982 = vmatpush2.msra.mxu0 0.0
    %2983 = vmatprep.subr.mxu0 0.0
    %2984 = vmatpush2.msra.mxu0 0.0
    %2985 = vmatprep.subr.mxu0 0.0
    %2986 = vmatpush2.msra.mxu0 0.0
    %2987 = vmatprep.subr.mxu0 0.0
    %2988 = vmatpush2.msra.mxu0 0.0
    %2989 = vmatprep.subr.mxu0 0.0
    %2990 = vmatpush2.msra.mxu0 0.0
    %2991 = vmatprep.subr.mxu0 0.0
    %2992 = vmatpush2.msra.mxu0 0.0
    %2993 = vmatprep.mubr.f32.mxu0 0.0
    %2994 = vmatmul.mubr.f32.gmra.mxu0 %v2924
    %v2995 = vpop.f32.mrf.mxu0
    %v2996 = vadd.f32 0.0, %v2995
    %v2997 = vpop.f32.mrf.mxu0
    %2998 = vmatprep.mubr.f32.mxu0 0.0
    %2999 = vmatmul.mubr.f32.gmra.mxu0 %v2927
    %v3000 = vpop.f32.mrf.mxu0
    %v3001 = vadd.f32 0.0, %v3000
    %v3002 = vpop.f32.mrf.mxu0
    %3003 = vdwg.mxu0
    %s3004 = scalar_lea.vmem %s7, 128
    %v3005 = vld [vmem:[%s3004] sm:$0xff]
    %v3006 = vld [vmem:[%s3004 + $0x8] sm:$0xff]
    %v3007 = vld [vmem:[%s3004 + $0x10] sm:$0xff]
    %v3008 = vld [vmem:[%s3004 + $0x18] sm:$0xff]
    %v3009 = vld [vmem:[%s3004 + $0x20] sm:$0xff]
    %v3010 = vld [vmem:[%s3004 + $0x28] sm:$0xff]
    %v3011 = vld [vmem:[%s3004 + $0x30] sm:$0xff]
    %v3012 = vld [vmem:[%s3004 + $0x38] sm:$0xff]
    %s3013 = scalar_lea.vmem %s8, 2
    %v3014 = vld [vmem:[%s3013] sm:$0x1]
    %v3016 = vlaneseq
    %v3017 = vshrl.u32 %v3016, 7
    %v3018 = vsub.s32 0, %v3017
    %v3019 = vrot.slane %v3014, %v3018
    %v3022 = vsel %vm560, %v2996, 0
    %v3025 = vsel %vm560, %v3001, 0
    %3027 = vmatprep.subr.mxu0 0.0
    %3028 = vmatpush1.msra.mxu0 0.0
    %3029 = vmatprep.subr.mxu0 0.0
    %3030 = vmatpush1.msra.mxu0 0.0
    %3031 = vmatprep.subr.mxu0 0.0
    %3032 = vmatpush1.msra.mxu0 0.0
    %3033 = vmatprep.subr.mxu0 0.0
    %3034 = vmatpush1.msra.mxu0 0.0
    %3035 = vmatprep.subr.mxu0 0.0
    %3036 = vmatpush1.msra.mxu0 0.0
    %3037 = vmatprep.subr.mxu0 0.0
    %3038 = vmatpush1.msra.mxu0 0.0
    %3039 = vmatprep.subr.mxu0 0.0
    %3040 = vmatpush1.msra.mxu0 0.0
    %3041 = vmatprep.subr.mxu0 0.0
    %3042 = vmatpush1.msra.mxu0 0.0
    %3043 = vmatprep.subr.mxu0 0.0
    %3044 = vmatpush1.msra.mxu0 %v3012
    %3045 = vmatprep.subr.mxu0 0.0
    %3046 = vmatpush1.msra.mxu0 %v3011
    %3047 = vmatprep.subr.mxu0 0.0
    %3048 = vmatpush1.msra.mxu0 %v3010
    %3049 = vmatprep.subr.mxu0 0.0
    %3050 = vmatpush1.msra.mxu0 %v3009
    %3051 = vmatprep.subr.mxu0 0.0
    %3052 = vmatpush1.msra.mxu0 %v3008
    %3053 = vmatprep.subr.mxu0 0.0
    %3054 = vmatpush1.msra.mxu0 %v3007
    %3055 = vmatprep.subr.mxu0 0.0
    %3056 = vmatpush1.msra.mxu0 %v3006
    %3057 = vmatprep.subr.mxu0 0.0
    %3058 = vmatpush1.msra.mxu0 %v3005
    %3059 = vmatprep.subr.mxu0 0.0
    %3060 = vmatpush2.msra.mxu0 0.0
    %3061 = vmatprep.subr.mxu0 0.0
    %3062 = vmatpush2.msra.mxu0 0.0
    %3063 = vmatprep.subr.mxu0 0.0
    %3064 = vmatpush2.msra.mxu0 0.0
    %3065 = vmatprep.subr.mxu0 0.0
    %3066 = vmatpush2.msra.mxu0 0.0
    %3067 = vmatprep.subr.mxu0 0.0
    %3068 = vmatpush2.msra.mxu0 0.0
    %3069 = vmatprep.subr.mxu0 0.0
    %3070 = vmatpush2.msra.mxu0 0.0
    %3071 = vmatprep.subr.mxu0 0.0
    %3072 = vmatpush2.msra.mxu0 0.0
    %3073 = vmatprep.subr.mxu0 0.0
    %3074 = vmatpush2.msra.mxu0 0.0
    %3075 = vmatprep.subr.mxu0 0.0
    %3076 = vmatpush2.msra.mxu0 0.0
    %3077 = vmatprep.subr.mxu0 0.0
    %3078 = vmatpush2.msra.mxu0 0.0
    %3079 = vmatprep.subr.mxu0 0.0
    %3080 = vmatpush2.msra.mxu0 0.0
    %3081 = vmatprep.subr.mxu0 0.0
    %3082 = vmatpush2.msra.mxu0 0.0
    %3083 = vmatprep.subr.mxu0 0.0
    %3084 = vmatpush2.msra.mxu0 0.0
    %3085 = vmatprep.subr.mxu0 0.0
    %3086 = vmatpush2.msra.mxu0 0.0
    %3087 = vmatprep.subr.mxu0 0.0
    %3088 = vmatpush2.msra.mxu0 0.0
    %3089 = vmatprep.subr.mxu0 0.0
    %3090 = vmatpush2.msra.mxu0 0.0
    %3091 = vmatprep.mubr.f32.mxu0 0.0
    %3092 = vmatmul.mubr.f32.gmra.mxu0 %v3022
    %v3093 = vpop.f32.mrf.mxu0
    %v3094 = vadd.f32 %v3019, %v3093
    %v3095 = vpop.f32.mrf.mxu0
    %3096 = vmatprep.mubr.f32.mxu0 0.0
    %3097 = vmatmul.mubr.f32.gmra.mxu0 %v3025
    %v3098 = vpop.f32.mrf.mxu0
    %v3099 = vadd.f32 %v3019, %v3098
    %v3100 = vpop.f32.mrf.mxu0
    %3101 = vdwg.mxu0
    %v3102 = vadd.f32 %v2536, %v3094
    %v3103 = vadd.f32 %v2537, %v3099
    %v3104 = vsel %vm302, %v3102, 0.0
    %3105 = vadd.xlane.f32.xlu0 %v3104
    %v3106 = vpop.xlane.xlu0 %3105
    %v3107 = vsel %vm302, %v3103, 0.0
    %3108 = vadd.xlane.f32.xlu0 %v3107
    %v3109 = vpop.xlane.xlu0 %3108
    %v3110 = vmul.f32 %v3102, %v3102
    %v3111 = vmul.f32 %v3103, %v3103
    %v3112 = vsel %vm302, %v3110, 0.0
    %3113 = vadd.xlane.f32.xlu0 %v3112
    %v3114 = vpop.xlane.xlu0 %3113
    %v3115 = vsel %vm302, %v3111, 0.0
    %3116 = vadd.xlane.f32.xlu0 %v3115
    %v3117 = vpop.xlane.xlu0 %3116
    %v3118 = vmul.f32 %v3106, 0.03125
    %v3119 = vmul.f32 %v3109, 0.03125
    %v3120 = vmul.f32 %v3106, %v3118
    %v3121 = vmul.f32 %v3109, %v3119
    %v3122 = vsub.f32 %v3114, %v3120
    %v3123 = vsub.f32 %v3117, %v3121
    %v3124 = vmul.f32 %v3122, 0.032258064
    %v3125 = vmul.f32 %v3123, 0.032258064
    %v3126 = vmax.f32 %v3124, 0.0
    %v3127 = vmax.f32 %v3125, 0.0
    %v3128 = vrsqrt.pop %v3126
    %v3129 = vmul.f32 %v3126, %v3128
    %vm3130 = vcmp.eq.f32.partialorder %v3126, inf
    %v3131 = vsel %vm3130, %v3126, %v3129
    %vm3132 = vcmp.eq.f32.partialorder %v3126, 0.0
    %v3133 = vand.u32 %v3126, 2147483648
    %v3134 = vsel %vm3132, %v3133, %v3131
    %v3135 = vrsqrt.pop %v3127
    %v3136 = vmul.f32 %v3127, %v3135
    %vm3137 = vcmp.eq.f32.partialorder %v3127, inf
    %v3138 = vsel %vm3137, %v3127, %v3136
    %vm3139 = vcmp.eq.f32.partialorder %v3127, 0.0
    %v3140 = vand.u32 %v3127, 2147483648
    %v3141 = vsel %vm3139, %v3140, %v3138
    %v3142 = vadd.f32 %v3134, 1e-06
    %v3143 = vadd.f32 %v3141, 1e-06
    %v3144 = vsub.f32 %v3102, %v3118
    %v3145 = vsub.f32 %v3103, %v3119
    %v3146 = vmul.f32 %v896, %v3144
    %v3147 = vmul.f32 %v896, %v3145
    %v3148 = vrcp.pop %v3142
    %v3149 = vrcp.pop %v3143
    %v3150 = vmul.f32 %v3146, %v3148
    %v3151 = vmul.f32 %v3147, %v3149
    %v3152 = vadd.f32 %v3150, %v908
    %v3153 = vadd.f32 %v3151, %v908
    %s3154 = scalar_lea.vmem %s5, 320
    %v3155 = vld [vmem:[%s3154] sm:$0xff]
    %v3156 = vld [vmem:[%s3154 + $0x8] sm:$0xff]
    %v3157 = vld [vmem:[%s3154 + $0x10] sm:$0xff]
    %v3158 = vld [vmem:[%s3154 + $0x18] sm:$0xff]
    %s3159 = scalar_lea.vmem %s6, 10
    %v3160 = vld [vmem:[%s3159] sm:$0x1]
    %v3162 = vlaneseq
    %v3163 = vshrl.u32 %v3162, 7
    %v3164 = vsub.s32 0, %v3163
    %v3165 = vrot.slane %v3160, %v3164
    %v3168 = vsel %vm302, %v3152, 0
    %v3171 = vsel %vm302, %v3153, 0
    %3173 = vmatprep.subr.mxu0 0.0
    %3174 = vmatpush1.msra.mxu0 0.0
    %3175 = vmatprep.subr.mxu0 0.0
    %3176 = vmatpush1.msra.mxu0 0.0
    %3177 = vmatprep.subr.mxu0 0.0
    %3178 = vmatpush1.msra.mxu0 0.0
    %3179 = vmatprep.subr.mxu0 0.0
    %3180 = vmatpush1.msra.mxu0 0.0
    %3181 = vmatprep.subr.mxu0 0.0
    %3182 = vmatpush1.msra.mxu0 0.0
    %3183 = vmatprep.subr.mxu0 0.0
    %3184 = vmatpush1.msra.mxu0 0.0
    %3185 = vmatprep.subr.mxu0 0.0
    %3186 = vmatpush1.msra.mxu0 0.0
    %3187 = vmatprep.subr.mxu0 0.0
    %3188 = vmatpush1.msra.mxu0 0.0
    %3189 = vmatprep.subr.mxu0 0.0
    %3190 = vmatpush1.msra.mxu0 0.0
    %3191 = vmatprep.subr.mxu0 0.0
    %3192 = vmatpush1.msra.mxu0 0.0
    %3193 = vmatprep.subr.mxu0 0.0
    %3194 = vmatpush1.msra.mxu0 0.0
    %3195 = vmatprep.subr.mxu0 0.0
    %3196 = vmatpush1.msra.mxu0 0.0
    %3197 = vmatprep.subr.mxu0 0.0
    %3198 = vmatpush1.msra.mxu0 %v3158
    %3199 = vmatprep.subr.mxu0 0.0
    %3200 = vmatpush1.msra.mxu0 %v3157
    %3201 = vmatprep.subr.mxu0 0.0
    %3202 = vmatpush1.msra.mxu0 %v3156
    %3203 = vmatprep.subr.mxu0 0.0
    %3204 = vmatpush1.msra.mxu0 %v3155
    %3205 = vmatprep.subr.mxu0 0.0
    %3206 = vmatpush2.msra.mxu0 0.0
    %3207 = vmatprep.subr.mxu0 0.0
    %3208 = vmatpush2.msra.mxu0 0.0
    %3209 = vmatprep.subr.mxu0 0.0
    %3210 = vmatpush2.msra.mxu0 0.0
    %3211 = vmatprep.subr.mxu0 0.0
    %3212 = vmatpush2.msra.mxu0 0.0
    %3213 = vmatprep.subr.mxu0 0.0
    %3214 = vmatpush2.msra.mxu0 0.0
    %3215 = vmatprep.subr.mxu0 0.0
    %3216 = vmatpush2.msra.mxu0 0.0
    %3217 = vmatprep.subr.mxu0 0.0
    %3218 = vmatpush2.msra.mxu0 0.0
    %3219 = vmatprep.subr.mxu0 0.0
    %3220 = vmatpush2.msra.mxu0 0.0
    %3221 = vmatprep.subr.mxu0 0.0
    %3222 = vmatpush2.msra.mxu0 0.0
    %3223 = vmatprep.subr.mxu0 0.0
    %3224 = vmatpush2.msra.mxu0 0.0
    %3225 = vmatprep.subr.mxu0 0.0
    %3226 = vmatpush2.msra.mxu0 0.0
    %3227 = vmatprep.subr.mxu0 0.0
    %3228 = vmatpush2.msra.mxu0 0.0
    %3229 = vmatprep.subr.mxu0 0.0
    %3230 = vmatpush2.msra.mxu0 0.0
    %3231 = vmatprep.subr.mxu0 0.0
    %3232 = vmatpush2.msra.mxu0 0.0
    %3233 = vmatprep.subr.mxu0 0.0
    %3234 = vmatpush2.msra.mxu0 0.0
    %3235 = vmatprep.subr.mxu0 0.0
    %3236 = vmatpush2.msra.mxu0 0.0
    %3237 = vmatprep.mubr.f32.mxu0 0.0
    %3238 = vmatmul.mubr.f32.gmra.mxu0 %v3168
    %v3239 = vpop.f32.mrf.mxu0
    %v3240 = vadd.f32 %v3165, %v3239
    %v3241 = vpop.f32.mrf.mxu0
    %3242 = vmatprep.mubr.f32.mxu0 0.0
    %3243 = vmatmul.mubr.f32.gmra.mxu0 %v3171
    %v3244 = vpop.f32.mrf.mxu0
    %v3245 = vadd.f32 %v3165, %v3244
    %v3246 = vpop.f32.mrf.mxu0
    %3247 = vdwg.mxu0
    %v3248 = vmax.f32 %v3240, 0.0
    %v3249 = vmax.f32 %v3245, 0.0
    %s3250 = scalar_lea.vmem %s7, 256
    %v3251 = vld [vmem:[%s3250] sm:$0xff]
    %v3252 = vld [vmem:[%s3250 + $0x8] sm:$0xff]
    %v3253 = vld [vmem:[%s3250 + $0x10] sm:$0xff]
    %v3254 = vld [vmem:[%s3250 + $0x18] sm:$0xff]
    %v3255 = vld [vmem:[%s3250 + $0x20] sm:$0xff]
    %v3256 = vld [vmem:[%s3250 + $0x28] sm:$0xff]
    %v3257 = vld [vmem:[%s3250 + $0x30] sm:$0xff]
    %v3258 = vld [vmem:[%s3250 + $0x38] sm:$0xff]
    %s3259 = scalar_lea.vmem %s8, 4
    %v3260 = vld [vmem:[%s3259] sm:$0x1]
    %v3262 = vlaneseq
    %v3263 = vshrl.u32 %v3262, 7
    %v3264 = vsub.s32 0, %v3263
    %v3265 = vrot.slane %v3260, %v3264
    %v3268 = vsel %vm560, %v3248, 0
    %v3271 = vsel %vm560, %v3249, 0
    %3273 = vmatprep.subr.mxu0 0.0
    %3274 = vmatpush1.msra.mxu0 0.0
    %3275 = vmatprep.subr.mxu0 0.0
    %3276 = vmatpush1.msra.mxu0 0.0
    %3277 = vmatprep.subr.mxu0 0.0
    %3278 = vmatpush1.msra.mxu0 0.0
    %3279 = vmatprep.subr.mxu0 0.0
    %3280 = vmatpush1.msra.mxu0 0.0
    %3281 = vmatprep.subr.mxu0 0.0
    %3282 = vmatpush1.msra.mxu0 0.0
    %3283 = vmatprep.subr.mxu0 0.0
    %3284 = vmatpush1.msra.mxu0 0.0
    %3285 = vmatprep.subr.mxu0 0.0
    %3286 = vmatpush1.msra.mxu0 0.0
    %3287 = vmatprep.subr.mxu0 0.0
    %3288 = vmatpush1.msra.mxu0 0.0
    %3289 = vmatprep.subr.mxu0 0.0
    %3290 = vmatpush1.msra.mxu0 %v3258
    %3291 = vmatprep.subr.mxu0 0.0
    %3292 = vmatpush1.msra.mxu0 %v3257
    %3293 = vmatprep.subr.mxu0 0.0
    %3294 = vmatpush1.msra.mxu0 %v3256
    %3295 = vmatprep.subr.mxu0 0.0
    %3296 = vmatpush1.msra.mxu0 %v3255
    %3297 = vmatprep.subr.mxu0 0.0
    %3298 = vmatpush1.msra.mxu0 %v3254
    %3299 = vmatprep.subr.mxu0 0.0
    %3300 = vmatpush1.msra.mxu0 %v3253
    %3301 = vmatprep.subr.mxu0 0.0
    %3302 = vmatpush1.msra.mxu0 %v3252
    %3303 = vmatprep.subr.mxu0 0.0
    %3304 = vmatpush1.msra.mxu0 %v3251
    %3305 = vmatprep.subr.mxu0 0.0
    %3306 = vmatpush2.msra.mxu0 0.0
    %3307 = vmatprep.subr.mxu0 0.0
    %3308 = vmatpush2.msra.mxu0 0.0
    %3309 = vmatprep.subr.mxu0 0.0
    %3310 = vmatpush2.msra.mxu0 0.0
    %3311 = vmatprep.subr.mxu0 0.0
    %3312 = vmatpush2.msra.mxu0 0.0
    %3313 = vmatprep.subr.mxu0 0.0
    %3314 = vmatpush2.msra.mxu0 0.0
    %3315 = vmatprep.subr.mxu0 0.0
    %3316 = vmatpush2.msra.mxu0 0.0
    %3317 = vmatprep.subr.mxu0 0.0
    %3318 = vmatpush2.msra.mxu0 0.0
    %3319 = vmatprep.subr.mxu0 0.0
    %3320 = vmatpush2.msra.mxu0 0.0
    %3321 = vmatprep.subr.mxu0 0.0
    %3322 = vmatpush2.msra.mxu0 0.0
    %3323 = vmatprep.subr.mxu0 0.0
    %3324 = vmatpush2.msra.mxu0 0.0
    %3325 = vmatprep.subr.mxu0 0.0
    %3326 = vmatpush2.msra.mxu0 0.0
    %3327 = vmatprep.subr.mxu0 0.0
    %3328 = vmatpush2.msra.mxu0 0.0
    %3329 = vmatprep.subr.mxu0 0.0
    %3330 = vmatpush2.msra.mxu0 0.0
    %3331 = vmatprep.subr.mxu0 0.0
    %3332 = vmatpush2.msra.mxu0 0.0
    %3333 = vmatprep.subr.mxu0 0.0
    %3334 = vmatpush2.msra.mxu0 0.0
    %3335 = vmatprep.subr.mxu0 0.0
    %3336 = vmatpush2.msra.mxu0 0.0
    %3337 = vmatprep.mubr.f32.mxu0 0.0
    %3338 = vmatmul.mubr.f32.gmra.mxu0 %v3268
    %v3339 = vpop.f32.mrf.mxu0
    %v3340 = vadd.f32 %v3265, %v3339
    %v3341 = vpop.f32.mrf.mxu0
    %3342 = vmatprep.mubr.f32.mxu0 0.0
    %3343 = vmatmul.mubr.f32.gmra.mxu0 %v3271
    %v3344 = vpop.f32.mrf.mxu0
    %v3345 = vadd.f32 %v3265, %v3344
    %v3346 = vpop.f32.mrf.mxu0
    %3347 = vdwg.mxu0
    %v3348 = vadd.f32 %v3152, %v3340
    %v3349 = vadd.f32 %v3153, %v3345
    %v3350 = vsel %vm302, %v3348, 0.0
    %3351 = vadd.xlane.f32.xlu0 %v3350
    %v3352 = vpop.xlane.xlu0 %3351
    %v3353 = vsel %vm302, %v3349, 0.0
    %3354 = vadd.xlane.f32.xlu0 %v3353
    %v3355 = vpop.xlane.xlu0 %3354
    %v3356 = vmul.f32 %v3348, %v3348
    %v3357 = vmul.f32 %v3349, %v3349
    %v3358 = vsel %vm302, %v3356, 0.0
    %3359 = vadd.xlane.f32.xlu0 %v3358
    %v3360 = vpop.xlane.xlu0 %3359
    %v3361 = vsel %vm302, %v3357, 0.0
    %3362 = vadd.xlane.f32.xlu0 %v3361
    %v3363 = vpop.xlane.xlu0 %3362
    %v3364 = vmul.f32 %v3352, 0.03125
    %v3365 = vmul.f32 %v3355, 0.03125
    %v3366 = vmul.f32 %v3352, %v3364
    %v3367 = vmul.f32 %v3355, %v3365
    %v3368 = vsub.f32 %v3360, %v3366
    %v3369 = vsub.f32 %v3363, %v3367
    %v3370 = vmul.f32 %v3368, 0.032258064
    %v3371 = vmul.f32 %v3369, 0.032258064
    %v3372 = vmax.f32 %v3370, 0.0
    %v3373 = vmax.f32 %v3371, 0.0
    %v3374 = vrsqrt.pop %v3372
    %v3375 = vmul.f32 %v3372, %v3374
    %vm3376 = vcmp.eq.f32.partialorder %v3372, inf
    %v3377 = vsel %vm3376, %v3372, %v3375
    %vm3378 = vcmp.eq.f32.partialorder %v3372, 0.0
    %v3379 = vand.u32 %v3372, 2147483648
    %v3380 = vsel %vm3378, %v3379, %v3377
    %v3381 = vrsqrt.pop %v3373
    %v3382 = vmul.f32 %v3373, %v3381
    %vm3383 = vcmp.eq.f32.partialorder %v3373, inf
    %v3384 = vsel %vm3383, %v3373, %v3382
    %vm3385 = vcmp.eq.f32.partialorder %v3373, 0.0
    %v3386 = vand.u32 %v3373, 2147483648
    %v3387 = vsel %vm3385, %v3386, %v3384
    %v3388 = vadd.f32 %v3380, 1e-06
    %v3389 = vadd.f32 %v3387, 1e-06
    %v3390 = vsub.f32 %v3348, %v3364
    %v3391 = vsub.f32 %v3349, %v3365
    %v3392 = vmul.f32 %v896, %v3390
    %v3393 = vmul.f32 %v896, %v3391
    %v3394 = vrcp.pop %v3388
    %v3395 = vrcp.pop %v3389
    %v3396 = vmul.f32 %v3392, %v3394
    %v3397 = vmul.f32 %v3393, %v3395
    %v3398 = vadd.f32 %v3396, %v908
    %v3399 = vadd.f32 %v3397, %v908
    %v3401 = vsel %vm302, %v3398, 0
    %v3404 = vsel %vm302, %v3399, 0
    %3406 = vmatprep.subr.mxu0 0.0
    %3407 = vmatpush1.msra.mxu0 0.0
    %3408 = vmatprep.subr.mxu0 0.0
    %3409 = vmatpush1.msra.mxu0 0.0
    %3410 = vmatprep.subr.mxu0 0.0
    %3411 = vmatpush1.msra.mxu0 0.0
    %3412 = vmatprep.subr.mxu0 0.0
    %3413 = vmatpush1.msra.mxu0 0.0
    %3414 = vmatprep.subr.mxu0 0.0
    %3415 = vmatpush1.msra.mxu0 0.0
    %3416 = vmatprep.subr.mxu0 0.0
    %3417 = vmatpush1.msra.mxu0 0.0
    %3418 = vmatprep.subr.mxu0 0.0
    %3419 = vmatpush1.msra.mxu0 0.0
    %3420 = vmatprep.subr.mxu0 0.0
    %3421 = vmatpush1.msra.mxu0 0.0
    %3422 = vmatprep.subr.mxu0 0.0
    %3423 = vmatpush1.msra.mxu0 0.0
    %3424 = vmatprep.subr.mxu0 0.0
    %3425 = vmatpush1.msra.mxu0 0.0
    %3426 = vmatprep.subr.mxu0 0.0
    %3427 = vmatpush1.msra.mxu0 0.0
    %3428 = vmatprep.subr.mxu0 0.0
    %3429 = vmatpush1.msra.mxu0 0.0
    %3430 = vmatprep.subr.mxu0 0.0
    %3431 = vmatpush1.msra.mxu0 %v1932
    %3432 = vmatprep.subr.mxu0 0.0
    %3433 = vmatpush1.msra.mxu0 %v1931
    %3434 = vmatprep.subr.mxu0 0.0
    %3435 = vmatpush1.msra.mxu0 %v1930
    %3436 = vmatprep.subr.mxu0 0.0
    %3437 = vmatpush1.msra.mxu0 %v1929
    %3438 = vmatprep.subr.mxu0 0.0
    %3439 = vmatpush2.msra.mxu0 0.0
    %3440 = vmatprep.subr.mxu0 0.0
    %3441 = vmatpush2.msra.mxu0 0.0
    %3442 = vmatprep.subr.mxu0 0.0
    %3443 = vmatpush2.msra.mxu0 0.0
    %3444 = vmatprep.subr.mxu0 0.0
    %3445 = vmatpush2.msra.mxu0 0.0
    %3446 = vmatprep.subr.mxu0 0.0
    %3447 = vmatpush2.msra.mxu0 0.0
    %3448 = vmatprep.subr.mxu0 0.0
    %3449 = vmatpush2.msra.mxu0 0.0
    %3450 = vmatprep.subr.mxu0 0.0
    %3451 = vmatpush2.msra.mxu0 0.0
    %3452 = vmatprep.subr.mxu0 0.0
    %3453 = vmatpush2.msra.mxu0 0.0
    %3454 = vmatprep.subr.mxu0 0.0
    %3455 = vmatpush2.msra.mxu0 0.0
    %3456 = vmatprep.subr.mxu0 0.0
    %3457 = vmatpush2.msra.mxu0 0.0
    %3458 = vmatprep.subr.mxu0 0.0
    %3459 = vmatpush2.msra.mxu0 0.0
    %3460 = vmatprep.subr.mxu0 0.0
    %3461 = vmatpush2.msra.mxu0 0.0
    %3462 = vmatprep.subr.mxu0 0.0
    %3463 = vmatpush2.msra.mxu0 0.0
    %3464 = vmatprep.subr.mxu0 0.0
    %3465 = vmatpush2.msra.mxu0 0.0
    %3466 = vmatprep.subr.mxu0 0.0
    %3467 = vmatpush2.msra.mxu0 0.0
    %3468 = vmatprep.subr.mxu0 0.0
    %3469 = vmatpush2.msra.mxu0 0.0
    %3470 = vmatprep.mubr.f32.mxu0 0.0
    %3471 = vmatmul.mubr.f32.gmra.mxu0 %v3401
    %v3472 = vpop.f32.mrf.mxu0
    %v3473 = vadd.f32 %v1939, %v3472
    %v3474 = vpop.f32.mrf.mxu0
    %3475 = vmatprep.mubr.f32.mxu0 0.0
    %3476 = vmatmul.mubr.f32.gmra.mxu0 %v3404
    %v3477 = vpop.f32.mrf.mxu0
    %v3478 = vadd.f32 %v1939, %v3477
    %v3479 = vpop.f32.mrf.mxu0
    %3480 = vdwg.mxu0
    %3481 = vmatprep.subr.mxu0 0.0
    %3482 = vmatpush1.msra.mxu0 0.0
    %3483 = vmatprep.subr.mxu0 0.0
    %3484 = vmatpush1.msra.mxu0 0.0
    %3485 = vmatprep.subr.mxu0 0.0
    %3486 = vmatpush1.msra.mxu0 0.0
    %3487 = vmatprep.subr.mxu0 0.0
    %3488 = vmatpush1.msra.mxu0 0.0
    %3489 = vmatprep.subr.mxu0 0.0
    %3490 = vmatpush1.msra.mxu0 0.0
    %3491 = vmatprep.subr.mxu0 0.0
    %3492 = vmatpush1.msra.mxu0 0.0
    %3493 = vmatprep.subr.mxu0 0.0
    %3494 = vmatpush1.msra.mxu0 0.0
    %3495 = vmatprep.subr.mxu0 0.0
    %3496 = vmatpush1.msra.mxu0 0.0
    %3497 = vmatprep.subr.mxu0 0.0
    %3498 = vmatpush1.msra.mxu0 0.0
    %3499 = vmatprep.subr.mxu0 0.0
    %3500 = vmatpush1.msra.mxu0 0.0
    %3501 = vmatprep.subr.mxu0 0.0
    %3502 = vmatpush1.msra.mxu0 0.0
    %3503 = vmatprep.subr.mxu0 0.0
    %3504 = vmatpush1.msra.mxu0 0.0
    %3505 = vmatprep.subr.mxu0 0.0
    %3506 = vmatpush1.msra.mxu0 %v2026
    %3507 = vmatprep.subr.mxu0 0.0
    %3508 = vmatpush1.msra.mxu0 %v2025
    %3509 = vmatprep.subr.mxu0 0.0
    %3510 = vmatpush1.msra.mxu0 %v2024
    %3511 = vmatprep.subr.mxu0 0.0
    %3512 = vmatpush1.msra.mxu0 %v2023
    %3513 = vmatprep.subr.mxu0 0.0
    %3514 = vmatpush2.msra.mxu0 0.0
    %3515 = vmatprep.subr.mxu0 0.0
    %3516 = vmatpush2.msra.mxu0 0.0
    %3517 = vmatprep.subr.mxu0 0.0
    %3518 = vmatpush2.msra.mxu0 0.0
    %3519 = vmatprep.subr.mxu0 0.0
    %3520 = vmatpush2.msra.mxu0 0.0
    %3521 = vmatprep.subr.mxu0 0.0
    %3522 = vmatpush2.msra.mxu0 0.0
    %3523 = vmatprep.subr.mxu0 0.0
    %3524 = vmatpush2.msra.mxu0 0.0
    %3525 = vmatprep.subr.mxu0 0.0
    %3526 = vmatpush2.msra.mxu0 0.0
    %3527 = vmatprep.subr.mxu0 0.0
    %3528 = vmatpush2.msra.mxu0 0.0
    %3529 = vmatprep.subr.mxu0 0.0
    %3530 = vmatpush2.msra.mxu0 0.0
    %3531 = vmatprep.subr.mxu0 0.0
    %3532 = vmatpush2.msra.mxu0 0.0
    %3533 = vmatprep.subr.mxu0 0.0
    %3534 = vmatpush2.msra.mxu0 0.0
    %3535 = vmatprep.subr.mxu0 0.0
    %3536 = vmatpush2.msra.mxu0 0.0
    %3537 = vmatprep.subr.mxu0 0.0
    %3538 = vmatpush2.msra.mxu0 0.0
    %3539 = vmatprep.subr.mxu0 0.0
    %3540 = vmatpush2.msra.mxu0 0.0
    %3541 = vmatprep.subr.mxu0 0.0
    %3542 = vmatpush2.msra.mxu0 0.0
    %3543 = vmatprep.subr.mxu0 0.0
    %3544 = vmatpush2.msra.mxu0 0.0
    %3545 = vmatprep.mubr.f32.mxu0 0.0
    %3546 = vmatmul.mubr.f32.gmra.mxu0 %v3401
    %v3547 = vpop.f32.mrf.mxu0
    %v3548 = vadd.f32 %v2033, %v3547
    %v3549 = vpop.f32.mrf.mxu0
    %3550 = vmatprep.mubr.f32.mxu0 0.0
    %3551 = vmatmul.mubr.f32.gmra.mxu0 %v3404
    %v3552 = vpop.f32.mrf.mxu0
    %v3553 = vadd.f32 %v2033, %v3552
    %v3554 = vpop.f32.mrf.mxu0
    %3555 = vdwg.mxu0
    %3556 = vmatprep.subr.mxu0 0.0
    %3557 = vmatpush1.msra.mxu0 0.0
    %3558 = vmatprep.subr.mxu0 0.0
    %3559 = vmatpush1.msra.mxu0 0.0
    %3560 = vmatprep.subr.mxu0 0.0
    %3561 = vmatpush1.msra.mxu0 0.0
    %3562 = vmatprep.subr.mxu0 0.0
    %3563 = vmatpush1.msra.mxu0 0.0
    %3564 = vmatprep.subr.mxu0 0.0
    %3565 = vmatpush1.msra.mxu0 0.0
    %3566 = vmatprep.subr.mxu0 0.0
    %3567 = vmatpush1.msra.mxu0 0.0
    %3568 = vmatprep.subr.mxu0 0.0
    %3569 = vmatpush1.msra.mxu0 0.0
    %3570 = vmatprep.subr.mxu0 0.0
    %3571 = vmatpush1.msra.mxu0 0.0
    %3572 = vmatprep.subr.mxu0 0.0
    %3573 = vmatpush1.msra.mxu0 0.0
    %3574 = vmatprep.subr.mxu0 0.0
    %3575 = vmatpush1.msra.mxu0 0.0
    %3576 = vmatprep.subr.mxu0 0.0
    %3577 = vmatpush1.msra.mxu0 0.0
    %3578 = vmatprep.subr.mxu0 0.0
    %3579 = vmatpush1.msra.mxu0 0.0
    %3580 = vmatprep.subr.mxu0 0.0
    %3581 = vmatpush1.msra.mxu0 %v2114
    %3582 = vmatprep.subr.mxu0 0.0
    %3583 = vmatpush1.msra.mxu0 %v2113
    %3584 = vmatprep.subr.mxu0 0.0
    %3585 = vmatpush1.msra.mxu0 %v2112
    %3586 = vmatprep.subr.mxu0 0.0
    %3587 = vmatpush1.msra.mxu0 %v2111
    %3588 = vmatprep.subr.mxu0 0.0
    %3589 = vmatpush2.msra.mxu0 0.0
    %3590 = vmatprep.subr.mxu0 0.0
    %3591 = vmatpush2.msra.mxu0 0.0
    %3592 = vmatprep.subr.mxu0 0.0
    %3593 = vmatpush2.msra.mxu0 0.0
    %3594 = vmatprep.subr.mxu0 0.0
    %3595 = vmatpush2.msra.mxu0 0.0
    %3596 = vmatprep.subr.mxu0 0.0
    %3597 = vmatpush2.msra.mxu0 0.0
    %3598 = vmatprep.subr.mxu0 0.0
    %3599 = vmatpush2.msra.mxu0 0.0
    %3600 = vmatprep.subr.mxu0 0.0
    %3601 = vmatpush2.msra.mxu0 0.0
    %3602 = vmatprep.subr.mxu0 0.0
    %3603 = vmatpush2.msra.mxu0 0.0
    %3604 = vmatprep.subr.mxu0 0.0
    %3605 = vmatpush2.msra.mxu0 0.0
    %3606 = vmatprep.subr.mxu0 0.0
    %3607 = vmatpush2.msra.mxu0 0.0
    %3608 = vmatprep.subr.mxu0 0.0
    %3609 = vmatpush2.msra.mxu0 0.0
    %3610 = vmatprep.subr.mxu0 0.0
    %3611 = vmatpush2.msra.mxu0 0.0
    %3612 = vmatprep.subr.mxu0 0.0
    %3613 = vmatpush2.msra.mxu0 0.0
    %3614 = vmatprep.subr.mxu0 0.0
    %3615 = vmatpush2.msra.mxu0 0.0
    %3616 = vmatprep.subr.mxu0 0.0
    %3617 = vmatpush2.msra.mxu0 0.0
    %3618 = vmatprep.subr.mxu0 0.0
    %3619 = vmatpush2.msra.mxu0 0.0
    %3620 = vmatprep.mubr.f32.mxu0 0.0
    %3621 = vmatmul.mubr.f32.gmra.mxu0 %v3401
    %v3622 = vpop.f32.mrf.mxu0
    %v3623 = vadd.f32 %v2121, %v3622
    %v3624 = vpop.f32.mrf.mxu0
    %3625 = vmatprep.mubr.f32.mxu0 0.0
    %3626 = vmatmul.mubr.f32.gmra.mxu0 %v3404
    %v3627 = vpop.f32.mrf.mxu0
    %v3628 = vadd.f32 %v2121, %v3627
    %v3629 = vpop.f32.mrf.mxu0
    %3630 = vdwg.mxu0
    %v3632 = vsel %vm560, %v3473, 0
    %v3635 = vsel %vm560, %v3478, 0
    %v3638 = vsel %vm560, %v3548, 0
    %v3641 = vsel %vm560, %v3553, 0
    %3643 = vmatprep.subr.mxu0 0.0
    %3644 = vmatpush1.xpose.msra.mxu0 0.0
    %3645 = vmatprep.subr.mxu0 0.0
    %3646 = vmatpush1.xpose.msra.mxu0 0.0
    %3647 = vmatprep.subr.mxu0 0.0
    %3648 = vmatpush1.xpose.msra.mxu0 0.0
    %3649 = vmatprep.subr.mxu0 0.0
    %3650 = vmatpush1.xpose.msra.mxu0 0.0
    %3651 = vmatprep.subr.mxu0 0.0
    %3652 = vmatpush1.xpose.msra.mxu0 0.0
    %3653 = vmatprep.subr.mxu0 0.0
    %3654 = vmatpush1.xpose.msra.mxu0 0.0
    %3655 = vmatprep.subr.mxu0 0.0
    %3656 = vmatpush1.xpose.msra.mxu0 0.0
    %3657 = vmatprep.subr.mxu0 0.0
    %3658 = vmatpush1.xpose.msra.mxu0 0.0
    %3659 = vmatprep.subr.mxu0 0.0
    %3660 = vmatpush1.xpose.msra.mxu0 0.0
    %3661 = vmatprep.subr.mxu0 0.0
    %3662 = vmatpush1.xpose.msra.mxu0 0.0
    %3663 = vmatprep.subr.mxu0 0.0
    %3664 = vmatpush1.xpose.msra.mxu0 0.0
    %3665 = vmatprep.subr.mxu0 0.0
    %3666 = vmatpush1.xpose.msra.mxu0 0.0
    %3667 = vmatprep.subr.mxu0 0.0
    %3668 = vmatpush1.xpose.msra.mxu0 0.0
    %3669 = vmatprep.subr.mxu0 0.0
    %3670 = vmatpush1.xpose.msra.mxu0 0.0
    %3671 = vmatprep.subr.mxu0 0.0
    %3672 = vmatpush1.xpose.msra.mxu0 %v3641
    %3673 = vmatprep.subr.mxu0 0.0
    %3674 = vmatpush1.xpose.msra.mxu0 %v3638
    %3675 = vmatprep.subr.mxu0 0.0
    %3676 = vmatpush2.xpose.msra.mxu0 0.0
    %3677 = vmatprep.subr.mxu0 0.0
    %3678 = vmatpush2.xpose.msra.mxu0 0.0
    %3679 = vmatprep.subr.mxu0 0.0
    %3680 = vmatpush2.xpose.msra.mxu0 0.0
    %3681 = vmatprep.subr.mxu0 0.0
    %3682 = vmatpush2.xpose.msra.mxu0 0.0
    %3683 = vmatprep.subr.mxu0 0.0
    %3684 = vmatpush2.xpose.msra.mxu0 0.0
    %3685 = vmatprep.subr.mxu0 0.0
    %3686 = vmatpush2.xpose.msra.mxu0 0.0
    %3687 = vmatprep.subr.mxu0 0.0
    %3688 = vmatpush2.xpose.msra.mxu0 0.0
    %3689 = vmatprep.subr.mxu0 0.0
    %3690 = vmatpush2.xpose.msra.mxu0 0.0
    %3691 = vmatprep.subr.mxu0 0.0
    %3692 = vmatpush2.xpose.msra.mxu0 0.0
    %3693 = vmatprep.subr.mxu0 0.0
    %3694 = vmatpush2.xpose.msra.mxu0 0.0
    %3695 = vmatprep.subr.mxu0 0.0
    %3696 = vmatpush2.xpose.msra.mxu0 0.0
    %3697 = vmatprep.subr.mxu0 0.0
    %3698 = vmatpush2.xpose.msra.mxu0 0.0
    %3699 = vmatprep.subr.mxu0 0.0
    %3700 = vmatpush2.xpose.msra.mxu0 0.0
    %3701 = vmatprep.subr.mxu0 0.0
    %3702 = vmatpush2.xpose.msra.mxu0 0.0
    %3703 = vmatprep.subr.mxu0 0.0
    %3704 = vmatpush2.xpose.msra.mxu0 0.0
    %3705 = vmatprep.subr.mxu0 0.0
    %3706 = vmatpush2.xpose.msra.mxu0 0.0
    %3707 = vmatprep.mubr.f32.mxu0 0.0
    %3708 = vmatmul.mubr.f32.gmra.mxu0 %v3632
    %v3709 = vpop.f32.mrf.mxu0
    %v3710 = vadd.f32 %v68, %v3709
    %v3711 = vpop.f32.mrf.mxu0
    %3712 = vmatprep.mubr.f32.mxu0 0.0
    %3713 = vmatmul.mubr.f32.gmra.mxu0 %v3635
    %v3714 = vpop.f32.mrf.mxu0
    %v3715 = vadd.f32 %v69, %v3714
    %v3716 = vpop.f32.mrf.mxu0
    %3717 = vdwg.mxu0
    %v3718 = vsel %vm648, %v3710, -inf
    %3719 = vmax.xlane.f32.xlu0 %v3718
    %v3720 = vpop.xlane.xlu0 %3719
    %v3721 = vsel %vm648, %v3715, -inf
    %3722 = vmax.xlane.f32.xlu0 %v3721
    %v3723 = vpop.xlane.xlu0 %3722
    %v3724 = vsub.f32 %v3710, %v3720
    %v3725 = vsub.f32 %v3715, %v3723
    %v3726 = vmul.f32 %v3724, 1.442695
    %v3727 = vpow.pop %v3726
    %v3728 = vmul.f32 %v3725, 1.442695
    %v3729 = vpow.pop %v3728
    %v3730 = vsel %vm648, %v3727, 0.0
    %3731 = vadd.xlane.f32.xlu0 %v3730
    %v3732 = vpop.xlane.xlu0 %3731
    %v3733 = vsel %vm648, %v3729, 0.0
    %3734 = vadd.xlane.f32.xlu0 %v3733
    %v3735 = vpop.xlane.xlu0 %3734
    %v3736 = vrcp.pop %v3732
    %v3737 = vrcp.pop %v3735
    %v3738 = vmul.f32 %v3727, %v3736
    %v3739 = vmul.f32 %v3729, %v3737
    %v3741 = vsel %vm648, %v3738, 0
    %v3744 = vsel %vm648, %v3739, 0
    %3746 = vmatprep.subr.mxu0 0.0
    %3747 = vmatpush1.msra.mxu0 0.0
    %3748 = vmatprep.subr.mxu0 0.0
    %3749 = vmatpush1.msra.mxu0 0.0
    %3750 = vmatprep.subr.mxu0 0.0
    %3751 = vmatpush1.msra.mxu0 0.0
    %3752 = vmatprep.subr.mxu0 0.0
    %3753 = vmatpush1.msra.mxu0 0.0
    %3754 = vmatprep.subr.mxu0 0.0
    %3755 = vmatpush1.msra.mxu0 0.0
    %3756 = vmatprep.subr.mxu0 0.0
    %3757 = vmatpush1.msra.mxu0 0.0
    %3758 = vmatprep.subr.mxu0 0.0
    %3759 = vmatpush1.msra.mxu0 0.0
    %3760 = vmatprep.subr.mxu0 0.0
    %3761 = vmatpush1.msra.mxu0 0.0
    %3762 = vmatprep.subr.mxu0 0.0
    %3763 = vmatpush1.msra.mxu0 0.0
    %3764 = vmatprep.subr.mxu0 0.0
    %3765 = vmatpush1.msra.mxu0 0.0
    %3766 = vmatprep.subr.mxu0 0.0
    %3767 = vmatpush1.msra.mxu0 0.0
    %3768 = vmatprep.subr.mxu0 0.0
    %3769 = vmatpush1.msra.mxu0 0.0
    %3770 = vmatprep.subr.mxu0 0.0
    %3771 = vmatpush1.msra.mxu0 0.0
    %3772 = vmatprep.subr.mxu0 0.0
    %3773 = vmatpush1.msra.mxu0 0.0
    %3774 = vmatprep.subr.mxu0 0.0
    %3775 = vmatpush1.msra.mxu0 %v3628
    %3776 = vmatprep.subr.mxu0 0.0
    %3777 = vmatpush1.msra.mxu0 %v3623
    %3778 = vmatprep.subr.mxu0 0.0
    %3779 = vmatpush2.msra.mxu0 0.0
    %3780 = vmatprep.subr.mxu0 0.0
    %3781 = vmatpush2.msra.mxu0 0.0
    %3782 = vmatprep.subr.mxu0 0.0
    %3783 = vmatpush2.msra.mxu0 0.0
    %3784 = vmatprep.subr.mxu0 0.0
    %3785 = vmatpush2.msra.mxu0 0.0
    %3786 = vmatprep.subr.mxu0 0.0
    %3787 = vmatpush2.msra.mxu0 0.0
    %3788 = vmatprep.subr.mxu0 0.0
    %3789 = vmatpush2.msra.mxu0 0.0
    %3790 = vmatprep.subr.mxu0 0.0
    %3791 = vmatpush2.msra.mxu0 0.0
    %3792 = vmatprep.subr.mxu0 0.0
    %3793 = vmatpush2.msra.mxu0 0.0
    %3794 = vmatprep.subr.mxu0 0.0
    %3795 = vmatpush2.msra.mxu0 0.0
    %3796 = vmatprep.subr.mxu0 0.0
    %3797 = vmatpush2.msra.mxu0 0.0
    %3798 = vmatprep.subr.mxu0 0.0
    %3799 = vmatpush2.msra.mxu0 0.0
    %3800 = vmatprep.subr.mxu0 0.0
    %3801 = vmatpush2.msra.mxu0 0.0
    %3802 = vmatprep.subr.mxu0 0.0
    %3803 = vmatpush2.msra.mxu0 0.0
    %3804 = vmatprep.subr.mxu0 0.0
    %3805 = vmatpush2.msra.mxu0 0.0
    %3806 = vmatprep.subr.mxu0 0.0
    %3807 = vmatpush2.msra.mxu0 0.0
    %3808 = vmatprep.subr.mxu0 0.0
    %3809 = vmatpush2.msra.mxu0 0.0
    %3810 = vmatprep.mubr.f32.mxu0 0.0
    %3811 = vmatmul.mubr.f32.gmra.mxu0 %v3741
    %v3812 = vpop.f32.mrf.mxu0
    %v3813 = vadd.f32 0.0, %v3812
    %v3814 = vpop.f32.mrf.mxu0
    %3815 = vmatprep.mubr.f32.mxu0 0.0
    %3816 = vmatmul.mubr.f32.gmra.mxu0 %v3744
    %v3817 = vpop.f32.mrf.mxu0
    %v3818 = vadd.f32 0.0, %v3817
    %v3819 = vpop.f32.mrf.mxu0
    %3820 = vdwg.mxu0
    %v3822 = vsel %vm560, %v3813, 0
    %v3825 = vsel %vm560, %v3818, 0
    %3827 = vmatprep.subr.mxu0 0.0
    %3828 = vmatpush1.msra.mxu0 0.0
    %3829 = vmatprep.subr.mxu0 0.0
    %3830 = vmatpush1.msra.mxu0 0.0
    %3831 = vmatprep.subr.mxu0 0.0
    %3832 = vmatpush1.msra.mxu0 0.0
    %3833 = vmatprep.subr.mxu0 0.0
    %3834 = vmatpush1.msra.mxu0 0.0
    %3835 = vmatprep.subr.mxu0 0.0
    %3836 = vmatpush1.msra.mxu0 0.0
    %3837 = vmatprep.subr.mxu0 0.0
    %3838 = vmatpush1.msra.mxu0 0.0
    %3839 = vmatprep.subr.mxu0 0.0
    %3840 = vmatpush1.msra.mxu0 0.0
    %3841 = vmatprep.subr.mxu0 0.0
    %3842 = vmatpush1.msra.mxu0 0.0
    %3843 = vmatprep.subr.mxu0 0.0
    %3844 = vmatpush1.msra.mxu0 %v2396
    %3845 = vmatprep.subr.mxu0 0.0
    %3846 = vmatpush1.msra.mxu0 %v2395
    %3847 = vmatprep.subr.mxu0 0.0
    %3848 = vmatpush1.msra.mxu0 %v2394
    %3849 = vmatprep.subr.mxu0 0.0
    %3850 = vmatpush1.msra.mxu0 %v2393
    %3851 = vmatprep.subr.mxu0 0.0
    %3852 = vmatpush1.msra.mxu0 %v2392
    %3853 = vmatprep.subr.mxu0 0.0
    %3854 = vmatpush1.msra.mxu0 %v2391
    %3855 = vmatprep.subr.mxu0 0.0
    %3856 = vmatpush1.msra.mxu0 %v2390
    %3857 = vmatprep.subr.mxu0 0.0
    %3858 = vmatpush1.msra.mxu0 %v2389
    %3859 = vmatprep.subr.mxu0 0.0
    %3860 = vmatpush2.msra.mxu0 0.0
    %3861 = vmatprep.subr.mxu0 0.0
    %3862 = vmatpush2.msra.mxu0 0.0
    %3863 = vmatprep.subr.mxu0 0.0
    %3864 = vmatpush2.msra.mxu0 0.0
    %3865 = vmatprep.subr.mxu0 0.0
    %3866 = vmatpush2.msra.mxu0 0.0
    %3867 = vmatprep.subr.mxu0 0.0
    %3868 = vmatpush2.msra.mxu0 0.0
    %3869 = vmatprep.subr.mxu0 0.0
    %3870 = vmatpush2.msra.mxu0 0.0
    %3871 = vmatprep.subr.mxu0 0.0
    %3872 = vmatpush2.msra.mxu0 0.0
    %3873 = vmatprep.subr.mxu0 0.0
    %3874 = vmatpush2.msra.mxu0 0.0
    %3875 = vmatprep.subr.mxu0 0.0
    %3876 = vmatpush2.msra.mxu0 0.0
    %3877 = vmatprep.subr.mxu0 0.0
    %3878 = vmatpush2.msra.mxu0 0.0
    %3879 = vmatprep.subr.mxu0 0.0
    %3880 = vmatpush2.msra.mxu0 0.0
    %3881 = vmatprep.subr.mxu0 0.0
    %3882 = vmatpush2.msra.mxu0 0.0
    %3883 = vmatprep.subr.mxu0 0.0
    %3884 = vmatpush2.msra.mxu0 0.0
    %3885 = vmatprep.subr.mxu0 0.0
    %3886 = vmatpush2.msra.mxu0 0.0
    %3887 = vmatprep.subr.mxu0 0.0
    %3888 = vmatpush2.msra.mxu0 0.0
    %3889 = vmatprep.subr.mxu0 0.0
    %3890 = vmatpush2.msra.mxu0 0.0
    %3891 = vmatprep.mubr.f32.mxu0 0.0
    %3892 = vmatmul.mubr.f32.gmra.mxu0 %v3822
    %v3893 = vpop.f32.mrf.mxu0
    %v3894 = vadd.f32 %v2403, %v3893
    %v3895 = vpop.f32.mrf.mxu0
    %3896 = vmatprep.mubr.f32.mxu0 0.0
    %3897 = vmatmul.mubr.f32.gmra.mxu0 %v3825
    %v3898 = vpop.f32.mrf.mxu0
    %v3899 = vadd.f32 %v2403, %v3898
    %v3900 = vpop.f32.mrf.mxu0
    %3901 = vdwg.mxu0
    %v3902 = vadd.f32 %v3398, %v3894
    %v3903 = vadd.f32 %v3399, %v3899
    %v3904 = vsel %vm302, %v3902, 0.0
    %3905 = vadd.xlane.f32.xlu0 %v3904
    %v3906 = vpop.xlane.xlu0 %3905
    %v3907 = vsel %vm302, %v3903, 0.0
    %3908 = vadd.xlane.f32.xlu0 %v3907
    %v3909 = vpop.xlane.xlu0 %3908
    %v3910 = vmul.f32 %v3902, %v3902
    %v3911 = vmul.f32 %v3903, %v3903
    %v3912 = vsel %vm302, %v3910, 0.0
    %3913 = vadd.xlane.f32.xlu0 %v3912
    %v3914 = vpop.xlane.xlu0 %3913
    %v3915 = vsel %vm302, %v3911, 0.0
    %3916 = vadd.xlane.f32.xlu0 %v3915
    %v3917 = vpop.xlane.xlu0 %3916
    %v3918 = vmul.f32 %v3906, 0.03125
    %v3919 = vmul.f32 %v3909, 0.03125
    %v3920 = vmul.f32 %v3906, %v3918
    %v3921 = vmul.f32 %v3909, %v3919
    %v3922 = vsub.f32 %v3914, %v3920
    %v3923 = vsub.f32 %v3917, %v3921
    %v3924 = vmul.f32 %v3922, 0.032258064
    %v3925 = vmul.f32 %v3923, 0.032258064
    %v3926 = vmax.f32 %v3924, 0.0
    %v3927 = vmax.f32 %v3925, 0.0
    %v3928 = vrsqrt.pop %v3926
    %v3929 = vmul.f32 %v3926, %v3928
    %vm3930 = vcmp.eq.f32.partialorder %v3926, inf
    %v3931 = vsel %vm3930, %v3926, %v3929
    %vm3932 = vcmp.eq.f32.partialorder %v3926, 0.0
    %v3933 = vand.u32 %v3926, 2147483648
    %v3934 = vsel %vm3932, %v3933, %v3931
    %v3935 = vrsqrt.pop %v3927
    %v3936 = vmul.f32 %v3927, %v3935
    %vm3937 = vcmp.eq.f32.partialorder %v3927, inf
    %v3938 = vsel %vm3937, %v3927, %v3936
    %vm3939 = vcmp.eq.f32.partialorder %v3927, 0.0
    %v3940 = vand.u32 %v3927, 2147483648
    %v3941 = vsel %vm3939, %v3940, %v3938
    %v3942 = vadd.f32 %v3934, 1e-06
    %v3943 = vadd.f32 %v3941, 1e-06
    %v3944 = vsub.f32 %v3902, %v3918
    %v3945 = vsub.f32 %v3903, %v3919
    %v3946 = vmul.f32 %v896, %v3944
    %v3947 = vmul.f32 %v896, %v3945
    %v3948 = vrcp.pop %v3942
    %v3949 = vrcp.pop %v3943
    %v3950 = vmul.f32 %v3946, %v3948
    %v3951 = vmul.f32 %v3947, %v3949
    %v3952 = vadd.f32 %v3950, %v908
    %v3953 = vadd.f32 %v3951, %v908
    %v3955 = vsel %vm302, %v3952, 0
    %v3958 = vsel %vm302, %v3953, 0
    %3960 = vmatprep.subr.mxu0 0.0
    %3961 = vmatpush1.msra.mxu0 0.0
    %3962 = vmatprep.subr.mxu0 0.0
    %3963 = vmatpush1.msra.mxu0 0.0
    %3964 = vmatprep.subr.mxu0 0.0
    %3965 = vmatpush1.msra.mxu0 0.0
    %3966 = vmatprep.subr.mxu0 0.0
    %3967 = vmatpush1.msra.mxu0 0.0
    %3968 = vmatprep.subr.mxu0 0.0
    %3969 = vmatpush1.msra.mxu0 0.0
    %3970 = vmatprep.subr.mxu0 0.0
    %3971 = vmatpush1.msra.mxu0 0.0
    %3972 = vmatprep.subr.mxu0 0.0
    %3973 = vmatpush1.msra.mxu0 0.0
    %3974 = vmatprep.subr.mxu0 0.0
    %3975 = vmatpush1.msra.mxu0 0.0
    %3976 = vmatprep.subr.mxu0 0.0
    %3977 = vmatpush1.msra.mxu0 0.0
    %3978 = vmatprep.subr.mxu0 0.0
    %3979 = vmatpush1.msra.mxu0 0.0
    %3980 = vmatprep.subr.mxu0 0.0
    %3981 = vmatpush1.msra.mxu0 0.0
    %3982 = vmatprep.subr.mxu0 0.0
    %3983 = vmatpush1.msra.mxu0 0.0
    %3984 = vmatprep.subr.mxu0 0.0
    %3985 = vmatpush1.msra.mxu0 %v2542
    %3986 = vmatprep.subr.mxu0 0.0
    %3987 = vmatpush1.msra.mxu0 %v2541
    %3988 = vmatprep.subr.mxu0 0.0
    %3989 = vmatpush1.msra.mxu0 %v2540
    %3990 = vmatprep.subr.mxu0 0.0
    %3991 = vmatpush1.msra.mxu0 %v2539
    %3992 = vmatprep.subr.mxu0 0.0
    %3993 = vmatpush2.msra.mxu0 0.0
    %3994 = vmatprep.subr.mxu0 0.0
    %3995 = vmatpush2.msra.mxu0 0.0
    %3996 = vmatprep.subr.mxu0 0.0
    %3997 = vmatpush2.msra.mxu0 0.0
    %3998 = vmatprep.subr.mxu0 0.0
    %3999 = vmatpush2.msra.mxu0 0.0
    %4000 = vmatprep.subr.mxu0 0.0
    %4001 = vmatpush2.msra.mxu0 0.0
    %4002 = vmatprep.subr.mxu0 0.0
    %4003 = vmatpush2.msra.mxu0 0.0
    %4004 = vmatprep.subr.mxu0 0.0
    %4005 = vmatpush2.msra.mxu0 0.0
    %4006 = vmatprep.subr.mxu0 0.0
    %4007 = vmatpush2.msra.mxu0 0.0
    %4008 = vmatprep.subr.mxu0 0.0
    %4009 = vmatpush2.msra.mxu0 0.0
    %4010 = vmatprep.subr.mxu0 0.0
    %4011 = vmatpush2.msra.mxu0 0.0
    %4012 = vmatprep.subr.mxu0 0.0
    %4013 = vmatpush2.msra.mxu0 0.0
    %4014 = vmatprep.subr.mxu0 0.0
    %4015 = vmatpush2.msra.mxu0 0.0
    %4016 = vmatprep.subr.mxu0 0.0
    %4017 = vmatpush2.msra.mxu0 0.0
    %4018 = vmatprep.subr.mxu0 0.0
    %4019 = vmatpush2.msra.mxu0 0.0
    %4020 = vmatprep.subr.mxu0 0.0
    %4021 = vmatpush2.msra.mxu0 0.0
    %4022 = vmatprep.subr.mxu0 0.0
    %4023 = vmatpush2.msra.mxu0 0.0
    %4024 = vmatprep.mubr.f32.mxu0 0.0
    %4025 = vmatmul.mubr.f32.gmra.mxu0 %v3955
    %v4026 = vpop.f32.mrf.mxu0
    %v4027 = vadd.f32 %v2549, %v4026
    %v4028 = vpop.f32.mrf.mxu0
    %4029 = vmatprep.mubr.f32.mxu0 0.0
    %4030 = vmatmul.mubr.f32.gmra.mxu0 %v3958
    %v4031 = vpop.f32.mrf.mxu0
    %v4032 = vadd.f32 %v2549, %v4031
    %v4033 = vpop.f32.mrf.mxu0
    %4034 = vdwg.mxu0
    %v4036 = vsel %vm560, %v4027, 0
    %v4039 = vsel %vm560, %v4032, 0
    %4041 = vmatprep.subr.mxu0 0.0
    %4042 = vmatpush1.xpose.msra.mxu0 0.0
    %4043 = vmatprep.subr.mxu0 0.0
    %4044 = vmatpush1.xpose.msra.mxu0 0.0
    %4045 = vmatprep.subr.mxu0 0.0
    %4046 = vmatpush1.xpose.msra.mxu0 0.0
    %4047 = vmatprep.subr.mxu0 0.0
    %4048 = vmatpush1.xpose.msra.mxu0 0.0
    %4049 = vmatprep.subr.mxu0 0.0
    %4050 = vmatpush1.xpose.msra.mxu0 0.0
    %4051 = vmatprep.subr.mxu0 0.0
    %4052 = vmatpush1.xpose.msra.mxu0 0.0
    %4053 = vmatprep.subr.mxu0 0.0
    %4054 = vmatpush1.xpose.msra.mxu0 0.0
    %4055 = vmatprep.subr.mxu0 0.0
    %4056 = vmatpush1.xpose.msra.mxu0 0.0
    %4057 = vmatprep.subr.mxu0 0.0
    %4058 = vmatpush1.xpose.msra.mxu0 0.0
    %4059 = vmatprep.subr.mxu0 0.0
    %4060 = vmatpush1.xpose.msra.mxu0 0.0
    %4061 = vmatprep.subr.mxu0 0.0
    %4062 = vmatpush1.xpose.msra.mxu0 0.0
    %4063 = vmatprep.subr.mxu0 0.0
    %4064 = vmatpush1.xpose.msra.mxu0 0.0
    %4065 = vmatprep.subr.mxu0 0.0
    %4066 = vmatpush1.xpose.msra.mxu0 0.0
    %4067 = vmatprep.subr.mxu0 0.0
    %4068 = vmatpush1.xpose.msra.mxu0 0.0
    %4069 = vmatprep.subr.mxu0 0.0
    %4070 = vmatpush1.xpose.msra.mxu0 %v2824
    %4071 = vmatprep.subr.mxu0 0.0
    %4072 = vmatpush1.xpose.msra.mxu0 %v2821
    %4073 = vmatprep.subr.mxu0 0.0
    %4074 = vmatpush2.xpose.msra.mxu0 0.0
    %4075 = vmatprep.subr.mxu0 0.0
    %4076 = vmatpush2.xpose.msra.mxu0 0.0
    %4077 = vmatprep.subr.mxu0 0.0
    %4078 = vmatpush2.xpose.msra.mxu0 0.0
    %4079 = vmatprep.subr.mxu0 0.0
    %4080 = vmatpush2.xpose.msra.mxu0 0.0
    %4081 = vmatprep.subr.mxu0 0.0
    %4082 = vmatpush2.xpose.msra.mxu0 0.0
    %4083 = vmatprep.subr.mxu0 0.0
    %4084 = vmatpush2.xpose.msra.mxu0 0.0
    %4085 = vmatprep.subr.mxu0 0.0
    %4086 = vmatpush2.xpose.msra.mxu0 0.0
    %4087 = vmatprep.subr.mxu0 0.0
    %4088 = vmatpush2.xpose.msra.mxu0 0.0
    %4089 = vmatprep.subr.mxu0 0.0
    %4090 = vmatpush2.xpose.msra.mxu0 0.0
    %4091 = vmatprep.subr.mxu0 0.0
    %4092 = vmatpush2.xpose.msra.mxu0 0.0
    %4093 = vmatprep.subr.mxu0 0.0
    %4094 = vmatpush2.xpose.msra.mxu0 0.0
    %4095 = vmatprep.subr.mxu0 0.0
    %4096 = vmatpush2.xpose.msra.mxu0 0.0
    %4097 = vmatprep.subr.mxu0 0.0
    %4098 = vmatpush2.xpose.msra.mxu0 0.0
    %4099 = vmatprep.subr.mxu0 0.0
    %4100 = vmatpush2.xpose.msra.mxu0 0.0
    %4101 = vmatprep.subr.mxu0 0.0
    %4102 = vmatpush2.xpose.msra.mxu0 0.0
    %4103 = vmatprep.subr.mxu0 0.0
    %4104 = vmatpush2.xpose.msra.mxu0 0.0
    %4105 = vmatprep.mubr.f32.mxu0 0.0
    %4106 = vmatmul.mubr.f32.gmra.mxu0 %v4036
    %v4107 = vpop.f32.mrf.mxu0
    %v4108 = vadd.f32 %v49, %v4107
    %v4109 = vpop.f32.mrf.mxu0
    %4110 = vmatprep.mubr.f32.mxu0 0.0
    %4111 = vmatmul.mubr.f32.gmra.mxu0 %v4039
    %v4112 = vpop.f32.mrf.mxu0
    %v4113 = vadd.f32 %v50, %v4112
    %v4114 = vpop.f32.mrf.mxu0
    %4115 = vdwg.mxu0
    %v4116 = vsel %vm648, %v4108, -inf
    %4117 = vmax.xlane.f32.xlu0 %v4116
    %v4118 = vpop.xlane.xlu0 %4117
    %v4119 = vsel %vm648, %v4113, -inf
    %4120 = vmax.xlane.f32.xlu0 %v4119
    %v4121 = vpop.xlane.xlu0 %4120
    %v4122 = vsub.f32 %v4108, %v4118
    %v4123 = vsub.f32 %v4113, %v4121
    %v4124 = vmul.f32 %v4122, 1.442695
    %v4125 = vpow.pop %v4124
    %v4126 = vmul.f32 %v4123, 1.442695
    %v4127 = vpow.pop %v4126
    %v4128 = vsel %vm648, %v4125, 0.0
    %4129 = vadd.xlane.f32.xlu0 %v4128
    %v4130 = vpop.xlane.xlu0 %4129
    %v4131 = vsel %vm648, %v4127, 0.0
    %4132 = vadd.xlane.f32.xlu0 %v4131
    %v4133 = vpop.xlane.xlu0 %4132
    %v4134 = vrcp.pop %v4130
    %v4135 = vrcp.pop %v4133
    %v4136 = vmul.f32 %v4125, %v4134
    %v4137 = vmul.f32 %v4127, %v4135
    %v4139 = vsel %vm648, %v4136, 0
    %v4142 = vsel %vm648, %v4137, 0
    %4144 = vmatprep.subr.mxu0 0.0
    %4145 = vmatpush1.msra.mxu0 0.0
    %4146 = vmatprep.subr.mxu0 0.0
    %4147 = vmatpush1.msra.mxu0 0.0
    %4148 = vmatprep.subr.mxu0 0.0
    %4149 = vmatpush1.msra.mxu0 0.0
    %4150 = vmatprep.subr.mxu0 0.0
    %4151 = vmatpush1.msra.mxu0 0.0
    %4152 = vmatprep.subr.mxu0 0.0
    %4153 = vmatpush1.msra.mxu0 0.0
    %4154 = vmatprep.subr.mxu0 0.0
    %4155 = vmatpush1.msra.mxu0 0.0
    %4156 = vmatprep.subr.mxu0 0.0
    %4157 = vmatpush1.msra.mxu0 0.0
    %4158 = vmatprep.subr.mxu0 0.0
    %4159 = vmatpush1.msra.mxu0 0.0
    %4160 = vmatprep.subr.mxu0 0.0
    %4161 = vmatpush1.msra.mxu0 0.0
    %4162 = vmatprep.subr.mxu0 0.0
    %4163 = vmatpush1.msra.mxu0 0.0
    %4164 = vmatprep.subr.mxu0 0.0
    %4165 = vmatpush1.msra.mxu0 0.0
    %4166 = vmatprep.subr.mxu0 0.0
    %4167 = vmatpush1.msra.mxu0 0.0
    %4168 = vmatprep.subr.mxu0 0.0
    %4169 = vmatpush1.msra.mxu0 0.0
    %4170 = vmatprep.subr.mxu0 0.0
    %4171 = vmatpush1.msra.mxu0 0.0
    %4172 = vmatprep.subr.mxu0 0.0
    %4173 = vmatpush1.msra.mxu0 %v2811
    %4174 = vmatprep.subr.mxu0 0.0
    %4175 = vmatpush1.msra.mxu0 %v2806
    %4176 = vmatprep.subr.mxu0 0.0
    %4177 = vmatpush2.msra.mxu0 0.0
    %4178 = vmatprep.subr.mxu0 0.0
    %4179 = vmatpush2.msra.mxu0 0.0
    %4180 = vmatprep.subr.mxu0 0.0
    %4181 = vmatpush2.msra.mxu0 0.0
    %4182 = vmatprep.subr.mxu0 0.0
    %4183 = vmatpush2.msra.mxu0 0.0
    %4184 = vmatprep.subr.mxu0 0.0
    %4185 = vmatpush2.msra.mxu0 0.0
    %4186 = vmatprep.subr.mxu0 0.0
    %4187 = vmatpush2.msra.mxu0 0.0
    %4188 = vmatprep.subr.mxu0 0.0
    %4189 = vmatpush2.msra.mxu0 0.0
    %4190 = vmatprep.subr.mxu0 0.0
    %4191 = vmatpush2.msra.mxu0 0.0
    %4192 = vmatprep.subr.mxu0 0.0
    %4193 = vmatpush2.msra.mxu0 0.0
    %4194 = vmatprep.subr.mxu0 0.0
    %4195 = vmatpush2.msra.mxu0 0.0
    %4196 = vmatprep.subr.mxu0 0.0
    %4197 = vmatpush2.msra.mxu0 0.0
    %4198 = vmatprep.subr.mxu0 0.0
    %4199 = vmatpush2.msra.mxu0 0.0
    %4200 = vmatprep.subr.mxu0 0.0
    %4201 = vmatpush2.msra.mxu0 0.0
    %4202 = vmatprep.subr.mxu0 0.0
    %4203 = vmatpush2.msra.mxu0 0.0
    %4204 = vmatprep.subr.mxu0 0.0
    %4205 = vmatpush2.msra.mxu0 0.0
    %4206 = vmatprep.subr.mxu0 0.0
    %4207 = vmatpush2.msra.mxu0 0.0
    %4208 = vmatprep.mubr.f32.mxu0 0.0
    %4209 = vmatmul.mubr.f32.gmra.mxu0 %v4139
    %v4210 = vpop.f32.mrf.mxu0
    %v4211 = vadd.f32 0.0, %v4210
    %v4212 = vpop.f32.mrf.mxu0
    %4213 = vmatprep.mubr.f32.mxu0 0.0
    %4214 = vmatmul.mubr.f32.gmra.mxu0 %v4142
    %v4215 = vpop.f32.mrf.mxu0
    %v4216 = vadd.f32 0.0, %v4215
    %v4217 = vpop.f32.mrf.mxu0
    %4218 = vdwg.mxu0
    %v4220 = vsel %vm560, %v4211, 0
    %v4223 = vsel %vm560, %v4216, 0
    %4225 = vmatprep.subr.mxu0 0.0
    %4226 = vmatpush1.msra.mxu0 0.0
    %4227 = vmatprep.subr.mxu0 0.0
    %4228 = vmatpush1.msra.mxu0 0.0
    %4229 = vmatprep.subr.mxu0 0.0
    %4230 = vmatpush1.msra.mxu0 0.0
    %4231 = vmatprep.subr.mxu0 0.0
    %4232 = vmatpush1.msra.mxu0 0.0
    %4233 = vmatprep.subr.mxu0 0.0
    %4234 = vmatpush1.msra.mxu0 0.0
    %4235 = vmatprep.subr.mxu0 0.0
    %4236 = vmatpush1.msra.mxu0 0.0
    %4237 = vmatprep.subr.mxu0 0.0
    %4238 = vmatpush1.msra.mxu0 0.0
    %4239 = vmatprep.subr.mxu0 0.0
    %4240 = vmatpush1.msra.mxu0 0.0
    %4241 = vmatprep.subr.mxu0 0.0
    %4242 = vmatpush1.msra.mxu0 %v3012
    %4243 = vmatprep.subr.mxu0 0.0
    %4244 = vmatpush1.msra.mxu0 %v3011
    %4245 = vmatprep.subr.mxu0 0.0
    %4246 = vmatpush1.msra.mxu0 %v3010
    %4247 = vmatprep.subr.mxu0 0.0
    %4248 = vmatpush1.msra.mxu0 %v3009
    %4249 = vmatprep.subr.mxu0 0.0
    %4250 = vmatpush1.msra.mxu0 %v3008
    %4251 = vmatprep.subr.mxu0 0.0
    %4252 = vmatpush1.msra.mxu0 %v3007
    %4253 = vmatprep.subr.mxu0 0.0
    %4254 = vmatpush1.msra.mxu0 %v3006
    %4255 = vmatprep.subr.mxu0 0.0
    %4256 = vmatpush1.msra.mxu0 %v3005
    %4257 = vmatprep.subr.mxu0 0.0
    %4258 = vmatpush2.msra.mxu0 0.0
    %4259 = vmatprep.subr.mxu0 0.0
    %4260 = vmatpush2.msra.mxu0 0.0
    %4261 = vmatprep.subr.mxu0 0.0
    %4262 = vmatpush2.msra.mxu0 0.0
    %4263 = vmatprep.subr.mxu0 0.0
    %4264 = vmatpush2.msra.mxu0 0.0
    %4265 = vmatprep.subr.mxu0 0.0
    %4266 = vmatpush2.msra.mxu0 0.0
    %4267 = vmatprep.subr.mxu0 0.0
    %4268 = vmatpush2.msra.mxu0 0.0
    %4269 = vmatprep.subr.mxu0 0.0
    %4270 = vmatpush2.msra.mxu0 0.0
    %4271 = vmatprep.subr.mxu0 0.0
    %4272 = vmatpush2.msra.mxu0 0.0
    %4273 = vmatprep.subr.mxu0 0.0
    %4274 = vmatpush2.msra.mxu0 0.0
    %4275 = vmatprep.subr.mxu0 0.0
    %4276 = vmatpush2.msra.mxu0 0.0
    %4277 = vmatprep.subr.mxu0 0.0
    %4278 = vmatpush2.msra.mxu0 0.0
    %4279 = vmatprep.subr.mxu0 0.0
    %4280 = vmatpush2.msra.mxu0 0.0
    %4281 = vmatprep.subr.mxu0 0.0
    %4282 = vmatpush2.msra.mxu0 0.0
    %4283 = vmatprep.subr.mxu0 0.0
    %4284 = vmatpush2.msra.mxu0 0.0
    %4285 = vmatprep.subr.mxu0 0.0
    %4286 = vmatpush2.msra.mxu0 0.0
    %4287 = vmatprep.subr.mxu0 0.0
    %4288 = vmatpush2.msra.mxu0 0.0
    %4289 = vmatprep.mubr.f32.mxu0 0.0
    %4290 = vmatmul.mubr.f32.gmra.mxu0 %v4220
    %v4291 = vpop.f32.mrf.mxu0
    %v4292 = vadd.f32 %v3019, %v4291
    %v4293 = vpop.f32.mrf.mxu0
    %4294 = vmatprep.mubr.f32.mxu0 0.0
    %4295 = vmatmul.mubr.f32.gmra.mxu0 %v4223
    %v4296 = vpop.f32.mrf.mxu0
    %v4297 = vadd.f32 %v3019, %v4296
    %v4298 = vpop.f32.mrf.mxu0
    %4299 = vdwg.mxu0
    %v4300 = vadd.f32 %v3952, %v4292
    %v4301 = vadd.f32 %v3953, %v4297
    %v4302 = vsel %vm302, %v4300, 0.0
    %4303 = vadd.xlane.f32.xlu0 %v4302
    %v4304 = vpop.xlane.xlu0 %4303
    %v4305 = vsel %vm302, %v4301, 0.0
    %4306 = vadd.xlane.f32.xlu0 %v4305
    %v4307 = vpop.xlane.xlu0 %4306
    %v4308 = vmul.f32 %v4300, %v4300
    %v4309 = vmul.f32 %v4301, %v4301
    %v4310 = vsel %vm302, %v4308, 0.0
    %4311 = vadd.xlane.f32.xlu0 %v4310
    %v4312 = vpop.xlane.xlu0 %4311
    %v4313 = vsel %vm302, %v4309, 0.0
    %4314 = vadd.xlane.f32.xlu0 %v4313
    %v4315 = vpop.xlane.xlu0 %4314
    %v4316 = vmul.f32 %v4304, 0.03125
    %v4317 = vmul.f32 %v4307, 0.03125
    %v4318 = vmul.f32 %v4304, %v4316
    %v4319 = vmul.f32 %v4307, %v4317
    %v4320 = vsub.f32 %v4312, %v4318
    %v4321 = vsub.f32 %v4315, %v4319
    %v4322 = vmul.f32 %v4320, 0.032258064
    %v4323 = vmul.f32 %v4321, 0.032258064
    %v4324 = vmax.f32 %v4322, 0.0
    %v4325 = vmax.f32 %v4323, 0.0
    %v4326 = vrsqrt.pop %v4324
    %v4327 = vmul.f32 %v4324, %v4326
    %vm4328 = vcmp.eq.f32.partialorder %v4324, inf
    %v4329 = vsel %vm4328, %v4324, %v4327
    %vm4330 = vcmp.eq.f32.partialorder %v4324, 0.0
    %v4331 = vand.u32 %v4324, 2147483648
    %v4332 = vsel %vm4330, %v4331, %v4329
    %v4333 = vrsqrt.pop %v4325
    %v4334 = vmul.f32 %v4325, %v4333
    %vm4335 = vcmp.eq.f32.partialorder %v4325, inf
    %v4336 = vsel %vm4335, %v4325, %v4334
    %vm4337 = vcmp.eq.f32.partialorder %v4325, 0.0
    %v4338 = vand.u32 %v4325, 2147483648
    %v4339 = vsel %vm4337, %v4338, %v4336
    %v4340 = vadd.f32 %v4332, 1e-06
    %v4341 = vadd.f32 %v4339, 1e-06
    %v4342 = vsub.f32 %v4300, %v4316
    %v4343 = vsub.f32 %v4301, %v4317
    %v4344 = vmul.f32 %v896, %v4342
    %v4345 = vmul.f32 %v896, %v4343
    %v4346 = vrcp.pop %v4340
    %v4347 = vrcp.pop %v4341
    %v4348 = vmul.f32 %v4344, %v4346
    %v4349 = vmul.f32 %v4345, %v4347
    %v4350 = vadd.f32 %v4348, %v908
    %v4351 = vadd.f32 %v4349, %v908
    %v4353 = vsel %vm302, %v4350, 0
    %v4356 = vsel %vm302, %v4351, 0
    %4358 = vmatprep.subr.mxu0 0.0
    %4359 = vmatpush1.msra.mxu0 0.0
    %4360 = vmatprep.subr.mxu0 0.0
    %4361 = vmatpush1.msra.mxu0 0.0
    %4362 = vmatprep.subr.mxu0 0.0
    %4363 = vmatpush1.msra.mxu0 0.0
    %4364 = vmatprep.subr.mxu0 0.0
    %4365 = vmatpush1.msra.mxu0 0.0
    %4366 = vmatprep.subr.mxu0 0.0
    %4367 = vmatpush1.msra.mxu0 0.0
    %4368 = vmatprep.subr.mxu0 0.0
    %4369 = vmatpush1.msra.mxu0 0.0
    %4370 = vmatprep.subr.mxu0 0.0
    %4371 = vmatpush1.msra.mxu0 0.0
    %4372 = vmatprep.subr.mxu0 0.0
    %4373 = vmatpush1.msra.mxu0 0.0
    %4374 = vmatprep.subr.mxu0 0.0
    %4375 = vmatpush1.msra.mxu0 0.0
    %4376 = vmatprep.subr.mxu0 0.0
    %4377 = vmatpush1.msra.mxu0 0.0
    %4378 = vmatprep.subr.mxu0 0.0
    %4379 = vmatpush1.msra.mxu0 0.0
    %4380 = vmatprep.subr.mxu0 0.0
    %4381 = vmatpush1.msra.mxu0 0.0
    %4382 = vmatprep.subr.mxu0 0.0
    %4383 = vmatpush1.msra.mxu0 %v3158
    %4384 = vmatprep.subr.mxu0 0.0
    %4385 = vmatpush1.msra.mxu0 %v3157
    %4386 = vmatprep.subr.mxu0 0.0
    %4387 = vmatpush1.msra.mxu0 %v3156
    %4388 = vmatprep.subr.mxu0 0.0
    %4389 = vmatpush1.msra.mxu0 %v3155
    %4390 = vmatprep.subr.mxu0 0.0
    %4391 = vmatpush2.msra.mxu0 0.0
    %4392 = vmatprep.subr.mxu0 0.0
    %4393 = vmatpush2.msra.mxu0 0.0
    %4394 = vmatprep.subr.mxu0 0.0
    %4395 = vmatpush2.msra.mxu0 0.0
    %4396 = vmatprep.subr.mxu0 0.0
    %4397 = vmatpush2.msra.mxu0 0.0
    %4398 = vmatprep.subr.mxu0 0.0
    %4399 = vmatpush2.msra.mxu0 0.0
    %4400 = vmatprep.subr.mxu0 0.0
    %4401 = vmatpush2.msra.mxu0 0.0
    %4402 = vmatprep.subr.mxu0 0.0
    %4403 = vmatpush2.msra.mxu0 0.0
    %4404 = vmatprep.subr.mxu0 0.0
    %4405 = vmatpush2.msra.mxu0 0.0
    %4406 = vmatprep.subr.mxu0 0.0
    %4407 = vmatpush2.msra.mxu0 0.0
    %4408 = vmatprep.subr.mxu0 0.0
    %4409 = vmatpush2.msra.mxu0 0.0
    %4410 = vmatprep.subr.mxu0 0.0
    %4411 = vmatpush2.msra.mxu0 0.0
    %4412 = vmatprep.subr.mxu0 0.0
    %4413 = vmatpush2.msra.mxu0 0.0
    %4414 = vmatprep.subr.mxu0 0.0
    %4415 = vmatpush2.msra.mxu0 0.0
    %4416 = vmatprep.subr.mxu0 0.0
    %4417 = vmatpush2.msra.mxu0 0.0
    %4418 = vmatprep.subr.mxu0 0.0
    %4419 = vmatpush2.msra.mxu0 0.0
    %4420 = vmatprep.subr.mxu0 0.0
    %4421 = vmatpush2.msra.mxu0 0.0
    %4422 = vmatprep.mubr.f32.mxu0 0.0
    %4423 = vmatmul.mubr.f32.gmra.mxu0 %v4353
    %v4424 = vpop.f32.mrf.mxu0
    %v4425 = vadd.f32 %v3165, %v4424
    %v4426 = vpop.f32.mrf.mxu0
    %4427 = vmatprep.mubr.f32.mxu0 0.0
    %4428 = vmatmul.mubr.f32.gmra.mxu0 %v4356
    %v4429 = vpop.f32.mrf.mxu0
    %v4430 = vadd.f32 %v3165, %v4429
    %v4431 = vpop.f32.mrf.mxu0
    %4432 = vdwg.mxu0
    %v4433 = vmax.f32 %v4425, 0.0
    %v4434 = vmax.f32 %v4430, 0.0
    %v4436 = vsel %vm560, %v4433, 0
    %v4439 = vsel %vm560, %v4434, 0
    %4441 = vmatprep.subr.mxu0 0.0
    %4442 = vmatpush1.msra.mxu0 0.0
    %4443 = vmatprep.subr.mxu0 0.0
    %4444 = vmatpush1.msra.mxu0 0.0
    %4445 = vmatprep.subr.mxu0 0.0
    %4446 = vmatpush1.msra.mxu0 0.0
    %4447 = vmatprep.subr.mxu0 0.0
    %4448 = vmatpush1.msra.mxu0 0.0
    %4449 = vmatprep.subr.mxu0 0.0
    %4450 = vmatpush1.msra.mxu0 0.0
    %4451 = vmatprep.subr.mxu0 0.0
    %4452 = vmatpush1.msra.mxu0 0.0
    %4453 = vmatprep.subr.mxu0 0.0
    %4454 = vmatpush1.msra.mxu0 0.0
    %4455 = vmatprep.subr.mxu0 0.0
    %4456 = vmatpush1.msra.mxu0 0.0
    %4457 = vmatprep.subr.mxu0 0.0
    %4458 = vmatpush1.msra.mxu0 %v3258
    %4459 = vmatprep.subr.mxu0 0.0
    %4460 = vmatpush1.msra.mxu0 %v3257
    %4461 = vmatprep.subr.mxu0 0.0
    %4462 = vmatpush1.msra.mxu0 %v3256
    %4463 = vmatprep.subr.mxu0 0.0
    %4464 = vmatpush1.msra.mxu0 %v3255
    %4465 = vmatprep.subr.mxu0 0.0
    %4466 = vmatpush1.msra.mxu0 %v3254
    %4467 = vmatprep.subr.mxu0 0.0
    %4468 = vmatpush1.msra.mxu0 %v3253
    %4469 = vmatprep.subr.mxu0 0.0
    %4470 = vmatpush1.msra.mxu0 %v3252
    %4471 = vmatprep.subr.mxu0 0.0
    %4472 = vmatpush1.msra.mxu0 %v3251
    %4473 = vmatprep.subr.mxu0 0.0
    %4474 = vmatpush2.msra.mxu0 0.0
    %4475 = vmatprep.subr.mxu0 0.0
    %4476 = vmatpush2.msra.mxu0 0.0
    %4477 = vmatprep.subr.mxu0 0.0
    %4478 = vmatpush2.msra.mxu0 0.0
    %4479 = vmatprep.subr.mxu0 0.0
    %4480 = vmatpush2.msra.mxu0 0.0
    %4481 = vmatprep.subr.mxu0 0.0
    %4482 = vmatpush2.msra.mxu0 0.0
    %4483 = vmatprep.subr.mxu0 0.0
    %4484 = vmatpush2.msra.mxu0 0.0
    %4485 = vmatprep.subr.mxu0 0.0
    %4486 = vmatpush2.msra.mxu0 0.0
    %4487 = vmatprep.subr.mxu0 0.0
    %4488 = vmatpush2.msra.mxu0 0.0
    %4489 = vmatprep.subr.mxu0 0.0
    %4490 = vmatpush2.msra.mxu0 0.0
    %4491 = vmatprep.subr.mxu0 0.0
    %4492 = vmatpush2.msra.mxu0 0.0
    %4493 = vmatprep.subr.mxu0 0.0
    %4494 = vmatpush2.msra.mxu0 0.0
    %4495 = vmatprep.subr.mxu0 0.0
    %4496 = vmatpush2.msra.mxu0 0.0
    %4497 = vmatprep.subr.mxu0 0.0
    %4498 = vmatpush2.msra.mxu0 0.0
    %4499 = vmatprep.subr.mxu0 0.0
    %4500 = vmatpush2.msra.mxu0 0.0
    %4501 = vmatprep.subr.mxu0 0.0
    %4502 = vmatpush2.msra.mxu0 0.0
    %4503 = vmatprep.subr.mxu0 0.0
    %4504 = vmatpush2.msra.mxu0 0.0
    %4505 = vmatprep.mubr.f32.mxu0 0.0
    %4506 = vmatmul.mubr.f32.gmra.mxu0 %v4436
    %v4507 = vpop.f32.mrf.mxu0
    %v4508 = vadd.f32 %v3265, %v4507
    %v4509 = vpop.f32.mrf.mxu0
    %4510 = vmatprep.mubr.f32.mxu0 0.0
    %4511 = vmatmul.mubr.f32.gmra.mxu0 %v4439
    %v4512 = vpop.f32.mrf.mxu0
    %v4513 = vadd.f32 %v3265, %v4512
    %v4514 = vpop.f32.mrf.mxu0
    %4515 = vdwg.mxu0
    %v4516 = vadd.f32 %v4350, %v4508
    %v4517 = vadd.f32 %v4351, %v4513
    %v4518 = vsel %vm302, %v4516, 0.0
    %4519 = vadd.xlane.f32.xlu0 %v4518
    %v4520 = vpop.xlane.xlu0 %4519
    %v4521 = vsel %vm302, %v4517, 0.0
    %4522 = vadd.xlane.f32.xlu0 %v4521
    %v4523 = vpop.xlane.xlu0 %4522
    %v4524 = vmul.f32 %v4516, %v4516
    %v4525 = vmul.f32 %v4517, %v4517
    %v4526 = vsel %vm302, %v4524, 0.0
    %4527 = vadd.xlane.f32.xlu0 %v4526
    %v4528 = vpop.xlane.xlu0 %4527
    %v4529 = vsel %vm302, %v4525, 0.0
    %4530 = vadd.xlane.f32.xlu0 %v4529
    %v4531 = vpop.xlane.xlu0 %4530
    %v4532 = vmul.f32 %v4520, 0.03125
    %v4533 = vmul.f32 %v4523, 0.03125
    %v4534 = vmul.f32 %v4520, %v4532
    %v4535 = vmul.f32 %v4523, %v4533
    %v4536 = vsub.f32 %v4528, %v4534
    %v4537 = vsub.f32 %v4531, %v4535
    %v4538 = vmul.f32 %v4536, 0.032258064
    %v4539 = vmul.f32 %v4537, 0.032258064
    %v4540 = vmax.f32 %v4538, 0.0
    %v4541 = vmax.f32 %v4539, 0.0
    %v4542 = vrsqrt.pop %v4540
    %v4543 = vmul.f32 %v4540, %v4542
    %vm4544 = vcmp.eq.f32.partialorder %v4540, inf
    %v4545 = vsel %vm4544, %v4540, %v4543
    %vm4546 = vcmp.eq.f32.partialorder %v4540, 0.0
    %v4547 = vand.u32 %v4540, 2147483648
    %v4548 = vsel %vm4546, %v4547, %v4545
    %v4549 = vrsqrt.pop %v4541
    %v4550 = vmul.f32 %v4541, %v4549
    %vm4551 = vcmp.eq.f32.partialorder %v4541, inf
    %v4552 = vsel %vm4551, %v4541, %v4550
    %vm4553 = vcmp.eq.f32.partialorder %v4541, 0.0
    %v4554 = vand.u32 %v4541, 2147483648
    %v4555 = vsel %vm4553, %v4554, %v4552
    %v4556 = vadd.f32 %v4548, 1e-06
    %v4557 = vadd.f32 %v4555, 1e-06
    %v4558 = vsub.f32 %v4516, %v4532
    %v4559 = vsub.f32 %v4517, %v4533
    %v4560 = vmul.f32 %v896, %v4558
    %v4561 = vmul.f32 %v896, %v4559
    %v4562 = vrcp.pop %v4556
    %v4563 = vrcp.pop %v4557
    %v4564 = vmul.f32 %v4560, %v4562
    %v4565 = vmul.f32 %v4561, %v4563
    %v4566 = vadd.f32 %v4564, %v908
    %v4567 = vadd.f32 %v4565, %v908
    %v4568 = vsel %vm302, %v4566, 0.0
    %4569 = vadd.xlane.f32.xlu0 %v4568
    %v4570 = vpop.xlane.xlu0 %4569
    %v4571 = vsel %vm302, %v4567, 0.0
    %4572 = vadd.xlane.f32.xlu0 %v4571
    %v4573 = vpop.xlane.xlu0 %4572
    %v4574 = vmul.f32 %v4566, %v4566
    %v4575 = vmul.f32 %v4567, %v4567
    %v4576 = vsel %vm302, %v4574, 0.0
    %4577 = vadd.xlane.f32.xlu0 %v4576
    %v4578 = vpop.xlane.xlu0 %4577
    %v4579 = vsel %vm302, %v4575, 0.0
    %4580 = vadd.xlane.f32.xlu0 %v4579
    %v4581 = vpop.xlane.xlu0 %4580
    %v4582 = vmul.f32 %v4570, 0.03125
    %v4583 = vmul.f32 %v4573, 0.03125
    %v4584 = vmul.f32 %v4570, %v4582
    %v4585 = vmul.f32 %v4573, %v4583
    %v4586 = vsub.f32 %v4578, %v4584
    %v4587 = vsub.f32 %v4581, %v4585
    %v4588 = vmul.f32 %v4586, 0.032258064
    %v4589 = vmul.f32 %v4587, 0.032258064
    %v4590 = vmax.f32 %v4588, 0.0
    %v4591 = vmax.f32 %v4589, 0.0
    %v4592 = vrsqrt.pop %v4590
    %v4593 = vmul.f32 %v4590, %v4592
    %vm4594 = vcmp.eq.f32.partialorder %v4590, inf
    %v4595 = vsel %vm4594, %v4590, %v4593
    %vm4596 = vcmp.eq.f32.partialorder %v4590, 0.0
    %v4597 = vand.u32 %v4590, 2147483648
    %v4598 = vsel %vm4596, %v4597, %v4595
    %v4599 = vrsqrt.pop %v4591
    %v4600 = vmul.f32 %v4591, %v4599
    %vm4601 = vcmp.eq.f32.partialorder %v4591, inf
    %v4602 = vsel %vm4601, %v4591, %v4600
    %vm4603 = vcmp.eq.f32.partialorder %v4591, 0.0
    %v4604 = vand.u32 %v4591, 2147483648
    %v4605 = vsel %vm4603, %v4604, %v4602
    %v4606 = vadd.f32 %v4598, 1e-06
    %v4607 = vadd.f32 %v4605, 1e-06
    %v4608 = vsub.f32 %v4566, %v4582
    %v4609 = vsub.f32 %v4567, %v4583
    %v4610 = vmul.f32 %v896, %v4608
    %v4611 = vmul.f32 %v896, %v4609
    %v4612 = vrcp.pop %v4606
    %v4613 = vmul.f32 %v4610, %v4612
    %v4614 = vrcp.pop %v4607
    %v4615 = vmul.f32 %v4611, %v4614
    %v4616 = vadd.f32 %v4613, %v908
    %v4617 = vadd.f32 %v4615, %v908
    %4618 = vst.msk [vmem:[#allocation2] sm:$0xff] %vm302, %v4616
    %4619 = vst.msk [vmem:[#allocation2 + $0x8] sm:$0xff] %vm302, %v4617
    // Predicated region
    $region38: #{transformer_forward.1} parent=1 // pred_check
      _
    $region39: #{transformer_forward.1} parent=1 // pred_check_branch
      %4621 = sbr.rel (0) target = $region41
    $region40: #{transformer_forward.1} parent=1 // pred_region
      %s4623 = ssub.s32 256, 256
      %4624 = vsyncadd [#allocation3], %s4623
      %s4625 = sshll.u32 [#allocation2], 4
      %s4626 = int_to_ptr.vmem [resolvable:$true] %s4625
      %4631 = dma.vmem_to_hbm [thread:$0]  %s4626, 256, %s9, [#allocation3], 128, 128, 8
    $region41: #{transformer_forward.1} parent=1 // pred_fallthru
      _
    // Predicated region
    $region42: #{transformer_forward.1} parent=1 // pred_check
      _
    $region43: #{transformer_forward.1} parent=1 // pred_check_branch
      %4633 = sbr.rel (0) target = $region45
    $region44: #{transformer_forward.1} parent=1 // pred_region
      %4634 = dma.done [#allocation3], 256
    $region45: #{transformer_forward.1} parent=1 // pred_fallthru
      _
    %4635 = vsyncpa [#allocation3], 1

</llo_original>
